<compile_context>
chip_gen: v7x
topology: tpu7x:2x2x1
jax: 0.10.0
libtpu: 0.0.40
codegen_flags: <defaults>
</compile_context>

<pallas_src>
import functools
import math

import numpy as np
import jax
import jax.numpy as jnp
from jax.experimental import pallas as pl
from jax.experimental.pallas import tpu as pltpu


_LANE = 128


def _round_up(x, m):
    return ((x + m - 1) // m) * m


def prepare_self_attention_weights(wq, wk, wv):
    """One-time (init-time) fusion / layout of the projection weights.

    wq: (DK, E)  W_qs.weight    wk: (DK, F)  W_ks.weight    wv: (DV, F)  W_vs.weight
    (nn.Linear weights are (out_features, in_features).)

    Returns (bf16):
      wq_t  : (E, DKP)        -- W_qs.weight.T, lanes zero-padded DK -> DKP=128.
      wkv_t : (F, DKP + DVP)  -- fused [W_ks.T | 0 | W_vs.T | 0]; the k and v
                                 halves each start on a 128-lane tile boundary,
                                 and F stays on the sublane (contraction) axis
                                 so the kv matmul needs no in-kernel transpose.
    """
    d_k, e = wq.shape
    d_v, f = wv.shape
    assert wk.shape == (d_k, f)
    d_kp = _round_up(d_k, _LANE)
    d_vp = _round_up(d_v, _LANE)
    wq_t = jnp.zeros((e, d_kp), jnp.float32).at[:, :d_k].set(wq.T)
    wkv_t = (jnp.zeros((f, d_kp + d_vp), jnp.float32)
             .at[:, :d_k].set(wk.T)
             .at[:, d_kp:d_kp + d_v].set(wv.T))
    return wq_t.astype(jnp.bfloat16), wkv_t.astype(jnp.bfloat16)


def _self_attention_kernel(state_ref, imgn_ref, wq_ref, wkv_ref, out_ref, *,
                           scale):
    """One grid block = `spb` decode/imagination steps.

    state_ref : (SPB*B, E)         f32   query source, b-major per step
    imgn_ref  : (SPB*B*T, F)       f32   imgn_code rows (step-major, b-major)
    wq_ref    : (E, DKP)           bf16  resident across the whole grid
    wkv_ref   : (F, DKP + DVP)     bf16  resident across the whole grid
    out_ref   : (SPB, B, DVP)      f32   lane-dense output (valid lanes: DV)
    """
    spb, b, d_vp = out_ref.shape
    rows = imgn_ref.shape[0]
    bt = rows // spb                      # B * T rows per step
    t = bt // b
    d_kp = wkv_ref.shape[1] - d_vp

    # Cast activations to bf16 in-kernel (no separate wrapper cast passes).
    state = state_ref[...].astype(jnp.bfloat16)        # (SPB*B, E)
    imgn = imgn_ref[...].astype(jnp.bfloat16)          # (SPB*B*T, F)

    # Query projection on the MXU (f32 accumulation); 1/sqrt(d_k) applied here
    # in f32.  Lanes >= DK of q are zero (weight is zero-padded).
    q_all = jnp.dot(state, wq_ref[...],
                    preferred_element_type=jnp.float32) * scale   # (SPB*B, DKP)

    # Fused K/V projection: ONE MXU pass over the 2049-deep contraction for all
    # stacked steps, producing both k and v (N = DKP + DVP = 256 lanes).
    kv_all = jnp.dot(imgn, wkv_ref[...],
                     preferred_element_type=jnp.float32)          # (SPB*B*T, 256)

    # Tile-friendly splits: inner sublane groups are multiples of 8 (kv) and
    # the k/v lane slices sit exactly on 128-lane boundaries.
    q3 = q_all.reshape(spb, b, d_kp)
    kv3 = kv_all.reshape(spb, bt, d_kp + d_vp)

    # Per-step softmax / weighted sum: tiny VPU/XLU work, statically unrolled.
    for s in range(spb):
        kv = kv3[s]                                    # (B*T, DKP+DVP)
        k = kv[:, :d_kp].reshape(b, t, d_kp)           # (B, T, DKP)
        v = kv[:, d_kp:].reshape(b, t, d_vp)           # (B, T, DVP)
        q = q3[s]                                      # (B, DKP)

        # scores[b, t] = <q[b], k[b, t]>  (padded lanes contribute zero).
        scores = jnp.sum(q[:, None, :] * k, axis=-1)   # (B, T)

        # Numerically stable softmax over T; exact divide (EUP has slack here).
        mx = jnp.max(scores, axis=-1, keepdims=True)
        ex = jnp.exp(scores - mx)
        w = ex / jnp.sum(ex, axis=-1, keepdims=True)   # (B, T)

        # attn[b] = sum_t w[b, t] * v[b, t]  ==  bmm(attn_weights, v).squeeze(1)
        out_ref[s] = jnp.sum(w[:, :, None] * v, axis=1).astype(out_ref.dtype)


def self_attention(imgn_code, state, wq_t, wkv_t, *, d_k, d_v,
                   steps_per_block=None):
    """Pallas forward of SelfAttention's attention over imagined experience.

    imgn_code : (T, B, F) or (S, T, B, F) -- concatenated encoder outputs, one
                (T, B, F) slab per decode/imagination step.
    state     : (B, E)   or (S, B, E)
    wq_t/wkv_t: from prepare_self_attention_weights (VMEM-resident weights).
    Returns   : (B, d_v) or (S, B, d_v) f32 -- identical to the module's attn.
    """
    squeeze_step = state.ndim == 2
    if squeeze_step:
        imgn_code = imgn_code[None]
        state = state[None]
    s, t, b, f = imgn_code.shape
    assert state.shape[0] == s and state.shape[1] == b
    e = state.shape[2]
    d_kp = wq_t.shape[1]
    d_vp = wkv_t.shape[1] - d_kp
    assert wq_t.shape[0] == e and wkv_t.shape[0] == f

    if steps_per_block is None:
        # Largest divisor of S whose stacked kv-matmul M (= spb*B*T rows) stays
        # <= 256 (native MXU tile on v6e/v7x; two 128-row passes on v5e).
        cands = [d for d in range(1, s + 1) if s % d == 0 and d * b * t <= 256]
        steps_per_block = max(cands) if cands else 1
    spb = steps_per_block
    assert s % spb == 0
    num_blocks = s // spb

    # The module's own permute(1,0,2).reshape(b*t, f), batched over steps
    # (b-major row order per step); the following flattenings are free
    # (contiguous) reshapes.
    imgn_rows = jnp.transpose(imgn_code, (0, 2, 1, 3)).reshape(s * b * t, f)
    state_rows = state.reshape(s * b, e)

    kernel = functools.partial(_self_attention_kernel,
                               scale=1.0 / math.sqrt(d_k))

    cost = pl.CostEstimate(
        flops=(2 * (s * b * t) * f * (d_kp + d_vp)     # fused kv projection
               + 2 * (s * b) * e * d_kp                 # q projection
               + 6 * (s * b * t) * (d_kp + d_vp)),      # scores / weighted sum
        transcendentals=s * b * t,
        bytes_accessed=(state_rows.size * 4 + imgn_rows.size * 4
                        + wq_t.size * 2 + wkv_t.size * 2 + s * b * d_vp * 4),
    )

    # Per-block VMEM: imgn block (spb*B*T, F) f32 plus double-buffering is well
    # under the scoped-VMEM default on all generations at these sizes, so no
    # explicit vmem_limit_bytes is needed (set one if blocks are scaled up).
    out = pl.pallas_call(
        kernel,
        out_shape=jax.ShapeDtypeStruct((s, b, d_vp), jnp.float32),
        grid=(num_blocks,),
        in_specs=[
            pl.BlockSpec((spb * b, e), lambda i: (i, 0)),       # per-block state
            pl.BlockSpec((spb * b * t, f), lambda i: (i, 0)),   # per-block imgn
            pl.BlockSpec((e, d_kp), lambda i: (0, 0)),          # resident weight
            pl.BlockSpec((f, d_kp + d_vp), lambda i: (0, 0)),   # resident weight
        ],
        out_specs=pl.BlockSpec((spb, b, d_vp), lambda i: (i, 0, 0)),
        compiler_params=pltpu.CompilerParams(
            dimension_semantics=("parallel",)),
        cost_estimate=cost,
    )(state_rows, imgn_rows, wq_t, wkv_t)

    out = out[:, :, :d_v]           # drop lane padding of the lane-dense slab
    return out[0] if squeeze_step else out


if __name__ == "__main__":
    key = jax.random.PRNGKey(0)

    # config: similar=2 encoders, each contributing 2 imagined steps.
    SIMILAR = 2
    T_PER_ENCODER = 2
    T = SIMILAR * T_PER_ENCODER   # imagined-experience length after cat(dim=0)
    B = 2                         # batch
    F = 2049                      # fixed by W_ks / W_vs in_features
    E = 32                        # enc_out_size
    DK = 16                       # sa_dk
    DV = E                        # d_v = enc_out_size
    STEPS = 32                    # decode/imagination steps batched per call
    SPB = 8                       # steps per grid block -> grid=(4,), M=64 rows

    ks = jax.random.split(key, 5)
    # TODO(synk): SelfAttentionEncoder is not defined in the source module (the
    # Thread fan-out is host-side orchestration); the concatenated encoder
    # output `imgn_code` of shape (t, b, 2049) is synthesized directly, one
    # slab per decode step.
    imgn_code = jax.random.normal(ks[0], (STEPS, T, B, F), jnp.float32)
    state = jax.random.normal(ks[1], (STEPS, B, E), jnp.float32)

    # Deterministic parameter init; nn.Linear weights have shape (out, in).
    wq = jax.random.normal(ks[2], (DK, E), jnp.float32) * 0.05   # W_qs.weight
    wk = jax.random.normal(ks[3], (DK, F), jnp.float32) * 0.02   # W_ks.weight
    wv = jax.random.normal(ks[4], (DV, F), jnp.float32) * 0.02   # W_vs.weight

    # One-time weight fusion / padding / transpose / bf16 cast (init-time).
    wq_t, wkv_t = prepare_self_attention_weights(wq, wk, wv)

    out = self_attention(imgn_code, state, wq_t, wkv_t,
                         d_k=DK, d_v=DV, steps_per_block=SPB)
    out = jax.block_until_ready(out)

    # Plain-JAX f32 reference of the PyTorch forward (per step).
    imgn_flat = jnp.transpose(imgn_code, (0, 2, 1, 3)).reshape(STEPS, B * T, F)
    q_ref = jnp.einsum("sbe,de->sbd", state, wq)
    k_ref = jnp.einsum("snf,df->snd", imgn_flat, wk).reshape(STEPS, B, T, DK)
    v_ref = jnp.einsum("snf,df->snd", imgn_flat, wv).reshape(STEPS, B, T, DV)
    scores = jnp.einsum("sbd,sbtd->sbt", q_ref, k_ref) / np.power(DK, 0.5)
    wts = jax.nn.softmax(scores, axis=-1)
    ref = jnp.einsum("sbt,sbtd->sbd", wts, v_ref)

    assert out.shape == (STEPS, B, DV)
    assert np.allclose(np.asarray(out), np.asarray(ref), rtol=2e-2, atol=2e-2), (
        float(np.max(np.abs(np.asarray(out) - np.asarray(ref)))))

    # Also exercise the single-step (module-forward-shaped) path.
    out1 = self_attention(imgn_code[0], state[0], wq_t, wkv_t, d_k=DK, d_v=DV)
    out1 = jax.block_until_ready(out1)
    assert out1.shape == (B, DV)
    assert np.allclose(np.asarray(out1), np.asarray(ref[0]),
                       rtol=2e-2, atol=2e-2)

    print("KERNEL_OK")
</pallas_src>

<mosaic_0001>
module attributes {stable_mosaic.version = 11 : i64} {
  func.func @_self_attention_kernel(%arg0: i32, %arg1: memref<16x32xf32, #tpu.memory_space<vmem>>, %arg2: memref<64x2049xf32, #tpu.memory_space<vmem>>, %arg3: memref<32x128xbf16, #tpu.memory_space<vmem>>, %arg4: memref<2049x256xbf16, #tpu.memory_space<vmem>>, %arg5: memref<8x2x128xf32, #tpu.memory_space<vmem>>) attributes {dimension_semantics = [#tpu.dimension_semantics<parallel>], iteration_bounds = array<i64: 4>, scalar_prefetch = 0 : i64, scratch_operands = 0 : i64, tpu.core_type = #tpu.core_type<tc>, window_params = [{transform_indices = @transform_0, window_bounds = array<i64: 16, 32>}, {transform_indices = @transform_1, window_bounds = array<i64: 64, 2049>}, {pipeline_mode = #tpu.pipeline_mode<synchronous>, transform_indices = @transform_2, window_bounds = array<i64: 32, 128>}, {pipeline_mode = #tpu.pipeline_mode<synchronous>, transform_indices = @transform_3, window_bounds = array<i64: 2049, 256>}, {transform_indices = @transform_4, window_bounds = array<i64: 8, 2, 128>}]} {
    %c0 = arith.constant 0 : index
    %c0_0 = arith.constant 0 : index
    %0 = vector.load %arg1[%c0, %c0_0] : memref<16x32xf32, #tpu.memory_space<vmem>>, vector<16x32xf32>
    %1 = arith.truncf %0 : vector<16x32xf32> to vector<16x32xbf16>
    %c0_1 = arith.constant 0 : index
    %c0_2 = arith.constant 0 : index
    %2 = vector.load %arg2[%c0_1, %c0_2] : memref<64x2049xf32, #tpu.memory_space<vmem>>, vector<64x2049xf32>
    %3 = arith.truncf %2 : vector<64x2049xf32> to vector<64x2049xbf16>
    %c0_3 = arith.constant 0 : index
    %c0_4 = arith.constant 0 : index
    %4 = vector.load %arg3[%c0_3, %c0_4] : memref<32x128xbf16, #tpu.memory_space<vmem>>, vector<32x128xbf16>
    %cst = arith.constant dense<0.000000e+00> : vector<16x128xf32>
    %5 = tpu.matmul %1, %4, %cst {dimension_numbers = #tpu.dot_dimension_numbers<[1], [0], [0], [1], [0, 0, 1, 1], [], []>} : vector<16x32xbf16>, vector<32x128xbf16>, vector<16x128xf32> -> vector<16x128xf32>
    %cst_5 = arith.constant 2.500000e-01 : f32
    %6 = vector.broadcast %cst_5 : f32 to vector<16x128xf32>
    %7 = arith.mulf %5, %6 : vector<16x128xf32>
    %c0_6 = arith.constant 0 : index
    %c0_7 = arith.constant 0 : index
    %8 = vector.load %arg4[%c0_6, %c0_7] : memref<2049x256xbf16, #tpu.memory_space<vmem>>, vector<2049x256xbf16>
    %cst_8 = arith.constant dense<0.000000e+00> : vector<64x256xf32>
    %9 = tpu.matmul %3, %8, %cst_8 {dimension_numbers = #tpu.dot_dimension_numbers<[1], [0], [0], [1], [0, 0, 1, 1], [], []>} : vector<64x2049xbf16>, vector<2049x256xbf16>, vector<64x256xf32> -> vector<64x256xf32>
    %10 = vector.shape_cast %7 : vector<16x128xf32> to vector<8x2x128xf32>
    %11 = vector.shape_cast %9 : vector<64x256xf32> to vector<8x8x256xf32>
    %12 = vector.extract_strided_slice %11 {offsets = [0, 0, 0], sizes = [1, 8, 256], strides = [1, 1, 1]} : vector<8x8x256xf32> to vector<1x8x256xf32>
    %13 = vector.shape_cast %12 : vector<1x8x256xf32> to vector<8x256xf32>
    %14 = vector.extract_strided_slice %13 {offsets = [0, 0], sizes = [8, 128], strides = [1, 1]} : vector<8x256xf32> to vector<8x128xf32>
    %15 = vector.shape_cast %14 : vector<8x128xf32> to vector<2x4x128xf32>
    %16 = vector.extract_strided_slice %13 {offsets = [0, 128], sizes = [8, 128], strides = [1, 1]} : vector<8x256xf32> to vector<8x128xf32>
    %17 = vector.shape_cast %16 : vector<8x128xf32> to vector<2x4x128xf32>
    %18 = vector.extract_strided_slice %10 {offsets = [0, 0, 0], sizes = [1, 2, 128], strides = [1, 1, 1]} : vector<8x2x128xf32> to vector<1x2x128xf32>
    %19 = vector.shape_cast %18 : vector<1x2x128xf32> to vector<2x128xf32>
    %20 = vector.shape_cast %19 : vector<2x128xf32> to vector<2x1x128xf32>
    %21 = vector.broadcast %20 : vector<2x1x128xf32> to vector<2x4x128xf32>
    %22 = arith.mulf %21, %15 : vector<2x4x128xf32>
    %cst_9 = arith.constant dense<0.000000e+00> : vector<2x4xf32>
    %23 = vector.multi_reduction <add>, %22, %cst_9 [2] : vector<2x4x128xf32> to vector<2x4xf32>
    %cst_10 = arith.constant dense<0xFF800000> : vector<2xf32>
    %24 = vector.multi_reduction <maximumf>, %23, %cst_10 [1] : vector<2x4xf32> to vector<2xf32>
    %25 = vector.shape_cast %24 : vector<2xf32> to vector<2x1xf32>
    %26 = vector.broadcast %25 : vector<2x1xf32> to vector<2x4xf32>
    %27 = arith.subf %23, %26 : vector<2x4xf32>
    %28 = math.exp %27 : vector<2x4xf32>
    %cst_11 = arith.constant dense<0.000000e+00> : vector<2xf32>
    %29 = vector.multi_reduction <add>, %28, %cst_11 [1] : vector<2x4xf32> to vector<2xf32>
    %30 = vector.shape_cast %29 : vector<2xf32> to vector<2x1xf32>
    %31 = vector.broadcast %30 : vector<2x1xf32> to vector<2x4xf32>
    %32 = arith.divf %28, %31 : vector<2x4xf32>
    %33 = vector.shape_cast %32 : vector<2x4xf32> to vector<2x4x1xf32>
    %34 = vector.broadcast %33 : vector<2x4x1xf32> to vector<2x4x128xf32>
    %35 = arith.mulf %34, %17 : vector<2x4x128xf32>
    %cst_12 = arith.constant dense<0.000000e+00> : vector<2x128xf32>
    %36 = vector.multi_reduction <add>, %35, %cst_12 [1] : vector<2x4x128xf32> to vector<2x128xf32>
    %c0_13 = arith.constant 0 : index
    %c0_14 = arith.constant 0 : index
    %c0_15 = arith.constant 0 : index
    %37 = vector.load %arg5[%c0_13, %c0_14, %c0_15] : memref<8x2x128xf32, #tpu.memory_space<vmem>>, vector<1x2x128xf32>
    %38 = vector.shape_cast %37 : vector<1x2x128xf32> to vector<2x128xf32>
    %39 = vector.shape_cast %36 : vector<2x128xf32> to vector<1x2x128xf32>
    tpu.vector_store %arg5[%c0_13, %c0_14, %c0_15], %39 {strides = array<i32>} : memref<8x2x128xf32, #tpu.memory_space<vmem>>, vector<1x2x128xf32>,
    %40 = vector.extract_strided_slice %11 {offsets = [1, 0, 0], sizes = [1, 8, 256], strides = [1, 1, 1]} : vector<8x8x256xf32> to vector<1x8x256xf32>
    %41 = vector.shape_cast %40 : vector<1x8x256xf32> to vector<8x256xf32>
    %42 = vector.extract_strided_slice %41 {offsets = [0, 0], sizes = [8, 128], strides = [1, 1]} : vector<8x256xf32> to vector<8x128xf32>
    %43 = vector.shape_cast %42 : vector<8x128xf32> to vector<2x4x128xf32>
    %44 = vector.extract_strided_slice %41 {offsets = [0, 128], sizes = [8, 128], strides = [1, 1]} : vector<8x256xf32> to vector<8x128xf32>
    %45 = vector.shape_cast %44 : vector<8x128xf32> to vector<2x4x128xf32>
    %46 = vector.extract_strided_slice %10 {offsets = [1, 0, 0], sizes = [1, 2, 128], strides = [1, 1, 1]} : vector<8x2x128xf32> to vector<1x2x128xf32>
    %47 = vector.shape_cast %46 : vector<1x2x128xf32> to vector<2x128xf32>
    %48 = vector.shape_cast %47 : vector<2x128xf32> to vector<2x1x128xf32>
    %49 = vector.broadcast %48 : vector<2x1x128xf32> to vector<2x4x128xf32>
    %50 = arith.mulf %49, %43 : vector<2x4x128xf32>
    %cst_16 = arith.constant dense<0.000000e+00> : vector<2x4xf32>
    %51 = vector.multi_reduction <add>, %50, %cst_16 [2] : vector<2x4x128xf32> to vector<2x4xf32>
    %cst_17 = arith.constant dense<0xFF800000> : vector<2xf32>
    %52 = vector.multi_reduction <maximumf>, %51, %cst_17 [1] : vector<2x4xf32> to vector<2xf32>
    %53 = vector.shape_cast %52 : vector<2xf32> to vector<2x1xf32>
    %54 = vector.broadcast %53 : vector<2x1xf32> to vector<2x4xf32>
    %55 = arith.subf %51, %54 : vector<2x4xf32>
    %56 = math.exp %55 : vector<2x4xf32>
    %cst_18 = arith.constant dense<0.000000e+00> : vector<2xf32>
    %57 = vector.multi_reduction <add>, %56, %cst_18 [1] : vector<2x4xf32> to vector<2xf32>
    %58 = vector.shape_cast %57 : vector<2xf32> to vector<2x1xf32>
    %59 = vector.broadcast %58 : vector<2x1xf32> to vector<2x4xf32>
    %60 = arith.divf %56, %59 : vector<2x4xf32>
    %61 = vector.shape_cast %60 : vector<2x4xf32> to vector<2x4x1xf32>
    %62 = vector.broadcast %61 : vector<2x4x1xf32> to vector<2x4x128xf32>
    %63 = arith.mulf %62, %45 : vector<2x4x128xf32>
    %cst_19 = arith.constant dense<0.000000e+00> : vector<2x128xf32>
    %64 = vector.multi_reduction <add>, %63, %cst_19 [1] : vector<2x4x128xf32> to vector<2x128xf32>
    %c1 = arith.constant 1 : index
    %c0_20 = arith.constant 0 : index
    %c0_21 = arith.constant 0 : index
    %65 = vector.load %arg5[%c1, %c0_20, %c0_21] : memref<8x2x128xf32, #tpu.memory_space<vmem>>, vector<1x2x128xf32>
    %66 = vector.shape_cast %65 : vector<1x2x128xf32> to vector<2x128xf32>
    %67 = vector.shape_cast %64 : vector<2x128xf32> to vector<1x2x128xf32>
    tpu.vector_store %arg5[%c1, %c0_20, %c0_21], %67 {strides = array<i32>} : memref<8x2x128xf32, #tpu.memory_space<vmem>>, vector<1x2x128xf32>,
    %68 = vector.extract_strided_slice %11 {offsets = [2, 0, 0], sizes = [1, 8, 256], strides = [1, 1, 1]} : vector<8x8x256xf32> to vector<1x8x256xf32>
    %69 = vector.shape_cast %68 : vector<1x8x256xf32> to vector<8x256xf32>
    %70 = vector.extract_strided_slice %69 {offsets = [0, 0], sizes = [8, 128], strides = [1, 1]} : vector<8x256xf32> to vector<8x128xf32>
    %71 = vector.shape_cast %70 : vector<8x128xf32> to vector<2x4x128xf32>
    %72 = vector.extract_strided_slice %69 {offsets = [0, 128], sizes = [8, 128], strides = [1, 1]} : vector<8x256xf32> to vector<8x128xf32>
    %73 = vector.shape_cast %72 : vector<8x128xf32> to vector<2x4x128xf32>
    %74 = vector.extract_strided_slice %10 {offsets = [2, 0, 0], sizes = [1, 2, 128], strides = [1, 1, 1]} : vector<8x2x128xf32> to vector<1x2x128xf32>
    %75 = vector.shape_cast %74 : vector<1x2x128xf32> to vector<2x128xf32>
    %76 = vector.shape_cast %75 : vector<2x128xf32> to vector<2x1x128xf32>
    %77 = vector.broadcast %76 : vector<2x1x128xf32> to vector<2x4x128xf32>
    %78 = arith.mulf %77, %71 : vector<2x4x128xf32>
    %cst_22 = arith.constant dense<0.000000e+00> : vector<2x4xf32>
    %79 = vector.multi_reduction <add>, %78, %cst_22 [2] : vector<2x4x128xf32> to vector<2x4xf32>
    %cst_23 = arith.constant dense<0xFF800000> : vector<2xf32>
    %80 = vector.multi_reduction <maximumf>, %79, %cst_23 [1] : vector<2x4xf32> to vector<2xf32>
    %81 = vector.shape_cast %80 : vector<2xf32> to vector<2x1xf32>
    %82 = vector.broadcast %81 : vector<2x1xf32> to vector<2x4xf32>
    %83 = arith.subf %79, %82 : vector<2x4xf32>
    %84 = math.exp %83 : vector<2x4xf32>
    %cst_24 = arith.constant dense<0.000000e+00> : vector<2xf32>
    %85 = vector.multi_reduction <add>, %84, %cst_24 [1] : vector<2x4xf32> to vector<2xf32>
    %86 = vector.shape_cast %85 : vector<2xf32> to vector<2x1xf32>
    %87 = vector.broadcast %86 : vector<2x1xf32> to vector<2x4xf32>
    %88 = arith.divf %84, %87 : vector<2x4xf32>
    %89 = vector.shape_cast %88 : vector<2x4xf32> to vector<2x4x1xf32>
    %90 = vector.broadcast %89 : vector<2x4x1xf32> to vector<2x4x128xf32>
    %91 = arith.mulf %90, %73 : vector<2x4x128xf32>
    %cst_25 = arith.constant dense<0.000000e+00> : vector<2x128xf32>
    %92 = vector.multi_reduction <add>, %91, %cst_25 [1] : vector<2x4x128xf32> to vector<2x128xf32>
    %c2 = arith.constant 2 : index
    %c0_26 = arith.constant 0 : index
    %c0_27 = arith.constant 0 : index
    %93 = vector.load %arg5[%c2, %c0_26, %c0_27] : memref<8x2x128xf32, #tpu.memory_space<vmem>>, vector<1x2x128xf32>
    %94 = vector.shape_cast %93 : vector<1x2x128xf32> to vector<2x128xf32>
    %95 = vector.shape_cast %92 : vector<2x128xf32> to vector<1x2x128xf32>
    tpu.vector_store %arg5[%c2, %c0_26, %c0_27], %95 {strides = array<i32>} : memref<8x2x128xf32, #tpu.memory_space<vmem>>, vector<1x2x128xf32>,
    %96 = vector.extract_strided_slice %11 {offsets = [3, 0, 0], sizes = [1, 8, 256], strides = [1, 1, 1]} : vector<8x8x256xf32> to vector<1x8x256xf32>
    %97 = vector.shape_cast %96 : vector<1x8x256xf32> to vector<8x256xf32>
    %98 = vector.extract_strided_slice %97 {offsets = [0, 0], sizes = [8, 128], strides = [1, 1]} : vector<8x256xf32> to vector<8x128xf32>
    %99 = vector.shape_cast %98 : vector<8x128xf32> to vector<2x4x128xf32>
    %100 = vector.extract_strided_slice %97 {offsets = [0, 128], sizes = [8, 128], strides = [1, 1]} : vector<8x256xf32> to vector<8x128xf32>
    %101 = vector.shape_cast %100 : vector<8x128xf32> to vector<2x4x128xf32>
    %102 = vector.extract_strided_slice %10 {offsets = [3, 0, 0], sizes = [1, 2, 128], strides = [1, 1, 1]} : vector<8x2x128xf32> to vector<1x2x128xf32>
    %103 = vector.shape_cast %102 : vector<1x2x128xf32> to vector<2x128xf32>
    %104 = vector.shape_cast %103 : vector<2x128xf32> to vector<2x1x128xf32>
    %105 = vector.broadcast %104 : vector<2x1x128xf32> to vector<2x4x128xf32>
    %106 = arith.mulf %105, %99 : vector<2x4x128xf32>
    %cst_28 = arith.constant dense<0.000000e+00> : vector<2x4xf32>
    %107 = vector.multi_reduction <add>, %106, %cst_28 [2] : vector<2x4x128xf32> to vector<2x4xf32>
    %cst_29 = arith.constant dense<0xFF800000> : vector<2xf32>
    %108 = vector.multi_reduction <maximumf>, %107, %cst_29 [1] : vector<2x4xf32> to vector<2xf32>
    %109 = vector.shape_cast %108 : vector<2xf32> to vector<2x1xf32>
    %110 = vector.broadcast %109 : vector<2x1xf32> to vector<2x4xf32>
    %111 = arith.subf %107, %110 : vector<2x4xf32>
    %112 = math.exp %111 : vector<2x4xf32>
    %cst_30 = arith.constant dense<0.000000e+00> : vector<2xf32>
    %113 = vector.multi_reduction <add>, %112, %cst_30 [1] : vector<2x4xf32> to vector<2xf32>
    %114 = vector.shape_cast %113 : vector<2xf32> to vector<2x1xf32>
    %115 = vector.broadcast %114 : vector<2x1xf32> to vector<2x4xf32>
    %116 = arith.divf %112, %115 : vector<2x4xf32>
    %117 = vector.shape_cast %116 : vector<2x4xf32> to vector<2x4x1xf32>
    %118 = vector.broadcast %117 : vector<2x4x1xf32> to vector<2x4x128xf32>
    %119 = arith.mulf %118, %101 : vector<2x4x128xf32>
    %cst_31 = arith.constant dense<0.000000e+00> : vector<2x128xf32>
    %120 = vector.multi_reduction <add>, %119, %cst_31 [1] : vector<2x4x128xf32> to vector<2x128xf32>
    %c3 = arith.constant 3 : index
    %c0_32 = arith.constant 0 : index
    %c0_33 = arith.constant 0 : index
    %121 = vector.load %arg5[%c3, %c0_32, %c0_33] : memref<8x2x128xf32, #tpu.memory_space<vmem>>, vector<1x2x128xf32>
    %122 = vector.shape_cast %121 : vector<1x2x128xf32> to vector<2x128xf32>
    %123 = vector.shape_cast %120 : vector<2x128xf32> to vector<1x2x128xf32>
    tpu.vector_store %arg5[%c3, %c0_32, %c0_33], %123 {strides = array<i32>} : memref<8x2x128xf32, #tpu.memory_space<vmem>>, vector<1x2x128xf32>,
    %124 = vector.extract_strided_slice %11 {offsets = [4, 0, 0], sizes = [1, 8, 256], strides = [1, 1, 1]} : vector<8x8x256xf32> to vector<1x8x256xf32>
    %125 = vector.shape_cast %124 : vector<1x8x256xf32> to vector<8x256xf32>
    %126 = vector.extract_strided_slice %125 {offsets = [0, 0], sizes = [8, 128], strides = [1, 1]} : vector<8x256xf32> to vector<8x128xf32>
    %127 = vector.shape_cast %126 : vector<8x128xf32> to vector<2x4x128xf32>
    %128 = vector.extract_strided_slice %125 {offsets = [0, 128], sizes = [8, 128], strides = [1, 1]} : vector<8x256xf32> to vector<8x128xf32>
    %129 = vector.shape_cast %128 : vector<8x128xf32> to vector<2x4x128xf32>
    %130 = vector.extract_strided_slice %10 {offsets = [4, 0, 0], sizes = [1, 2, 128], strides = [1, 1, 1]} : vector<8x2x128xf32> to vector<1x2x128xf32>
    %131 = vector.shape_cast %130 : vector<1x2x128xf32> to vector<2x128xf32>
    %132 = vector.shape_cast %131 : vector<2x128xf32> to vector<2x1x128xf32>
    %133 = vector.broadcast %132 : vector<2x1x128xf32> to vector<2x4x128xf32>
    %134 = arith.mulf %133, %127 : vector<2x4x128xf32>
    %cst_34 = arith.constant dense<0.000000e+00> : vector<2x4xf32>
    %135 = vector.multi_reduction <add>, %134, %cst_34 [2] : vector<2x4x128xf32> to vector<2x4xf32>
    %cst_35 = arith.constant dense<0xFF800000> : vector<2xf32>
    %136 = vector.multi_reduction <maximumf>, %135, %cst_35 [1] : vector<2x4xf32> to vector<2xf32>
    %137 = vector.shape_cast %136 : vector<2xf32> to vector<2x1xf32>
    %138 = vector.broadcast %137 : vector<2x1xf32> to vector<2x4xf32>
    %139 = arith.subf %135, %138 : vector<2x4xf32>
    %140 = math.exp %139 : vector<2x4xf32>
    %cst_36 = arith.constant dense<0.000000e+00> : vector<2xf32>
    %141 = vector.multi_reduction <add>, %140, %cst_36 [1] : vector<2x4xf32> to vector<2xf32>
    %142 = vector.shape_cast %141 : vector<2xf32> to vector<2x1xf32>
    %143 = vector.broadcast %142 : vector<2x1xf32> to vector<2x4xf32>
    %144 = arith.divf %140, %143 : vector<2x4xf32>
    %145 = vector.shape_cast %144 : vector<2x4xf32> to vector<2x4x1xf32>
    %146 = vector.broadcast %145 : vector<2x4x1xf32> to vector<2x4x128xf32>
    %147 = arith.mulf %146, %129 : vector<2x4x128xf32>
    %cst_37 = arith.constant dense<0.000000e+00> : vector<2x128xf32>
    %148 = vector.multi_reduction <add>, %147, %cst_37 [1] : vector<2x4x128xf32> to vector<2x128xf32>
    %c4 = arith.constant 4 : index
    %c0_38 = arith.constant 0 : index
    %c0_39 = arith.constant 0 : index
    %149 = vector.load %arg5[%c4, %c0_38, %c0_39] : memref<8x2x128xf32, #tpu.memory_space<vmem>>, vector<1x2x128xf32>
    %150 = vector.shape_cast %149 : vector<1x2x128xf32> to vector<2x128xf32>
    %151 = vector.shape_cast %148 : vector<2x128xf32> to vector<1x2x128xf32>
    tpu.vector_store %arg5[%c4, %c0_38, %c0_39], %151 {strides = array<i32>} : memref<8x2x128xf32, #tpu.memory_space<vmem>>, vector<1x2x128xf32>,
    %152 = vector.extract_strided_slice %11 {offsets = [5, 0, 0], sizes = [1, 8, 256], strides = [1, 1, 1]} : vector<8x8x256xf32> to vector<1x8x256xf32>
    %153 = vector.shape_cast %152 : vector<1x8x256xf32> to vector<8x256xf32>
    %154 = vector.extract_strided_slice %153 {offsets = [0, 0], sizes = [8, 128], strides = [1, 1]} : vector<8x256xf32> to vector<8x128xf32>
    %155 = vector.shape_cast %154 : vector<8x128xf32> to vector<2x4x128xf32>
    %156 = vector.extract_strided_slice %153 {offsets = [0, 128], sizes = [8, 128], strides = [1, 1]} : vector<8x256xf32> to vector<8x128xf32>
    %157 = vector.shape_cast %156 : vector<8x128xf32> to vector<2x4x128xf32>
    %158 = vector.extract_strided_slice %10 {offsets = [5, 0, 0], sizes = [1, 2, 128], strides = [1, 1, 1]} : vector<8x2x128xf32> to vector<1x2x128xf32>
    %159 = vector.shape_cast %158 : vector<1x2x128xf32> to vector<2x128xf32>
    %160 = vector.shape_cast %159 : vector<2x128xf32> to vector<2x1x128xf32>
    %161 = vector.broadcast %160 : vector<2x1x128xf32> to vector<2x4x128xf32>
    %162 = arith.mulf %161, %155 : vector<2x4x128xf32>
    %cst_40 = arith.constant dense<0.000000e+00> : vector<2x4xf32>
    %163 = vector.multi_reduction <add>, %162, %cst_40 [2] : vector<2x4x128xf32> to vector<2x4xf32>
    %cst_41 = arith.constant dense<0xFF800000> : vector<2xf32>
    %164 = vector.multi_reduction <maximumf>, %163, %cst_41 [1] : vector<2x4xf32> to vector<2xf32>
    %165 = vector.shape_cast %164 : vector<2xf32> to vector<2x1xf32>
    %166 = vector.broadcast %165 : vector<2x1xf32> to vector<2x4xf32>
    %167 = arith.subf %163, %166 : vector<2x4xf32>
    %168 = math.exp %167 : vector<2x4xf32>
    %cst_42 = arith.constant dense<0.000000e+00> : vector<2xf32>
    %169 = vector.multi_reduction <add>, %168, %cst_42 [1] : vector<2x4xf32> to vector<2xf32>
    %170 = vector.shape_cast %169 : vector<2xf32> to vector<2x1xf32>
    %171 = vector.broadcast %170 : vector<2x1xf32> to vector<2x4xf32>
    %172 = arith.divf %168, %171 : vector<2x4xf32>
    %173 = vector.shape_cast %172 : vector<2x4xf32> to vector<2x4x1xf32>
    %174 = vector.broadcast %173 : vector<2x4x1xf32> to vector<2x4x128xf32>
    %175 = arith.mulf %174, %157 : vector<2x4x128xf32>
    %cst_43 = arith.constant dense<0.000000e+00> : vector<2x128xf32>
    %176 = vector.multi_reduction <add>, %175, %cst_43 [1] : vector<2x4x128xf32> to vector<2x128xf32>
    %c5 = arith.constant 5 : index
    %c0_44 = arith.constant 0 : index
    %c0_45 = arith.constant 0 : index
    %177 = vector.load %arg5[%c5, %c0_44, %c0_45] : memref<8x2x128xf32, #tpu.memory_space<vmem>>, vector<1x2x128xf32>
    %178 = vector.shape_cast %177 : vector<1x2x128xf32> to vector<2x128xf32>
    %179 = vector.shape_cast %176 : vector<2x128xf32> to vector<1x2x128xf32>
    tpu.vector_store %arg5[%c5, %c0_44, %c0_45], %179 {strides = array<i32>} : memref<8x2x128xf32, #tpu.memory_space<vmem>>, vector<1x2x128xf32>,
    %180 = vector.extract_strided_slice %11 {offsets = [6, 0, 0], sizes = [1, 8, 256], strides = [1, 1, 1]} : vector<8x8x256xf32> to vector<1x8x256xf32>
    %181 = vector.shape_cast %180 : vector<1x8x256xf32> to vector<8x256xf32>
    %182 = vector.extract_strided_slice %181 {offsets = [0, 0], sizes = [8, 128], strides = [1, 1]} : vector<8x256xf32> to vector<8x128xf32>
    %183 = vector.shape_cast %182 : vector<8x128xf32> to vector<2x4x128xf32>
    %184 = vector.extract_strided_slice %181 {offsets = [0, 128], sizes = [8, 128], strides = [1, 1]} : vector<8x256xf32> to vector<8x128xf32>
    %185 = vector.shape_cast %184 : vector<8x128xf32> to vector<2x4x128xf32>
    %186 = vector.extract_strided_slice %10 {offsets = [6, 0, 0], sizes = [1, 2, 128], strides = [1, 1, 1]} : vector<8x2x128xf32> to vector<1x2x128xf32>
    %187 = vector.shape_cast %186 : vector<1x2x128xf32> to vector<2x128xf32>
    %188 = vector.shape_cast %187 : vector<2x128xf32> to vector<2x1x128xf32>
    %189 = vector.broadcast %188 : vector<2x1x128xf32> to vector<2x4x128xf32>
    %190 = arith.mulf %189, %183 : vector<2x4x128xf32>
    %cst_46 = arith.constant dense<0.000000e+00> : vector<2x4xf32>
    %191 = vector.multi_reduction <add>, %190, %cst_46 [2] : vector<2x4x128xf32> to vector<2x4xf32>
    %cst_47 = arith.constant dense<0xFF800000> : vector<2xf32>
    %192 = vector.multi_reduction <maximumf>, %191, %cst_47 [1] : vector<2x4xf32> to vector<2xf32>
    %193 = vector.shape_cast %192 : vector<2xf32> to vector<2x1xf32>
    %194 = vector.broadcast %193 : vector<2x1xf32> to vector<2x4xf32>
    %195 = arith.subf %191, %194 : vector<2x4xf32>
    %196 = math.exp %195 : vector<2x4xf32>
    %cst_48 = arith.constant dense<0.000000e+00> : vector<2xf32>
    %197 = vector.multi_reduction <add>, %196, %cst_48 [1] : vector<2x4xf32> to vector<2xf32>
    %198 = vector.shape_cast %197 : vector<2xf32> to vector<2x1xf32>
    %199 = vector.broadcast %198 : vector<2x1xf32> to vector<2x4xf32>
    %200 = arith.divf %196, %199 : vector<2x4xf32>
    %201 = vector.shape_cast %200 : vector<2x4xf32> to vector<2x4x1xf32>
    %202 = vector.broadcast %201 : vector<2x4x1xf32> to vector<2x4x128xf32>
    %203 = arith.mulf %202, %185 : vector<2x4x128xf32>
    %cst_49 = arith.constant dense<0.000000e+00> : vector<2x128xf32>
    %204 = vector.multi_reduction <add>, %203, %cst_49 [1] : vector<2x4x128xf32> to vector<2x128xf32>
    %c6 = arith.constant 6 : index
    %c0_50 = arith.constant 0 : index
    %c0_51 = arith.constant 0 : index
    %205 = vector.load %arg5[%c6, %c0_50, %c0_51] : memref<8x2x128xf32, #tpu.memory_space<vmem>>, vector<1x2x128xf32>
    %206 = vector.shape_cast %205 : vector<1x2x128xf32> to vector<2x128xf32>
    %207 = vector.shape_cast %204 : vector<2x128xf32> to vector<1x2x128xf32>
    tpu.vector_store %arg5[%c6, %c0_50, %c0_51], %207 {strides = array<i32>} : memref<8x2x128xf32, #tpu.memory_space<vmem>>, vector<1x2x128xf32>,
    %208 = vector.extract_strided_slice %11 {offsets = [7, 0, 0], sizes = [1, 8, 256], strides = [1, 1, 1]} : vector<8x8x256xf32> to vector<1x8x256xf32>
    %209 = vector.shape_cast %208 : vector<1x8x256xf32> to vector<8x256xf32>
    %210 = vector.extract_strided_slice %209 {offsets = [0, 0], sizes = [8, 128], strides = [1, 1]} : vector<8x256xf32> to vector<8x128xf32>
    %211 = vector.shape_cast %210 : vector<8x128xf32> to vector<2x4x128xf32>
    %212 = vector.extract_strided_slice %209 {offsets = [0, 128], sizes = [8, 128], strides = [1, 1]} : vector<8x256xf32> to vector<8x128xf32>
    %213 = vector.shape_cast %212 : vector<8x128xf32> to vector<2x4x128xf32>
    %214 = vector.extract_strided_slice %10 {offsets = [7, 0, 0], sizes = [1, 2, 128], strides = [1, 1, 1]} : vector<8x2x128xf32> to vector<1x2x128xf32>
    %215 = vector.shape_cast %214 : vector<1x2x128xf32> to vector<2x128xf32>
    %216 = vector.shape_cast %215 : vector<2x128xf32> to vector<2x1x128xf32>
    %217 = vector.broadcast %216 : vector<2x1x128xf32> to vector<2x4x128xf32>
    %218 = arith.mulf %217, %211 : vector<2x4x128xf32>
    %cst_52 = arith.constant dense<0.000000e+00> : vector<2x4xf32>
    %219 = vector.multi_reduction <add>, %218, %cst_52 [2] : vector<2x4x128xf32> to vector<2x4xf32>
    %cst_53 = arith.constant dense<0xFF800000> : vector<2xf32>
    %220 = vector.multi_reduction <maximumf>, %219, %cst_53 [1] : vector<2x4xf32> to vector<2xf32>
    %221 = vector.shape_cast %220 : vector<2xf32> to vector<2x1xf32>
    %222 = vector.broadcast %221 : vector<2x1xf32> to vector<2x4xf32>
    %223 = arith.subf %219, %222 : vector<2x4xf32>
    %224 = math.exp %223 : vector<2x4xf32>
    %cst_54 = arith.constant dense<0.000000e+00> : vector<2xf32>
    %225 = vector.multi_reduction <add>, %224, %cst_54 [1] : vector<2x4xf32> to vector<2xf32>
    %226 = vector.shape_cast %225 : vector<2xf32> to vector<2x1xf32>
    %227 = vector.broadcast %226 : vector<2x1xf32> to vector<2x4xf32>
    %228 = arith.divf %224, %227 : vector<2x4xf32>
    %229 = vector.shape_cast %228 : vector<2x4xf32> to vector<2x4x1xf32>
    %230 = vector.broadcast %229 : vector<2x4x1xf32> to vector<2x4x128xf32>
    %231 = arith.mulf %230, %213 : vector<2x4x128xf32>
    %cst_55 = arith.constant dense<0.000000e+00> : vector<2x128xf32>
    %232 = vector.multi_reduction <add>, %231, %cst_55 [1] : vector<2x4x128xf32> to vector<2x128xf32>
    %c7 = arith.constant 7 : index
    %c0_56 = arith.constant 0 : index
    %c0_57 = arith.constant 0 : index
    %233 = vector.load %arg5[%c7, %c0_56, %c0_57] : memref<8x2x128xf32, #tpu.memory_space<vmem>>, vector<1x2x128xf32>
    %234 = vector.shape_cast %233 : vector<1x2x128xf32> to vector<2x128xf32>
    %235 = vector.shape_cast %232 : vector<2x128xf32> to vector<1x2x128xf32>
    tpu.vector_store %arg5[%c7, %c0_56, %c0_57], %235 {strides = array<i32>} : memref<8x2x128xf32, #tpu.memory_space<vmem>>, vector<1x2x128xf32>,
    return
  }
  func.func @transform_0(%arg0: i32) -> (i32, i32) {
    %c0_i32 = arith.constant 0 : i32
    %c0_i32_0 = arith.constant 0 : i32
    return %arg0, %c0_i32 : i32, i32
  }
  func.func @transform_1(%arg0: i32) -> (i32, i32) {
    %c0_i32 = arith.constant 0 : i32
    %c0_i32_0 = arith.constant 0 : i32
    return %arg0, %c0_i32 : i32, i32
  }
  func.func @transform_2(%arg0: i32) -> (i32, i32) {
    %c0_i32 = arith.constant 0 : i32
    %c0_i32_0 = arith.constant 0 : i32
    %c0_i32_1 = arith.constant 0 : i32
    return %c0_i32, %c0_i32_0 : i32, i32
  }
  func.func @transform_3(%arg0: i32) -> (i32, i32) {
    %c0_i32 = arith.constant 0 : i32
    %c0_i32_0 = arith.constant 0 : i32
    %c0_i32_1 = arith.constant 0 : i32
    return %c0_i32, %c0_i32_0 : i32, i32
  }
  func.func @transform_4(%arg0: i32) -> (i32, i32, i32) {
    %c0_i32 = arith.constant 0 : i32
    %c0_i32_0 = arith.constant 0 : i32
    %c0_i32_1 = arith.constant 0 : i32
    return %arg0, %c0_i32, %c0_i32_0 : i32, i32, i32
  }
}

</mosaic_0001>

<llo_original>
// kernel: tpu_custom_call.1
$region0: #{tpu_custom_call.1}
  #allocation0 [shape = 'u32[]', space=smem, size = 0x4, offset = 0x4, fixed_abs, tag = 'smem constant byte address 0x4 - core index']
  #allocation1 [shape = 'u32[144,128]{1,0:T(1,128)}', space=vmem, size = 0x12000, scoped, tag = 'internal scratch']
  %s0 = inlined_call_operand.vmem [shape: f32[64,32], index: 0, kind: input, shape index: {}]
  %s1 = inlined_call_operand.vmem [shape: f32[256,2049], index: 1, kind: input, shape index: {}]
  %s2 = inlined_call_operand.vmem [shape: bf16[32,128], index: 2, kind: input, shape index: {}]
  %s3 = inlined_call_operand.vmem [shape: bf16[2049,256], index: 3, kind: input, shape index: {}]
  %s4 = inlined_call_operand.hbm [shape: f32[32,2,128], index: 4, kind: output, shape index: {}]
  %s5 = sld [smem:[#allocation0]]
  $region49: #{tpu_custom_call.1} parent=0
    _
  %s7 = ssub.s32 1, %s5
  %s8 = scalar_select 0, %s7, %s5
  $region1: #{tpu_custom_call.1} parent=0
    #allocation2 [shape = 'u8[16384]{0}', space=vmem, size = 0x4000, scoped, tag = 'output window, operand 0']
    #allocation3 [shape = 's32[2]{0}', space=sflag, size = 0x8, scoped, tag = 'scoped memory for tpu_custom_call.1']
    %9 = vsyncpa [#allocation3], 0
    %s10 = scalar_lea.sflag [#allocation3], 1
    %11 = vsyncpa %s10, 0
    loop: start=0, step=1, limit=6
    $region2: #{tpu_custom_call.1} parent=1 // loop_pre_header
      _
    $region3: #{tpu_custom_call.1} parent=1 // loop_header
      %s13 = sphi 0, %s17
      %p14 = scmp.ge.s32.totalorder %s13, 6
      %s23 = sphi 0, %s25
      %s26 = sphi 0, %s23
      %s27 = sphi 0, %s26
      %s43 = sphi 0, %s27
      %s49 = sphi 0, %s51
      %s52 = sphi 0, %s49
      %s53 = sphi 0, %s52
      %s69 = sphi 0, %s53
      %s73 = sphi 0, %s73
      %s75 = sphi 0, %s73
      %s76 = sphi 0, %s75
      %s90 = sphi 0, %s76
      %s94 = sphi 0, %s94
      %s96 = sphi 0, %s94
      %s97 = sphi 0, %s96
      %s111 = sphi 0, %s97
      %s117 = sphi 0, %s119
      %s120 = sphi 0, %s117
      %s121 = sphi 0, %s120
      %s137 = sphi 0, %s121
    $region4: #{tpu_custom_call.1} parent=1 // loop_header_branch
      %16 = sbr.rel (%p14) target = $region8
    $region5: #{tpu_custom_call.1} parent=1 // loop_body
      %s18 = ssub.s32 %s13, 1
      %s19 = ssub.s32 %s13, 2
      %s20 = sadd.s32 %s13, 1
      %s21 = ssub.s32 %s13, %s20
      %p22 = scmp.eq.s32.totalorder %s21, 0
      %s24 = sadd.s32 %s23, 1
      %s25 = scalar_select %p22, %s23, %s24
      %p28 = pneg %p22
      %p29 = scmp.eq.s32.totalorder %s13, 3
      %p30 = por %p28, %p29
      %p31 = scmp.ne.s32.totalorder %s23, %s26
      %p32 = scmp.eq.s32.totalorder %s13, 0
      %p33 = por %p31, %p32
      %p34 = scmp.ne.s32.totalorder %s23, %s26
      %p35 = scmp.eq.s32.totalorder %s18, 3
      %p36 = por %p34, %p35
      %p37 = scmp.ne.s32.totalorder %s26, %s27
      %p38 = scmp.eq.s32.totalorder %s18, 0
      %p39 = por %p37, %p38
      %p40 = scmp.ne.s32.totalorder %s26, %s27
      %p41 = scmp.eq.s32.totalorder %s19, 3
      %p42 = por %p40, %p41
      %p44 = scmp.ne.s32.totalorder %s27, %s43
      %p45 = scmp.eq.s32.totalorder %s19, 0
      %p46 = por %p44, %p45
      %s47 = ssub.s32 %s13, %s20
      %p48 = scmp.eq.s32.totalorder %s47, 0
      %s50 = sadd.s32 %s49, 1
      %s51 = scalar_select %p48, %s49, %s50
      %p54 = pneg %p48
      %p55 = scmp.eq.s32.totalorder %s13, 3
      %p56 = por %p54, %p55
      %p57 = scmp.ne.s32.totalorder %s49, %s52
      %p58 = scmp.eq.s32.totalorder %s13, 0
      %p59 = por %p57, %p58
      %p60 = scmp.ne.s32.totalorder %s49, %s52
      %p61 = scmp.eq.s32.totalorder %s18, 3
      %p62 = por %p60, %p61
      %p63 = scmp.ne.s32.totalorder %s52, %s53
      %p64 = scmp.eq.s32.totalorder %s18, 0
      %p65 = por %p63, %p64
      %p66 = scmp.ne.s32.totalorder %s52, %s53
      %p67 = scmp.eq.s32.totalorder %s19, 3
      %p68 = por %p66, %p67
      %p70 = scmp.ne.s32.totalorder %s53, %s69
      %p71 = scmp.eq.s32.totalorder %s19, 0
      %p72 = por %p70, %p71
      %s74 = sadd.s32 %s73, 1
      %p77 = scmp.eq.s32.totalorder %s13, 3
      %p78 = scmp.ne.s32.totalorder %s73, %s75
      %p79 = scmp.eq.s32.totalorder %s13, 0
      %p80 = por %p78, %p79
      %p81 = scmp.ne.s32.totalorder %s73, %s75
      %p82 = scmp.eq.s32.totalorder %s18, 3
      %p83 = por %p81, %p82
      %p84 = scmp.ne.s32.totalorder %s75, %s76
      %p85 = scmp.eq.s32.totalorder %s18, 0
      %p86 = por %p84, %p85
      %p87 = scmp.ne.s32.totalorder %s75, %s76
      %p88 = scmp.eq.s32.totalorder %s19, 3
      %p89 = por %p87, %p88
      %p91 = scmp.ne.s32.totalorder %s76, %s90
      %p92 = scmp.eq.s32.totalorder %s19, 0
      %p93 = por %p91, %p92
      %s95 = sadd.s32 %s94, 1
      %p98 = scmp.eq.s32.totalorder %s13, 3
      %p99 = scmp.ne.s32.totalorder %s94, %s96
      %p100 = scmp.eq.s32.totalorder %s13, 0
      %p101 = por %p99, %p100
      %p102 = scmp.ne.s32.totalorder %s94, %s96
      %p103 = scmp.eq.s32.totalorder %s18, 3
      %p104 = por %p102, %p103
      %p105 = scmp.ne.s32.totalorder %s96, %s97
      %p106 = scmp.eq.s32.totalorder %s18, 0
      %p107 = por %p105, %p106
      %p108 = scmp.ne.s32.totalorder %s96, %s97
      %p109 = scmp.eq.s32.totalorder %s19, 3
      %p110 = por %p108, %p109
      %p112 = scmp.ne.s32.totalorder %s97, %s111
      %p113 = scmp.eq.s32.totalorder %s19, 0
      %p114 = por %p112, %p113
      %s115 = ssub.s32 %s13, %s20
      %p116 = scmp.eq.s32.totalorder %s115, 0
      %s118 = sadd.s32 %s117, 1
      %s119 = scalar_select %p116, %s117, %s118
      %p122 = pneg %p116
      %p123 = scmp.eq.s32.totalorder %s13, 3
      %p124 = por %p122, %p123
      %p125 = scmp.ne.s32.totalorder %s117, %s120
      %p126 = scmp.eq.s32.totalorder %s13, 0
      %p127 = por %p125, %p126
      %p128 = scmp.ne.s32.totalorder %s117, %s120
      %p129 = scmp.eq.s32.totalorder %s18, 3
      %p130 = por %p128, %p129
      %p131 = scmp.ne.s32.totalorder %s120, %s121
      %p132 = scmp.eq.s32.totalorder %s18, 0
      %p133 = por %p131, %p132
      %p134 = scmp.ne.s32.totalorder %s120, %s121
      %p135 = scmp.eq.s32.totalorder %s19, 3
      %p136 = por %p134, %p135
      %p138 = scmp.ne.s32.totalorder %s121, %s137
      %p139 = scmp.eq.s32.totalorder %s19, 0
      %p140 = por %p138, %p139
      %p141 = scmp.le.s32.totalorder 1, %s13
      %p142 = scmp.lt.s32.totalorder %s13, 5
      %p143 = pnand %p141, %p142
      %p144 = pneg %p143
      // Predicated region
      $region9: #{tpu_custom_call.1} parent=5 // pred_check
        _
      $region10: #{tpu_custom_call.1} parent=5 // pred_check_branch
        %146 = sbr.rel (%p143) target = $region12
      $region11: #{tpu_custom_call.1} parent=5 // pred_region
        %s147 = ssub.s32 %s13, 1
        // Predicated region
        $region13: #{tpu_custom_call.1} parent=11 // pred_check
          %p148 = pneg %p86
        $region14: #{tpu_custom_call.1} parent=11 // pred_check_branch
          %150 = sbr.rel (%p148) target = $region16
        $region15: #{tpu_custom_call.1} parent=11 // pred_region
          _
        $region16: #{tpu_custom_call.1} parent=11 // pred_fallthru
          _
        // Predicated region
        $region17: #{tpu_custom_call.1} parent=11 // pred_check
          %p151 = pneg %p107
        $region18: #{tpu_custom_call.1} parent=11 // pred_check_branch
          %153 = sbr.rel (%p151) target = $region20
        $region19: #{tpu_custom_call.1} parent=11 // pred_region
          _
        $region20: #{tpu_custom_call.1} parent=11 // pred_fallthru
          _
      $region12: #{tpu_custom_call.1} parent=5 // pred_fallthru
        _
      %p154 = scmp.lt.s32.totalorder %s13, 4
      // Predicated region
      $region21: #{tpu_custom_call.1} parent=5 // pred_check
        %p155 = pneg %p154
      $region22: #{tpu_custom_call.1} parent=5 // pred_check_branch
        %157 = sbr.rel (%p155) target = $region24
      $region23: #{tpu_custom_call.1} parent=5 // pred_region
        // Predicated region
        $region25: #{tpu_custom_call.1} parent=23 // pred_check
          %p158 = pneg %p33
        $region26: #{tpu_custom_call.1} parent=23 // pred_check_branch
          %160 = sbr.rel (%p158) target = $region28
        $region27: #{tpu_custom_call.1} parent=23 // pred_region
          %s161 = smul.u32 2, %s13
          %p162 = scmp.lt.s32.totalorder %s161, 7
          %s163 = scalar_select %p162, %s161, 7
          %s164 = smul.addr %s163, 8
          %s165 = scalar_lea.vmem %s0, %s164
          %s166 = smul.u32 2, %s13
        $region28: #{tpu_custom_call.1} parent=23 // pred_fallthru
          _
        // Predicated region
        $region29: #{tpu_custom_call.1} parent=23 // pred_check
          %p167 = pneg %p59
        $region30: #{tpu_custom_call.1} parent=23 // pred_check_branch
          %169 = sbr.rel (%p167) target = $region32
        $region31: #{tpu_custom_call.1} parent=23 // pred_region
          %s170 = smul.u32 8, %s13
          %p171 = scmp.lt.s32.totalorder %s170, 31
          %s172 = scalar_select %p171, %s170, 31
          %s173 = smul.addr %s172, 17
          %s174 = smul.addr %s173, 8
          %s175 = scalar_lea.vmem %s1, %s174
          %s176 = smul.u32 8, %s13
        $region32: #{tpu_custom_call.1} parent=23 // pred_fallthru
          _
      $region24: #{tpu_custom_call.1} parent=5 // pred_fallthru
        _
      %p177 = scmp.le.s32.totalorder 1, %s13
      %p178 = scmp.lt.s32.totalorder %s13, 5
      %p179 = pnand %p177, %p178
      %p180 = pneg %p179
      // Predicated region
      $region33: #{tpu_custom_call.1} parent=5 // pred_check
        _
      $region34: #{tpu_custom_call.1} parent=5 // pred_check_branch
        %182 = sbr.rel (%p179) target = $region36
      $region35: #{tpu_custom_call.1} parent=5 // pred_region
        %s183 = ssub.s32 %s13, 1
        %s184 = smul.u32 2, %s18
        %p185 = scmp.lt.s32.totalorder %s184, 7
        %s186 = scalar_select %p185, %s184, 7
        %s187 = smul.addr %s186, 8
        %s188 = scalar_lea.vmem %s0, %s187
        %p189 = pneg %p39
        %p190 = pneg %p36
        %s191 = smul.u32 8, %s18
        %p192 = scmp.lt.s32.totalorder %s191, 31
        %s193 = scalar_select %p192, %s191, 31
        %s194 = smul.addr %s193, 17
        %s195 = smul.addr %s194, 8
        %s196 = scalar_lea.vmem %s1, %s195
        %p197 = pneg %p65
        %p198 = pneg %p62
        %p199 = pneg %p86
        %p200 = pneg %p83
        %p201 = pneg %p107
        %p202 = pneg %p104
        %p203 = pneg %p133
        %p204 = pneg %p130
        %s205 = sand.u32 %s120, 1
        %s206 = scalar_lea.sflag [#allocation3], %s205
        %s207 = sand.u32 %s120, 1
        %s208 = smul.addr %s207, 16
        %s209 = scalar_lea.vmem [#allocation2], %s208
        %s210 = smul.u32 2, %s18
        %p211 = scmp.lt.s32.totalorder %s210, 7
        %s212 = scalar_select %p211, %s210, 7
        %s213 = smul.addr %s212, 8
        %s214 = scalar_lea.vmem %s0, %s213
        %s215 = smul.u32 2, %s18
        %s216 = smul.u32 8, %s18
        %p217 = scmp.lt.s32.totalorder %s216, 31
        %s218 = scalar_select %p217, %s216, 31
        %s219 = smul.addr %s218, 17
        %s220 = smul.addr %s219, 8
        %s221 = scalar_lea.vmem %s1, %s220
        %s222 = smul.u32 8, %s18
        %s223 = smul.u32 8, %s18
        %v225 = vld [vmem:[%s214] sm:$0xff]
        %v226 = vld [vmem:[%s214 + $0x8] sm:$0xff]
        %v227 = vpack.c.bf16 %v226, %v225
        %v228 = vld [vmem:[%s221] sm:$0xff]
        %v229 = vld [vmem:[%s221 + $0x8] sm:$0xff]
        %v230 = vld [vmem:[%s221 + $0x10] sm:$0xff]
        %v231 = vld [vmem:[%s221 + $0x18] sm:$0xff]
        %v232 = vld [vmem:[%s221 + $0x20] sm:$0xff]
        %v233 = vld [vmem:[%s221 + $0x28] sm:$0xff]
        %v234 = vld [vmem:[%s221 + $0x30] sm:$0xff]
        %v235 = vld [vmem:[%s221 + $0x38] sm:$0xff]
        %v236 = vld [vmem:[%s221 + $0x40] sm:$0xff]
        %v237 = vld [vmem:[%s221 + $0x48] sm:$0xff]
        %v238 = vld [vmem:[%s221 + $0x50] sm:$0xff]
        %v239 = vld [vmem:[%s221 + $0x58] sm:$0xff]
        %v240 = vld [vmem:[%s221 + $0x60] sm:$0xff]
        %v241 = vld [vmem:[%s221 + $0x68] sm:$0xff]
        %v242 = vld [vmem:[%s221 + $0x70] sm:$0xff]
        %v243 = vld [vmem:[%s221 + $0x78] sm:$0xff]
        %v244 = vld [vmem:[%s221 + $0x80] sm:$0xff]
        %v245 = vld [vmem:[%s221 + $0x88] sm:$0xff]
        %v246 = vld [vmem:[%s221 + $0x90] sm:$0xff]
        %v247 = vld [vmem:[%s221 + $0x98] sm:$0xff]
        %v248 = vld [vmem:[%s221 + $0xa0] sm:$0xff]
        %v249 = vld [vmem:[%s221 + $0xa8] sm:$0xff]
        %v250 = vld [vmem:[%s221 + $0xb0] sm:$0xff]
        %v251 = vld [vmem:[%s221 + $0xb8] sm:$0xff]
        %v252 = vld [vmem:[%s221 + $0xc0] sm:$0xff]
        %v253 = vld [vmem:[%s221 + $0xc8] sm:$0xff]
        %v254 = vld [vmem:[%s221 + $0xd0] sm:$0xff]
        %v255 = vld [vmem:[%s221 + $0xd8] sm:$0xff]
        %v256 = vld [vmem:[%s221 + $0xe0] sm:$0xff]
        %v257 = vld [vmem:[%s221 + $0xe8] sm:$0xff]
        %v258 = vld [vmem:[%s221 + $0xf0] sm:$0xff]
        %v259 = vld [vmem:[%s221 + $0xf8] sm:$0xff]
        %v260 = vld [vmem:[%s221 + $0x100] sm:$0xff]
        %v261 = vld [vmem:[%s221 + $0x108] sm:$0xff]
        %v262 = vld [vmem:[%s221 + $0x110] sm:$0xff]
        %v263 = vld [vmem:[%s221 + $0x118] sm:$0xff]
        %v264 = vld [vmem:[%s221 + $0x120] sm:$0xff]
        %v265 = vld [vmem:[%s221 + $0x128] sm:$0xff]
        %v266 = vld [vmem:[%s221 + $0x130] sm:$0xff]
        %v267 = vld [vmem:[%s221 + $0x138] sm:$0xff]
        %v268 = vld [vmem:[%s221 + $0x140] sm:$0xff]
        %v269 = vld [vmem:[%s221 + $0x148] sm:$0xff]
        %v270 = vld [vmem:[%s221 + $0x150] sm:$0xff]
        %v271 = vld [vmem:[%s221 + $0x158] sm:$0xff]
        %v272 = vld [vmem:[%s221 + $0x160] sm:$0xff]
        %v273 = vld [vmem:[%s221 + $0x168] sm:$0xff]
        %v274 = vld [vmem:[%s221 + $0x170] sm:$0xff]
        %v275 = vld [vmem:[%s221 + $0x178] sm:$0xff]
        %v276 = vld [vmem:[%s221 + $0x180] sm:$0xff]
        %v277 = vld [vmem:[%s221 + $0x188] sm:$0xff]
        %v278 = vld [vmem:[%s221 + $0x190] sm:$0xff]
        %v279 = vld [vmem:[%s221 + $0x198] sm:$0xff]
        %v280 = vld [vmem:[%s221 + $0x1a0] sm:$0xff]
        %v281 = vld [vmem:[%s221 + $0x1a8] sm:$0xff]
        %v282 = vld [vmem:[%s221 + $0x1b0] sm:$0xff]
        %v283 = vld [vmem:[%s221 + $0x1b8] sm:$0xff]
        %v284 = vld [vmem:[%s221 + $0x1c0] sm:$0xff]
        %v285 = vld [vmem:[%s221 + $0x1c8] sm:$0xff]
        %v286 = vld [vmem:[%s221 + $0x1d0] sm:$0xff]
        %v287 = vld [vmem:[%s221 + $0x1d8] sm:$0xff]
        %v288 = vld [vmem:[%s221 + $0x1e0] sm:$0xff]
        %v289 = vld [vmem:[%s221 + $0x1e8] sm:$0xff]
        %v290 = vld [vmem:[%s221 + $0x1f0] sm:$0xff]
        %v291 = vld [vmem:[%s221 + $0x1f8] sm:$0xff]
        %v292 = vld [vmem:[%s221 + $0x200] sm:$0xff]
        %v293 = vld [vmem:[%s221 + $0x208] sm:$0xff]
        %v294 = vld [vmem:[%s221 + $0x210] sm:$0xff]
        %v295 = vld [vmem:[%s221 + $0x218] sm:$0xff]
        %v296 = vld [vmem:[%s221 + $0x220] sm:$0xff]
        %v297 = vld [vmem:[%s221 + $0x228] sm:$0xff]
        %v298 = vld [vmem:[%s221 + $0x230] sm:$0xff]
        %v299 = vld [vmem:[%s221 + $0x238] sm:$0xff]
        %v300 = vld [vmem:[%s221 + $0x240] sm:$0xff]
        %v301 = vld [vmem:[%s221 + $0x248] sm:$0xff]
        %v302 = vld [vmem:[%s221 + $0x250] sm:$0xff]
        %v303 = vld [vmem:[%s221 + $0x258] sm:$0xff]
        %v304 = vld [vmem:[%s221 + $0x260] sm:$0xff]
        %v305 = vld [vmem:[%s221 + $0x268] sm:$0xff]
        %v306 = vld [vmem:[%s221 + $0x270] sm:$0xff]
        %v307 = vld [vmem:[%s221 + $0x278] sm:$0xff]
        %v308 = vld [vmem:[%s221 + $0x280] sm:$0xff]
        %v309 = vld [vmem:[%s221 + $0x288] sm:$0xff]
        %v310 = vld [vmem:[%s221 + $0x290] sm:$0xff]
        %v311 = vld [vmem:[%s221 + $0x298] sm:$0xff]
        %v312 = vld [vmem:[%s221 + $0x2a0] sm:$0xff]
        %v313 = vld [vmem:[%s221 + $0x2a8] sm:$0xff]
        %v314 = vld [vmem:[%s221 + $0x2b0] sm:$0xff]
        %v315 = vld [vmem:[%s221 + $0x2b8] sm:$0xff]
        %v316 = vld [vmem:[%s221 + $0x2c0] sm:$0xff]
        %v317 = vld [vmem:[%s221 + $0x2c8] sm:$0xff]
        %v318 = vld [vmem:[%s221 + $0x2d0] sm:$0xff]
        %v319 = vld [vmem:[%s221 + $0x2d8] sm:$0xff]
        %v320 = vld [vmem:[%s221 + $0x2e0] sm:$0xff]
        %v321 = vld [vmem:[%s221 + $0x2e8] sm:$0xff]
        %v322 = vld [vmem:[%s221 + $0x2f0] sm:$0xff]
        %v323 = vld [vmem:[%s221 + $0x2f8] sm:$0xff]
        %v324 = vld [vmem:[%s221 + $0x300] sm:$0xff]
        %v325 = vld [vmem:[%s221 + $0x308] sm:$0xff]
        %v326 = vld [vmem:[%s221 + $0x310] sm:$0xff]
        %v327 = vld [vmem:[%s221 + $0x318] sm:$0xff]
        %v328 = vld [vmem:[%s221 + $0x320] sm:$0xff]
        %v329 = vld [vmem:[%s221 + $0x328] sm:$0xff]
        %v330 = vld [vmem:[%s221 + $0x330] sm:$0xff]
        %v331 = vld [vmem:[%s221 + $0x338] sm:$0xff]
        %v332 = vld [vmem:[%s221 + $0x340] sm:$0xff]
        %v333 = vld [vmem:[%s221 + $0x348] sm:$0xff]
        %v334 = vld [vmem:[%s221 + $0x350] sm:$0xff]
        %v335 = vld [vmem:[%s221 + $0x358] sm:$0xff]
        %v336 = vld [vmem:[%s221 + $0x360] sm:$0xff]
        %v337 = vld [vmem:[%s221 + $0x368] sm:$0xff]
        %v338 = vld [vmem:[%s221 + $0x370] sm:$0xff]
        %v339 = vld [vmem:[%s221 + $0x378] sm:$0xff]
        %v340 = vld [vmem:[%s221 + $0x380] sm:$0xff]
        %v341 = vld [vmem:[%s221 + $0x388] sm:$0xff]
        %v342 = vld [vmem:[%s221 + $0x390] sm:$0xff]
        %v343 = vld [vmem:[%s221 + $0x398] sm:$0xff]
        %v344 = vld [vmem:[%s221 + $0x3a0] sm:$0xff]
        %v345 = vld [vmem:[%s221 + $0x3a8] sm:$0xff]
        %v346 = vld [vmem:[%s221 + $0x3b0] sm:$0xff]
        %v347 = vld [vmem:[%s221 + $0x3b8] sm:$0xff]
        %v348 = vld [vmem:[%s221 + $0x3c0] sm:$0xff]
        %v349 = vld [vmem:[%s221 + $0x3c8] sm:$0xff]
        %v350 = vld [vmem:[%s221 + $0x3d0] sm:$0xff]
        %v351 = vld [vmem:[%s221 + $0x3d8] sm:$0xff]
        %v352 = vld [vmem:[%s221 + $0x3e0] sm:$0xff]
        %v353 = vld [vmem:[%s221 + $0x3e8] sm:$0xff]
        %v354 = vld [vmem:[%s221 + $0x3f0] sm:$0xff]
        %v355 = vld [vmem:[%s221 + $0x3f8] sm:$0xff]
        %v356 = vld [vmem:[%s221 + $0x400] sm:$0xff]
        %v357 = vld [vmem:[%s221 + $0x408] sm:$0xff]
        %v358 = vld [vmem:[%s221 + $0x410] sm:$0xff]
        %v359 = vld [vmem:[%s221 + $0x418] sm:$0xff]
        %v360 = vld [vmem:[%s221 + $0x420] sm:$0xff]
        %v361 = vld [vmem:[%s221 + $0x428] sm:$0xff]
        %v362 = vld [vmem:[%s221 + $0x430] sm:$0xff]
        %v363 = vld [vmem:[%s221 + $0x438] sm:$0xff]
        %v364 = vpack.c.bf16 %v245, %v228
        %v365 = vpack.c.bf16 %v246, %v229
        %v366 = vpack.c.bf16 %v247, %v230
        %v367 = vpack.c.bf16 %v248, %v231
        %v368 = vpack.c.bf16 %v249, %v232
        %v369 = vpack.c.bf16 %v250, %v233
        %v370 = vpack.c.bf16 %v251, %v234
        %v371 = vpack.c.bf16 %v252, %v235
        %v372 = vpack.c.bf16 %v253, %v236
        %v373 = vpack.c.bf16 %v254, %v237
        %v374 = vpack.c.bf16 %v255, %v238
        %v375 = vpack.c.bf16 %v256, %v239
        %v376 = vpack.c.bf16 %v257, %v240
        %v377 = vpack.c.bf16 %v258, %v241
        %v378 = vpack.c.bf16 %v259, %v242
        %v379 = vpack.c.bf16 %v260, %v243
        %v380 = vpack.c.bf16 %v261, %v244
        %v381 = vpack.c.bf16 %v279, %v262
        %v382 = vpack.c.bf16 %v280, %v263
        %v383 = vpack.c.bf16 %v281, %v264
        %v384 = vpack.c.bf16 %v282, %v265
        %v385 = vpack.c.bf16 %v283, %v266
        %v386 = vpack.c.bf16 %v284, %v267
        %v387 = vpack.c.bf16 %v285, %v268
        %v388 = vpack.c.bf16 %v286, %v269
        %v389 = vpack.c.bf16 %v287, %v270
        %v390 = vpack.c.bf16 %v288, %v271
        %v391 = vpack.c.bf16 %v289, %v272
        %v392 = vpack.c.bf16 %v290, %v273
        %v393 = vpack.c.bf16 %v291, %v274
        %v394 = vpack.c.bf16 %v292, %v275
        %v395 = vpack.c.bf16 %v293, %v276
        %v396 = vpack.c.bf16 %v294, %v277
        %v397 = vpack.c.bf16 %v295, %v278
        %v398 = vpack.c.bf16 %v313, %v296
        %v399 = vpack.c.bf16 %v314, %v297
        %v400 = vpack.c.bf16 %v315, %v298
        %v401 = vpack.c.bf16 %v316, %v299
        %v402 = vpack.c.bf16 %v317, %v300
        %v403 = vpack.c.bf16 %v318, %v301
        %v404 = vpack.c.bf16 %v319, %v302
        %v405 = vpack.c.bf16 %v320, %v303
        %v406 = vpack.c.bf16 %v321, %v304
        %v407 = vpack.c.bf16 %v322, %v305
        %v408 = vpack.c.bf16 %v323, %v306
        %v409 = vpack.c.bf16 %v324, %v307
        %v410 = vpack.c.bf16 %v325, %v308
        %v411 = vpack.c.bf16 %v326, %v309
        %v412 = vpack.c.bf16 %v327, %v310
        %v413 = vpack.c.bf16 %v328, %v311
        %v414 = vpack.c.bf16 %v329, %v312
        %v415 = vpack.c.bf16 %v347, %v330
        %v416 = vpack.c.bf16 %v348, %v331
        %v417 = vpack.c.bf16 %v349, %v332
        %v418 = vpack.c.bf16 %v350, %v333
        %v419 = vpack.c.bf16 %v351, %v334
        %v420 = vpack.c.bf16 %v352, %v335
        %v421 = vpack.c.bf16 %v353, %v336
        %v422 = vpack.c.bf16 %v354, %v337
        %v423 = vpack.c.bf16 %v355, %v338
        %v424 = vpack.c.bf16 %v356, %v339
        %v425 = vpack.c.bf16 %v357, %v340
        %v426 = vpack.c.bf16 %v358, %v341
        %v427 = vpack.c.bf16 %v359, %v342
        %v428 = vpack.c.bf16 %v360, %v343
        %v429 = vpack.c.bf16 %v361, %v344
        %v430 = vpack.c.bf16 %v362, %v345
        %v431 = vpack.c.bf16 %v363, %v346
        %v432 = vld [vmem:[%s2] sm:$0xf]
        %v433 = vld [vmem:[%s2 + $0x4] sm:$0xf]
        %v434 = vld [vmem:[%s2 + $0x8] sm:$0xf]
        %v435 = vld [vmem:[%s2 + $0xc] sm:$0xf]
        %v440 = vunpack.c.l.b16 %v432
        %v441 = vunpack.c.l.b16 %v433
        %v442 = vunpack.c.l.b16 %v434
        %v443 = vunpack.c.l.b16 %v435
        %v444 = vpack.c.b16 %v441, %v440
        %v445 = vpack.c.b16 %v443, %v442
        %vm448 = vcmask 261120
        %v450 = vsel %vm448, %v227, 0
        %452 = vmatprep.subr.bf16.mxu0 0
        %453 = vmatpush1.bf16.msra.mxu0 %v444
        %454 = vmatprep.subr.bf16.mxu0 0
        %455 = vmatpush1.bf16.msra.mxu0 %v445
        %456 = vmatprep.subr.bf16.mxu0 0
        %457 = vmatpush1.bf16.msra.mxu0 0
        %458 = vmatprep.subr.bf16.mxu0 0
        %459 = vmatpush1.bf16.msra.mxu0 0
        %460 = vmatprep.subr.bf16.mxu0 0
        %461 = vmatpush1.bf16.msra.mxu0 0
        %462 = vmatprep.subr.bf16.mxu0 0
        %463 = vmatpush1.bf16.msra.mxu0 0
        %464 = vmatprep.subr.bf16.mxu0 0
        %465 = vmatpush1.bf16.msra.mxu0 0
        %466 = vmatprep.subr.bf16.mxu0 0
        %467 = vmatpush1.bf16.msra.mxu0 0
        %468 = vmatprep.subr.bf16.mxu0 0
        %469 = vmatpush1.bf16.msra.mxu0 0
        %470 = vmatprep.subr.bf16.mxu0 0
        %471 = vmatpush1.bf16.msra.mxu0 0
        %472 = vmatprep.subr.bf16.mxu0 0
        %473 = vmatpush1.bf16.msra.mxu0 0
        %474 = vmatprep.subr.bf16.mxu0 0
        %475 = vmatpush1.bf16.msra.mxu0 0
        %476 = vmatprep.subr.bf16.mxu0 0
        %477 = vmatpush1.bf16.msra.mxu0 0
        %478 = vmatprep.subr.bf16.mxu0 0
        %479 = vmatpush1.bf16.msra.mxu0 0
        %480 = vmatprep.subr.bf16.mxu0 0
        %481 = vmatpush1.bf16.msra.mxu0 0
        %482 = vmatprep.subr.bf16.mxu0 0
        %483 = vmatpush1.bf16.msra.mxu0 0
        %484 = vmatprep.mubr.bf16.mxu0 0
        %485 = vmatmul.mubr.bf16.gmra.mrb[0].mxu0 %v450
        %v486 = vpop.f32.mrb[0].mxu0
        %v487 = vadd.f32 0.0, %v486
        %v488 = vpop.f32.mrb[0].mxu0
        %v489 = vpop.f32.mrb[0].mxu0
        %v490 = vadd.f32 0.0, %v489
        %v491 = vpop.f32.mrb[0].mxu0
        %492 = vdwg.mxu0
        %v493 = vmul.f32 %v487, 0.25
        %v494 = vmul.f32 %v490, 0.25
        %v495 = vld [vmem:[%s3] sm:$0xff]
        %v496 = vld [vmem:[%s3 + $0x8] sm:$0xff]
        %v497 = vld [vmem:[%s3 + $0x10] sm:$0xff]
        %v498 = vld [vmem:[%s3 + $0x18] sm:$0xff]
        %v499 = vld [vmem:[%s3 + $0x20] sm:$0xff]
        %v500 = vld [vmem:[%s3 + $0x28] sm:$0xff]
        %v501 = vld [vmem:[%s3 + $0x30] sm:$0xff]
        %v502 = vld [vmem:[%s3 + $0x38] sm:$0xff]
        %v503 = vld [vmem:[%s3 + $0x40] sm:$0xff]
        %v504 = vld [vmem:[%s3 + $0x48] sm:$0xff]
        %v505 = vld [vmem:[%s3 + $0x50] sm:$0xff]
        %v506 = vld [vmem:[%s3 + $0x58] sm:$0xff]
        %v507 = vld [vmem:[%s3 + $0x60] sm:$0xff]
        %v508 = vld [vmem:[%s3 + $0x68] sm:$0xff]
        %v509 = vld [vmem:[%s3 + $0x70] sm:$0xff]
        %v510 = vld [vmem:[%s3 + $0x78] sm:$0xff]
        %v511 = vld [vmem:[%s3 + $0x80] sm:$0xff]
        %v512 = vld [vmem:[%s3 + $0x88] sm:$0xff]
        %v513 = vld [vmem:[%s3 + $0x90] sm:$0xff]
        %v514 = vld [vmem:[%s3 + $0x98] sm:$0xff]
        %v515 = vld [vmem:[%s3 + $0xa0] sm:$0xff]
        %v516 = vld [vmem:[%s3 + $0xa8] sm:$0xff]
        %v517 = vld [vmem:[%s3 + $0xb0] sm:$0xff]
        %v518 = vld [vmem:[%s3 + $0xb8] sm:$0xff]
        %v519 = vld [vmem:[%s3 + $0xc0] sm:$0xff]
        %v520 = vld [vmem:[%s3 + $0xc8] sm:$0xff]
        %v521 = vld [vmem:[%s3 + $0xd0] sm:$0xff]
        %v522 = vld [vmem:[%s3 + $0xd8] sm:$0xff]
        %v523 = vld [vmem:[%s3 + $0xe0] sm:$0xff]
        %v524 = vld [vmem:[%s3 + $0xe8] sm:$0xff]
        %v525 = vld [vmem:[%s3 + $0xf0] sm:$0xff]
        %v526 = vld [vmem:[%s3 + $0xf8] sm:$0xff]
        %v527 = vld [vmem:[%s3 + $0x100] sm:$0xff]
        %v528 = vld [vmem:[%s3 + $0x108] sm:$0xff]
        %v529 = vld [vmem:[%s3 + $0x110] sm:$0xff]
        %v530 = vld [vmem:[%s3 + $0x118] sm:$0xff]
        %v531 = vld [vmem:[%s3 + $0x120] sm:$0xff]
        %v532 = vld [vmem:[%s3 + $0x128] sm:$0xff]
        %v533 = vld [vmem:[%s3 + $0x130] sm:$0xff]
        %v534 = vld [vmem:[%s3 + $0x138] sm:$0xff]
        %v535 = vld [vmem:[%s3 + $0x140] sm:$0xff]
        %v536 = vld [vmem:[%s3 + $0x148] sm:$0xff]
        %v537 = vld [vmem:[%s3 + $0x150] sm:$0xff]
        %v538 = vld [vmem:[%s3 + $0x158] sm:$0xff]
        %v539 = vld [vmem:[%s3 + $0x160] sm:$0xff]
        %v540 = vld [vmem:[%s3 + $0x168] sm:$0xff]
        %v541 = vld [vmem:[%s3 + $0x170] sm:$0xff]
        %v542 = vld [vmem:[%s3 + $0x178] sm:$0xff]
        %v543 = vld [vmem:[%s3 + $0x180] sm:$0xff]
        %v544 = vld [vmem:[%s3 + $0x188] sm:$0xff]
        %v545 = vld [vmem:[%s3 + $0x190] sm:$0xff]
        %v546 = vld [vmem:[%s3 + $0x198] sm:$0xff]
        %v547 = vld [vmem:[%s3 + $0x1a0] sm:$0xff]
        %v548 = vld [vmem:[%s3 + $0x1a8] sm:$0xff]
        %v549 = vld [vmem:[%s3 + $0x1b0] sm:$0xff]
        %v550 = vld [vmem:[%s3 + $0x1b8] sm:$0xff]
        %v551 = vld [vmem:[%s3 + $0x1c0] sm:$0xff]
        %v552 = vld [vmem:[%s3 + $0x1c8] sm:$0xff]
        %v553 = vld [vmem:[%s3 + $0x1d0] sm:$0xff]
        %v554 = vld [vmem:[%s3 + $0x1d8] sm:$0xff]
        %v555 = vld [vmem:[%s3 + $0x1e0] sm:$0xff]
        %v556 = vld [vmem:[%s3 + $0x1e8] sm:$0xff]
        %v557 = vld [vmem:[%s3 + $0x1f0] sm:$0xff]
        %v558 = vld [vmem:[%s3 + $0x1f8] sm:$0xff]
        %v559 = vld [vmem:[%s3 + $0x200] sm:$0xff]
        %v560 = vld [vmem:[%s3 + $0x208] sm:$0xff]
        %v561 = vld [vmem:[%s3 + $0x210] sm:$0xff]
        %v562 = vld [vmem:[%s3 + $0x218] sm:$0xff]
        %v563 = vld [vmem:[%s3 + $0x220] sm:$0xff]
        %v564 = vld [vmem:[%s3 + $0x228] sm:$0xff]
        %v565 = vld [vmem:[%s3 + $0x230] sm:$0xff]
        %v566 = vld [vmem:[%s3 + $0x238] sm:$0xff]
        %v567 = vld [vmem:[%s3 + $0x240] sm:$0xff]
        %v568 = vld [vmem:[%s3 + $0x248] sm:$0xff]
        %v569 = vld [vmem:[%s3 + $0x250] sm:$0xff]
        %v570 = vld [vmem:[%s3 + $0x258] sm:$0xff]
        %v571 = vld [vmem:[%s3 + $0x260] sm:$0xff]
        %v572 = vld [vmem:[%s3 + $0x268] sm:$0xff]
        %v573 = vld [vmem:[%s3 + $0x270] sm:$0xff]
        %v574 = vld [vmem:[%s3 + $0x278] sm:$0xff]
        %v575 = vld [vmem:[%s3 + $0x280] sm:$0xff]
        %v576 = vld [vmem:[%s3 + $0x288] sm:$0xff]
        %v577 = vld [vmem:[%s3 + $0x290] sm:$0xff]
        %v578 = vld [vmem:[%s3 + $0x298] sm:$0xff]
        %v579 = vld [vmem:[%s3 + $0x2a0] sm:$0xff]
        %v580 = vld [vmem:[%s3 + $0x2a8] sm:$0xff]
        %v581 = vld [vmem:[%s3 + $0x2b0] sm:$0xff]
        %v582 = vld [vmem:[%s3 + $0x2b8] sm:$0xff]
        %v583 = vld [vmem:[%s3 + $0x2c0] sm:$0xff]
        %v584 = vld [vmem:[%s3 + $0x2c8] sm:$0xff]
        %v585 = vld [vmem:[%s3 + $0x2d0] sm:$0xff]
        %v586 = vld [vmem:[%s3 + $0x2d8] sm:$0xff]
        %v587 = vld [vmem:[%s3 + $0x2e0] sm:$0xff]
        %v588 = vld [vmem:[%s3 + $0x2e8] sm:$0xff]
        %v589 = vld [vmem:[%s3 + $0x2f0] sm:$0xff]
        %v590 = vld [vmem:[%s3 + $0x2f8] sm:$0xff]
        %v591 = vld [vmem:[%s3 + $0x300] sm:$0xff]
        %v592 = vld [vmem:[%s3 + $0x308] sm:$0xff]
        %v593 = vld [vmem:[%s3 + $0x310] sm:$0xff]
        %v594 = vld [vmem:[%s3 + $0x318] sm:$0xff]
        %v595 = vld [vmem:[%s3 + $0x320] sm:$0xff]
        %v596 = vld [vmem:[%s3 + $0x328] sm:$0xff]
        %v597 = vld [vmem:[%s3 + $0x330] sm:$0xff]
        %v598 = vld [vmem:[%s3 + $0x338] sm:$0xff]
        %v599 = vld [vmem:[%s3 + $0x340] sm:$0xff]
        %v600 = vld [vmem:[%s3 + $0x348] sm:$0xff]
        %v601 = vld [vmem:[%s3 + $0x350] sm:$0xff]
        %v602 = vld [vmem:[%s3 + $0x358] sm:$0xff]
        %v603 = vld [vmem:[%s3 + $0x360] sm:$0xff]
        %v604 = vld [vmem:[%s3 + $0x368] sm:$0xff]
        %v605 = vld [vmem:[%s3 + $0x370] sm:$0xff]
        %v606 = vld [vmem:[%s3 + $0x378] sm:$0xff]
        %v607 = vld [vmem:[%s3 + $0x380] sm:$0xff]
        %v608 = vld [vmem:[%s3 + $0x388] sm:$0xff]
        %v609 = vld [vmem:[%s3 + $0x390] sm:$0xff]
        %v610 = vld [vmem:[%s3 + $0x398] sm:$0xff]
        %v611 = vld [vmem:[%s3 + $0x3a0] sm:$0xff]
        %v612 = vld [vmem:[%s3 + $0x3a8] sm:$0xff]
        %v613 = vld [vmem:[%s3 + $0x3b0] sm:$0xff]
        %v614 = vld [vmem:[%s3 + $0x3b8] sm:$0xff]
        %v615 = vld [vmem:[%s3 + $0x3c0] sm:$0xff]
        %v616 = vld [vmem:[%s3 + $0x3c8] sm:$0xff]
        %v617 = vld [vmem:[%s3 + $0x3d0] sm:$0xff]
        %v618 = vld [vmem:[%s3 + $0x3d8] sm:$0xff]
        %v619 = vld [vmem:[%s3 + $0x3e0] sm:$0xff]
        %v620 = vld [vmem:[%s3 + $0x3e8] sm:$0xff]
        %v621 = vld [vmem:[%s3 + $0x3f0] sm:$0xff]
        %v622 = vld [vmem:[%s3 + $0x3f8] sm:$0xff]
        %v623 = vld [vmem:[%s3 + $0x400] sm:$0xff]
        %v624 = vld [vmem:[%s3 + $0x408] sm:$0xff]
        %v625 = vld [vmem:[%s3 + $0x410] sm:$0xff]
        %v626 = vld [vmem:[%s3 + $0x418] sm:$0xff]
        %v627 = vld [vmem:[%s3 + $0x420] sm:$0xff]
        %v628 = vld [vmem:[%s3 + $0x428] sm:$0xff]
        %v629 = vld [vmem:[%s3 + $0x430] sm:$0xff]
        %v630 = vld [vmem:[%s3 + $0x438] sm:$0xff]
        %v631 = vld [vmem:[%s3 + $0x440] sm:$0xff]
        %v632 = vld [vmem:[%s3 + $0x448] sm:$0xff]
        %v633 = vld [vmem:[%s3 + $0x450] sm:$0xff]
        %v634 = vld [vmem:[%s3 + $0x458] sm:$0xff]
        %v635 = vld [vmem:[%s3 + $0x460] sm:$0xff]
        %v636 = vld [vmem:[%s3 + $0x468] sm:$0xff]
        %v637 = vld [vmem:[%s3 + $0x470] sm:$0xff]
        %v638 = vld [vmem:[%s3 + $0x478] sm:$0xff]
        %v639 = vld [vmem:[%s3 + $0x480] sm:$0xff]
        %v640 = vld [vmem:[%s3 + $0x488] sm:$0xff]
        %v641 = vld [vmem:[%s3 + $0x490] sm:$0xff]
        %v642 = vld [vmem:[%s3 + $0x498] sm:$0xff]
        %v643 = vld [vmem:[%s3 + $0x4a0] sm:$0xff]
        %v644 = vld [vmem:[%s3 + $0x4a8] sm:$0xff]
        %v645 = vld [vmem:[%s3 + $0x4b0] sm:$0xff]
        %v646 = vld [vmem:[%s3 + $0x4b8] sm:$0xff]
        %v647 = vld [vmem:[%s3 + $0x4c0] sm:$0xff]
        %v648 = vld [vmem:[%s3 + $0x4c8] sm:$0xff]
        %v649 = vld [vmem:[%s3 + $0x4d0] sm:$0xff]
        %v650 = vld [vmem:[%s3 + $0x4d8] sm:$0xff]
        %v651 = vld [vmem:[%s3 + $0x4e0] sm:$0xff]
        %v652 = vld [vmem:[%s3 + $0x4e8] sm:$0xff]
        %v653 = vld [vmem:[%s3 + $0x4f0] sm:$0xff]
        %v654 = vld [vmem:[%s3 + $0x4f8] sm:$0xff]
        %v655 = vld [vmem:[%s3 + $0x500] sm:$0xff]
        %v656 = vld [vmem:[%s3 + $0x508] sm:$0xff]
        %v657 = vld [vmem:[%s3 + $0x510] sm:$0xff]
        %v658 = vld [vmem:[%s3 + $0x518] sm:$0xff]
        %v659 = vld [vmem:[%s3 + $0x520] sm:$0xff]
        %v660 = vld [vmem:[%s3 + $0x528] sm:$0xff]
        %v661 = vld [vmem:[%s3 + $0x530] sm:$0xff]
        %v662 = vld [vmem:[%s3 + $0x538] sm:$0xff]
        %v663 = vld [vmem:[%s3 + $0x540] sm:$0xff]
        %v664 = vld [vmem:[%s3 + $0x548] sm:$0xff]
        %v665 = vld [vmem:[%s3 + $0x550] sm:$0xff]
        %v666 = vld [vmem:[%s3 + $0x558] sm:$0xff]
        %v667 = vld [vmem:[%s3 + $0x560] sm:$0xff]
        %v668 = vld [vmem:[%s3 + $0x568] sm:$0xff]
        %v669 = vld [vmem:[%s3 + $0x570] sm:$0xff]
        %v670 = vld [vmem:[%s3 + $0x578] sm:$0xff]
        %v671 = vld [vmem:[%s3 + $0x580] sm:$0xff]
        %v672 = vld [vmem:[%s3 + $0x588] sm:$0xff]
        %v673 = vld [vmem:[%s3 + $0x590] sm:$0xff]
        %v674 = vld [vmem:[%s3 + $0x598] sm:$0xff]
        %v675 = vld [vmem:[%s3 + $0x5a0] sm:$0xff]
        %v676 = vld [vmem:[%s3 + $0x5a8] sm:$0xff]
        %v677 = vld [vmem:[%s3 + $0x5b0] sm:$0xff]
        %v678 = vld [vmem:[%s3 + $0x5b8] sm:$0xff]
        %v679 = vld [vmem:[%s3 + $0x5c0] sm:$0xff]
        %v680 = vld [vmem:[%s3 + $0x5c8] sm:$0xff]
        %v681 = vld [vmem:[%s3 + $0x5d0] sm:$0xff]
        %v682 = vld [vmem:[%s3 + $0x5d8] sm:$0xff]
        %v683 = vld [vmem:[%s3 + $0x5e0] sm:$0xff]
        %v684 = vld [vmem:[%s3 + $0x5e8] sm:$0xff]
        %v685 = vld [vmem:[%s3 + $0x5f0] sm:$0xff]
        %v686 = vld [vmem:[%s3 + $0x5f8] sm:$0xff]
        %v687 = vld [vmem:[%s3 + $0x600] sm:$0xff]
        %v688 = vld [vmem:[%s3 + $0x608] sm:$0xff]
        %v689 = vld [vmem:[%s3 + $0x610] sm:$0xff]
        %v690 = vld [vmem:[%s3 + $0x618] sm:$0xff]
        %v691 = vld [vmem:[%s3 + $0x620] sm:$0xff]
        %v692 = vld [vmem:[%s3 + $0x628] sm:$0xff]
        %v693 = vld [vmem:[%s3 + $0x630] sm:$0xff]
        %v694 = vld [vmem:[%s3 + $0x638] sm:$0xff]
        %v695 = vld [vmem:[%s3 + $0x640] sm:$0xff]
        %v696 = vld [vmem:[%s3 + $0x648] sm:$0xff]
        %v697 = vld [vmem:[%s3 + $0x650] sm:$0xff]
        %v698 = vld [vmem:[%s3 + $0x658] sm:$0xff]
        %v699 = vld [vmem:[%s3 + $0x660] sm:$0xff]
        %v700 = vld [vmem:[%s3 + $0x668] sm:$0xff]
        %v701 = vld [vmem:[%s3 + $0x670] sm:$0xff]
        %v702 = vld [vmem:[%s3 + $0x678] sm:$0xff]
        %v703 = vld [vmem:[%s3 + $0x680] sm:$0xff]
        %v704 = vld [vmem:[%s3 + $0x688] sm:$0xff]
        %v705 = vld [vmem:[%s3 + $0x690] sm:$0xff]
        %v706 = vld [vmem:[%s3 + $0x698] sm:$0xff]
        %v707 = vld [vmem:[%s3 + $0x6a0] sm:$0xff]
        %v708 = vld [vmem:[%s3 + $0x6a8] sm:$0xff]
        %v709 = vld [vmem:[%s3 + $0x6b0] sm:$0xff]
        %v710 = vld [vmem:[%s3 + $0x6b8] sm:$0xff]
        %v711 = vld [vmem:[%s3 + $0x6c0] sm:$0xff]
        %v712 = vld [vmem:[%s3 + $0x6c8] sm:$0xff]
        %v713 = vld [vmem:[%s3 + $0x6d0] sm:$0xff]
        %v714 = vld [vmem:[%s3 + $0x6d8] sm:$0xff]
        %v715 = vld [vmem:[%s3 + $0x6e0] sm:$0xff]
        %v716 = vld [vmem:[%s3 + $0x6e8] sm:$0xff]
        %v717 = vld [vmem:[%s3 + $0x6f0] sm:$0xff]
        %v718 = vld [vmem:[%s3 + $0x6f8] sm:$0xff]
        %v719 = vld [vmem:[%s3 + $0x700] sm:$0xff]
        %v720 = vld [vmem:[%s3 + $0x708] sm:$0xff]
        %v721 = vld [vmem:[%s3 + $0x710] sm:$0xff]
        %v722 = vld [vmem:[%s3 + $0x718] sm:$0xff]
        %v723 = vld [vmem:[%s3 + $0x720] sm:$0xff]
        %v724 = vld [vmem:[%s3 + $0x728] sm:$0xff]
        %v725 = vld [vmem:[%s3 + $0x730] sm:$0xff]
        %v726 = vld [vmem:[%s3 + $0x738] sm:$0xff]
        %v727 = vld [vmem:[%s3 + $0x740] sm:$0xff]
        %v728 = vld [vmem:[%s3 + $0x748] sm:$0xff]
        %v729 = vld [vmem:[%s3 + $0x750] sm:$0xff]
        %v730 = vld [vmem:[%s3 + $0x758] sm:$0xff]
        %v731 = vld [vmem:[%s3 + $0x760] sm:$0xff]
        %v732 = vld [vmem:[%s3 + $0x768] sm:$0xff]
        %v733 = vld [vmem:[%s3 + $0x770] sm:$0xff]
        %v734 = vld [vmem:[%s3 + $0x778] sm:$0xff]
        %v735 = vld [vmem:[%s3 + $0x780] sm:$0xff]
        %v736 = vld [vmem:[%s3 + $0x788] sm:$0xff]
        %v737 = vld [vmem:[%s3 + $0x790] sm:$0xff]
        %v738 = vld [vmem:[%s3 + $0x798] sm:$0xff]
        %v739 = vld [vmem:[%s3 + $0x7a0] sm:$0xff]
        %v740 = vld [vmem:[%s3 + $0x7a8] sm:$0xff]
        %v741 = vld [vmem:[%s3 + $0x7b0] sm:$0xff]
        %v742 = vld [vmem:[%s3 + $0x7b8] sm:$0xff]
        %v743 = vld [vmem:[%s3 + $0x7c0] sm:$0xff]
        %v744 = vld [vmem:[%s3 + $0x7c8] sm:$0xff]
        %v745 = vld [vmem:[%s3 + $0x7d0] sm:$0xff]
        %v746 = vld [vmem:[%s3 + $0x7d8] sm:$0xff]
        %v747 = vld [vmem:[%s3 + $0x7e0] sm:$0xff]
        %v748 = vld [vmem:[%s3 + $0x7e8] sm:$0xff]
        %v749 = vld [vmem:[%s3 + $0x7f0] sm:$0xff]
        %v750 = vld [vmem:[%s3 + $0x7f8] sm:$0xff]
        %v751 = vld [vmem:[%s3 + $0x800] sm:$0x11]
        %v1009 = vunpack.c.l.b16 %v495
        %v1010 = vunpack.c.h.b16 %v495
        %v1011 = vunpack.c.l.b16 %v496
        %v1012 = vunpack.c.h.b16 %v496
        %v1013 = vunpack.c.l.b16 %v497
        %v1014 = vunpack.c.h.b16 %v497
        %v1015 = vunpack.c.l.b16 %v498
        %v1016 = vunpack.c.h.b16 %v498
        %v1017 = vunpack.c.l.b16 %v499
        %v1018 = vunpack.c.h.b16 %v499
        %v1019 = vunpack.c.l.b16 %v500
        %v1020 = vunpack.c.h.b16 %v500
        %v1021 = vunpack.c.l.b16 %v501
        %v1022 = vunpack.c.h.b16 %v501
        %v1023 = vunpack.c.l.b16 %v502
        %v1024 = vunpack.c.h.b16 %v502
        %v1025 = vunpack.c.l.b16 %v503
        %v1026 = vunpack.c.h.b16 %v503
        %v1027 = vunpack.c.l.b16 %v504
        %v1028 = vunpack.c.h.b16 %v504
        %v1029 = vunpack.c.l.b16 %v505
        %v1030 = vunpack.c.h.b16 %v505
        %v1031 = vunpack.c.l.b16 %v506
        %v1032 = vunpack.c.h.b16 %v506
        %v1033 = vunpack.c.l.b16 %v507
        %v1034 = vunpack.c.h.b16 %v507
        %v1035 = vunpack.c.l.b16 %v508
        %v1036 = vunpack.c.h.b16 %v508
        %v1037 = vunpack.c.l.b16 %v509
        %v1038 = vunpack.c.h.b16 %v509
        %v1039 = vunpack.c.l.b16 %v510
        %v1040 = vunpack.c.h.b16 %v510
        %v1041 = vunpack.c.l.b16 %v511
        %v1042 = vunpack.c.h.b16 %v511
        %v1043 = vunpack.c.l.b16 %v512
        %v1044 = vunpack.c.h.b16 %v512
        %v1045 = vunpack.c.l.b16 %v513
        %v1046 = vunpack.c.h.b16 %v513
        %v1047 = vunpack.c.l.b16 %v514
        %v1048 = vunpack.c.h.b16 %v514
        %v1049 = vunpack.c.l.b16 %v515
        %v1050 = vunpack.c.h.b16 %v515
        %v1051 = vunpack.c.l.b16 %v516
        %v1052 = vunpack.c.h.b16 %v516
        %v1053 = vunpack.c.l.b16 %v517
        %v1054 = vunpack.c.h.b16 %v517
        %v1055 = vunpack.c.l.b16 %v518
        %v1056 = vunpack.c.h.b16 %v518
        %v1057 = vunpack.c.l.b16 %v519
        %v1058 = vunpack.c.h.b16 %v519
        %v1059 = vunpack.c.l.b16 %v520
        %v1060 = vunpack.c.h.b16 %v520
        %v1061 = vunpack.c.l.b16 %v521
        %v1062 = vunpack.c.h.b16 %v521
        %v1063 = vunpack.c.l.b16 %v522
        %v1064 = vunpack.c.h.b16 %v522
        %v1065 = vunpack.c.l.b16 %v523
        %v1066 = vunpack.c.h.b16 %v523
        %v1067 = vunpack.c.l.b16 %v524
        %v1068 = vunpack.c.h.b16 %v524
        %v1069 = vunpack.c.l.b16 %v525
        %v1070 = vunpack.c.h.b16 %v525
        %v1071 = vunpack.c.l.b16 %v526
        %v1072 = vunpack.c.h.b16 %v526
        %v1073 = vunpack.c.l.b16 %v527
        %v1074 = vunpack.c.h.b16 %v527
        %v1075 = vunpack.c.l.b16 %v528
        %v1076 = vunpack.c.h.b16 %v528
        %v1077 = vunpack.c.l.b16 %v529
        %v1078 = vunpack.c.h.b16 %v529
        %v1079 = vunpack.c.l.b16 %v530
        %v1080 = vunpack.c.h.b16 %v530
        %v1081 = vunpack.c.l.b16 %v531
        %v1082 = vunpack.c.h.b16 %v531
        %v1083 = vunpack.c.l.b16 %v532
        %v1084 = vunpack.c.h.b16 %v532
        %v1085 = vunpack.c.l.b16 %v533
        %v1086 = vunpack.c.h.b16 %v533
        %v1087 = vunpack.c.l.b16 %v534
        %v1088 = vunpack.c.h.b16 %v534
        %v1089 = vunpack.c.l.b16 %v535
        %v1090 = vunpack.c.h.b16 %v535
        %v1091 = vunpack.c.l.b16 %v536
        %v1092 = vunpack.c.h.b16 %v536
        %v1093 = vunpack.c.l.b16 %v537
        %v1094 = vunpack.c.h.b16 %v537
        %v1095 = vunpack.c.l.b16 %v538
        %v1096 = vunpack.c.h.b16 %v538
        %v1097 = vunpack.c.l.b16 %v539
        %v1098 = vunpack.c.h.b16 %v539
        %v1099 = vunpack.c.l.b16 %v540
        %v1100 = vunpack.c.h.b16 %v540
        %v1101 = vunpack.c.l.b16 %v541
        %v1102 = vunpack.c.h.b16 %v541
        %v1103 = vunpack.c.l.b16 %v542
        %v1104 = vunpack.c.h.b16 %v542
        %v1105 = vunpack.c.l.b16 %v543
        %v1106 = vunpack.c.h.b16 %v543
        %v1107 = vunpack.c.l.b16 %v544
        %v1108 = vunpack.c.h.b16 %v544
        %v1109 = vunpack.c.l.b16 %v545
        %v1110 = vunpack.c.h.b16 %v545
        %v1111 = vunpack.c.l.b16 %v546
        %v1112 = vunpack.c.h.b16 %v546
        %v1113 = vunpack.c.l.b16 %v547
        %v1114 = vunpack.c.h.b16 %v547
        %v1115 = vunpack.c.l.b16 %v548
        %v1116 = vunpack.c.h.b16 %v548
        %v1117 = vunpack.c.l.b16 %v549
        %v1118 = vunpack.c.h.b16 %v549
        %v1119 = vunpack.c.l.b16 %v550
        %v1120 = vunpack.c.h.b16 %v550
        %v1121 = vunpack.c.l.b16 %v551
        %v1122 = vunpack.c.h.b16 %v551
        %v1123 = vunpack.c.l.b16 %v552
        %v1124 = vunpack.c.h.b16 %v552
        %v1125 = vunpack.c.l.b16 %v553
        %v1126 = vunpack.c.h.b16 %v553
        %v1127 = vunpack.c.l.b16 %v554
        %v1128 = vunpack.c.h.b16 %v554
        %v1129 = vunpack.c.l.b16 %v555
        %v1130 = vunpack.c.h.b16 %v555
        %v1131 = vunpack.c.l.b16 %v556
        %v1132 = vunpack.c.h.b16 %v556
        %v1133 = vunpack.c.l.b16 %v557
        %v1134 = vunpack.c.h.b16 %v557
        %v1135 = vunpack.c.l.b16 %v558
        %v1136 = vunpack.c.h.b16 %v558
        %v1137 = vunpack.c.l.b16 %v559
        %v1138 = vunpack.c.h.b16 %v559
        %v1139 = vunpack.c.l.b16 %v560
        %v1140 = vunpack.c.h.b16 %v560
        %v1141 = vunpack.c.l.b16 %v561
        %v1142 = vunpack.c.h.b16 %v561
        %v1143 = vunpack.c.l.b16 %v562
        %v1144 = vunpack.c.h.b16 %v562
        %v1145 = vunpack.c.l.b16 %v563
        %v1146 = vunpack.c.h.b16 %v563
        %v1147 = vunpack.c.l.b16 %v564
        %v1148 = vunpack.c.h.b16 %v564
        %v1149 = vunpack.c.l.b16 %v565
        %v1150 = vunpack.c.h.b16 %v565
        %v1151 = vunpack.c.l.b16 %v566
        %v1152 = vunpack.c.h.b16 %v566
        %v1153 = vunpack.c.l.b16 %v567
        %v1154 = vunpack.c.h.b16 %v567
        %v1155 = vunpack.c.l.b16 %v568
        %v1156 = vunpack.c.h.b16 %v568
        %v1157 = vunpack.c.l.b16 %v569
        %v1158 = vunpack.c.h.b16 %v569
        %v1159 = vunpack.c.l.b16 %v570
        %v1160 = vunpack.c.h.b16 %v570
        %v1161 = vunpack.c.l.b16 %v571
        %v1162 = vunpack.c.h.b16 %v571
        %v1163 = vunpack.c.l.b16 %v572
        %v1164 = vunpack.c.h.b16 %v572
        %v1165 = vunpack.c.l.b16 %v573
        %v1166 = vunpack.c.h.b16 %v573
        %v1167 = vunpack.c.l.b16 %v574
        %v1168 = vunpack.c.h.b16 %v574
        %v1169 = vunpack.c.l.b16 %v575
        %v1170 = vunpack.c.h.b16 %v575
        %v1171 = vunpack.c.l.b16 %v576
        %v1172 = vunpack.c.h.b16 %v576
        %v1173 = vunpack.c.l.b16 %v577
        %v1174 = vunpack.c.h.b16 %v577
        %v1175 = vunpack.c.l.b16 %v578
        %v1176 = vunpack.c.h.b16 %v578
        %v1177 = vunpack.c.l.b16 %v579
        %v1178 = vunpack.c.h.b16 %v579
        %v1179 = vunpack.c.l.b16 %v580
        %v1180 = vunpack.c.h.b16 %v580
        %v1181 = vunpack.c.l.b16 %v581
        %v1182 = vunpack.c.h.b16 %v581
        %v1183 = vunpack.c.l.b16 %v582
        %v1184 = vunpack.c.h.b16 %v582
        %v1185 = vunpack.c.l.b16 %v583
        %v1186 = vunpack.c.h.b16 %v583
        %v1187 = vunpack.c.l.b16 %v584
        %v1188 = vunpack.c.h.b16 %v584
        %v1189 = vunpack.c.l.b16 %v585
        %v1190 = vunpack.c.h.b16 %v585
        %v1191 = vunpack.c.l.b16 %v586
        %v1192 = vunpack.c.h.b16 %v586
        %v1193 = vunpack.c.l.b16 %v587
        %v1194 = vunpack.c.h.b16 %v587
        %v1195 = vunpack.c.l.b16 %v588
        %v1196 = vunpack.c.h.b16 %v588
        %v1197 = vunpack.c.l.b16 %v589
        %v1198 = vunpack.c.h.b16 %v589
        %v1199 = vunpack.c.l.b16 %v590
        %v1200 = vunpack.c.h.b16 %v590
        %v1201 = vunpack.c.l.b16 %v591
        %v1202 = vunpack.c.h.b16 %v591
        %v1203 = vunpack.c.l.b16 %v592
        %v1204 = vunpack.c.h.b16 %v592
        %v1205 = vunpack.c.l.b16 %v593
        %v1206 = vunpack.c.h.b16 %v593
        %v1207 = vunpack.c.l.b16 %v594
        %v1208 = vunpack.c.h.b16 %v594
        %v1209 = vunpack.c.l.b16 %v595
        %v1210 = vunpack.c.h.b16 %v595
        %v1211 = vunpack.c.l.b16 %v596
        %v1212 = vunpack.c.h.b16 %v596
        %v1213 = vunpack.c.l.b16 %v597
        %v1214 = vunpack.c.h.b16 %v597
        %v1215 = vunpack.c.l.b16 %v598
        %v1216 = vunpack.c.h.b16 %v598
        %v1217 = vunpack.c.l.b16 %v599
        %v1218 = vunpack.c.h.b16 %v599
        %v1219 = vunpack.c.l.b16 %v600
        %v1220 = vunpack.c.h.b16 %v600
        %v1221 = vunpack.c.l.b16 %v601
        %v1222 = vunpack.c.h.b16 %v601
        %v1223 = vunpack.c.l.b16 %v602
        %v1224 = vunpack.c.h.b16 %v602
        %v1225 = vunpack.c.l.b16 %v603
        %v1226 = vunpack.c.h.b16 %v603
        %v1227 = vunpack.c.l.b16 %v604
        %v1228 = vunpack.c.h.b16 %v604
        %v1229 = vunpack.c.l.b16 %v605
        %v1230 = vunpack.c.h.b16 %v605
        %v1231 = vunpack.c.l.b16 %v606
        %v1232 = vunpack.c.h.b16 %v606
        %v1233 = vunpack.c.l.b16 %v607
        %v1234 = vunpack.c.h.b16 %v607
        %v1235 = vunpack.c.l.b16 %v608
        %v1236 = vunpack.c.h.b16 %v608
        %v1237 = vunpack.c.l.b16 %v609
        %v1238 = vunpack.c.h.b16 %v609
        %v1239 = vunpack.c.l.b16 %v610
        %v1240 = vunpack.c.h.b16 %v610
        %v1241 = vunpack.c.l.b16 %v611
        %v1242 = vunpack.c.h.b16 %v611
        %v1243 = vunpack.c.l.b16 %v612
        %v1244 = vunpack.c.h.b16 %v612
        %v1245 = vunpack.c.l.b16 %v613
        %v1246 = vunpack.c.h.b16 %v613
        %v1247 = vunpack.c.l.b16 %v614
        %v1248 = vunpack.c.h.b16 %v614
        %v1249 = vunpack.c.l.b16 %v615
        %v1250 = vunpack.c.h.b16 %v615
        %v1251 = vunpack.c.l.b16 %v616
        %v1252 = vunpack.c.h.b16 %v616
        %v1253 = vunpack.c.l.b16 %v617
        %v1254 = vunpack.c.h.b16 %v617
        %v1255 = vunpack.c.l.b16 %v618
        %v1256 = vunpack.c.h.b16 %v618
        %v1257 = vunpack.c.l.b16 %v619
        %v1258 = vunpack.c.h.b16 %v619
        %v1259 = vunpack.c.l.b16 %v620
        %v1260 = vunpack.c.h.b16 %v620
        %v1261 = vunpack.c.l.b16 %v621
        %v1262 = vunpack.c.h.b16 %v621
        %v1263 = vunpack.c.l.b16 %v622
        %v1264 = vunpack.c.h.b16 %v622
        %v1265 = vunpack.c.l.b16 %v623
        %v1266 = vunpack.c.h.b16 %v623
        %v1267 = vunpack.c.l.b16 %v624
        %v1268 = vunpack.c.h.b16 %v624
        %v1269 = vunpack.c.l.b16 %v625
        %v1270 = vunpack.c.h.b16 %v625
        %v1271 = vunpack.c.l.b16 %v626
        %v1272 = vunpack.c.h.b16 %v626
        %v1273 = vunpack.c.l.b16 %v627
        %v1274 = vunpack.c.h.b16 %v627
        %v1275 = vunpack.c.l.b16 %v628
        %v1276 = vunpack.c.h.b16 %v628
        %v1277 = vunpack.c.l.b16 %v629
        %v1278 = vunpack.c.h.b16 %v629
        %v1279 = vunpack.c.l.b16 %v630
        %v1280 = vunpack.c.h.b16 %v630
        %v1281 = vunpack.c.l.b16 %v631
        %v1282 = vunpack.c.h.b16 %v631
        %v1283 = vunpack.c.l.b16 %v632
        %v1284 = vunpack.c.h.b16 %v632
        %v1285 = vunpack.c.l.b16 %v633
        %v1286 = vunpack.c.h.b16 %v633
        %v1287 = vunpack.c.l.b16 %v634
        %v1288 = vunpack.c.h.b16 %v634
        %v1289 = vunpack.c.l.b16 %v635
        %v1290 = vunpack.c.h.b16 %v635
        %v1291 = vunpack.c.l.b16 %v636
        %v1292 = vunpack.c.h.b16 %v636
        %v1293 = vunpack.c.l.b16 %v637
        %v1294 = vunpack.c.h.b16 %v637
        %v1295 = vunpack.c.l.b16 %v638
        %v1296 = vunpack.c.h.b16 %v638
        %v1297 = vunpack.c.l.b16 %v639
        %v1298 = vunpack.c.h.b16 %v639
        %v1299 = vunpack.c.l.b16 %v640
        %v1300 = vunpack.c.h.b16 %v640
        %v1301 = vunpack.c.l.b16 %v641
        %v1302 = vunpack.c.h.b16 %v641
        %v1303 = vunpack.c.l.b16 %v642
        %v1304 = vunpack.c.h.b16 %v642
        %v1305 = vunpack.c.l.b16 %v643
        %v1306 = vunpack.c.h.b16 %v643
        %v1307 = vunpack.c.l.b16 %v644
        %v1308 = vunpack.c.h.b16 %v644
        %v1309 = vunpack.c.l.b16 %v645
        %v1310 = vunpack.c.h.b16 %v645
        %v1311 = vunpack.c.l.b16 %v646
        %v1312 = vunpack.c.h.b16 %v646
        %v1313 = vunpack.c.l.b16 %v647
        %v1314 = vunpack.c.h.b16 %v647
        %v1315 = vunpack.c.l.b16 %v648
        %v1316 = vunpack.c.h.b16 %v648
        %v1317 = vunpack.c.l.b16 %v649
        %v1318 = vunpack.c.h.b16 %v649
        %v1319 = vunpack.c.l.b16 %v650
        %v1320 = vunpack.c.h.b16 %v650
        %v1321 = vunpack.c.l.b16 %v651
        %v1322 = vunpack.c.h.b16 %v651
        %v1323 = vunpack.c.l.b16 %v652
        %v1324 = vunpack.c.h.b16 %v652
        %v1325 = vunpack.c.l.b16 %v653
        %v1326 = vunpack.c.h.b16 %v653
        %v1327 = vunpack.c.l.b16 %v654
        %v1328 = vunpack.c.h.b16 %v654
        %v1329 = vunpack.c.l.b16 %v655
        %v1330 = vunpack.c.h.b16 %v655
        %v1331 = vunpack.c.l.b16 %v656
        %v1332 = vunpack.c.h.b16 %v656
        %v1333 = vunpack.c.l.b16 %v657
        %v1334 = vunpack.c.h.b16 %v657
        %v1335 = vunpack.c.l.b16 %v658
        %v1336 = vunpack.c.h.b16 %v658
        %v1337 = vunpack.c.l.b16 %v659
        %v1338 = vunpack.c.h.b16 %v659
        %v1339 = vunpack.c.l.b16 %v660
        %v1340 = vunpack.c.h.b16 %v660
        %v1341 = vunpack.c.l.b16 %v661
        %v1342 = vunpack.c.h.b16 %v661
        %v1343 = vunpack.c.l.b16 %v662
        %v1344 = vunpack.c.h.b16 %v662
        %v1345 = vunpack.c.l.b16 %v663
        %v1346 = vunpack.c.h.b16 %v663
        %v1347 = vunpack.c.l.b16 %v664
        %v1348 = vunpack.c.h.b16 %v664
        %v1349 = vunpack.c.l.b16 %v665
        %v1350 = vunpack.c.h.b16 %v665
        %v1351 = vunpack.c.l.b16 %v666
        %v1352 = vunpack.c.h.b16 %v666
        %v1353 = vunpack.c.l.b16 %v667
        %v1354 = vunpack.c.h.b16 %v667
        %v1355 = vunpack.c.l.b16 %v668
        %v1356 = vunpack.c.h.b16 %v668
        %v1357 = vunpack.c.l.b16 %v669
        %v1358 = vunpack.c.h.b16 %v669
        %v1359 = vunpack.c.l.b16 %v670
        %v1360 = vunpack.c.h.b16 %v670
        %v1361 = vunpack.c.l.b16 %v671
        %v1362 = vunpack.c.h.b16 %v671
        %v1363 = vunpack.c.l.b16 %v672
        %v1364 = vunpack.c.h.b16 %v672
        %v1365 = vunpack.c.l.b16 %v673
        %v1366 = vunpack.c.h.b16 %v673
        %v1367 = vunpack.c.l.b16 %v674
        %v1368 = vunpack.c.h.b16 %v674
        %v1369 = vunpack.c.l.b16 %v675
        %v1370 = vunpack.c.h.b16 %v675
        %v1371 = vunpack.c.l.b16 %v676
        %v1372 = vunpack.c.h.b16 %v676
        %v1373 = vunpack.c.l.b16 %v677
        %v1374 = vunpack.c.h.b16 %v677
        %v1375 = vunpack.c.l.b16 %v678
        %v1376 = vunpack.c.h.b16 %v678
        %v1377 = vunpack.c.l.b16 %v679
        %v1378 = vunpack.c.h.b16 %v679
        %v1379 = vunpack.c.l.b16 %v680
        %v1380 = vunpack.c.h.b16 %v680
        %v1381 = vunpack.c.l.b16 %v681
        %v1382 = vunpack.c.h.b16 %v681
        %v1383 = vunpack.c.l.b16 %v682
        %v1384 = vunpack.c.h.b16 %v682
        %v1385 = vunpack.c.l.b16 %v683
        %v1386 = vunpack.c.h.b16 %v683
        %v1387 = vunpack.c.l.b16 %v684
        %v1388 = vunpack.c.h.b16 %v684
        %v1389 = vunpack.c.l.b16 %v685
        %v1390 = vunpack.c.h.b16 %v685
        %v1391 = vunpack.c.l.b16 %v686
        %v1392 = vunpack.c.h.b16 %v686
        %v1393 = vunpack.c.l.b16 %v687
        %v1394 = vunpack.c.h.b16 %v687
        %v1395 = vunpack.c.l.b16 %v688
        %v1396 = vunpack.c.h.b16 %v688
        %v1397 = vunpack.c.l.b16 %v689
        %v1398 = vunpack.c.h.b16 %v689
        %v1399 = vunpack.c.l.b16 %v690
        %v1400 = vunpack.c.h.b16 %v690
        %v1401 = vunpack.c.l.b16 %v691
        %v1402 = vunpack.c.h.b16 %v691
        %v1403 = vunpack.c.l.b16 %v692
        %v1404 = vunpack.c.h.b16 %v692
        %v1405 = vunpack.c.l.b16 %v693
        %v1406 = vunpack.c.h.b16 %v693
        %v1407 = vunpack.c.l.b16 %v694
        %v1408 = vunpack.c.h.b16 %v694
        %v1409 = vunpack.c.l.b16 %v695
        %v1410 = vunpack.c.h.b16 %v695
        %v1411 = vunpack.c.l.b16 %v696
        %v1412 = vunpack.c.h.b16 %v696
        %v1413 = vunpack.c.l.b16 %v697
        %v1414 = vunpack.c.h.b16 %v697
        %v1415 = vunpack.c.l.b16 %v698
        %v1416 = vunpack.c.h.b16 %v698
        %v1417 = vunpack.c.l.b16 %v699
        %v1418 = vunpack.c.h.b16 %v699
        %v1419 = vunpack.c.l.b16 %v700
        %v1420 = vunpack.c.h.b16 %v700
        %v1421 = vunpack.c.l.b16 %v701
        %v1422 = vunpack.c.h.b16 %v701
        %v1423 = vunpack.c.l.b16 %v702
        %v1424 = vunpack.c.h.b16 %v702
        %v1425 = vunpack.c.l.b16 %v703
        %v1426 = vunpack.c.h.b16 %v703
        %v1427 = vunpack.c.l.b16 %v704
        %v1428 = vunpack.c.h.b16 %v704
        %v1429 = vunpack.c.l.b16 %v705
        %v1430 = vunpack.c.h.b16 %v705
        %v1431 = vunpack.c.l.b16 %v706
        %v1432 = vunpack.c.h.b16 %v706
        %v1433 = vunpack.c.l.b16 %v707
        %v1434 = vunpack.c.h.b16 %v707
        %v1435 = vunpack.c.l.b16 %v708
        %v1436 = vunpack.c.h.b16 %v708
        %v1437 = vunpack.c.l.b16 %v709
        %v1438 = vunpack.c.h.b16 %v709
        %v1439 = vunpack.c.l.b16 %v710
        %v1440 = vunpack.c.h.b16 %v710
        %v1441 = vunpack.c.l.b16 %v711
        %v1442 = vunpack.c.h.b16 %v711
        %v1443 = vunpack.c.l.b16 %v712
        %v1444 = vunpack.c.h.b16 %v712
        %v1445 = vunpack.c.l.b16 %v713
        %v1446 = vunpack.c.h.b16 %v713
        %v1447 = vunpack.c.l.b16 %v714
        %v1448 = vunpack.c.h.b16 %v714
        %v1449 = vunpack.c.l.b16 %v715
        %v1450 = vunpack.c.h.b16 %v715
        %v1451 = vunpack.c.l.b16 %v716
        %v1452 = vunpack.c.h.b16 %v716
        %v1453 = vunpack.c.l.b16 %v717
        %v1454 = vunpack.c.h.b16 %v717
        %v1455 = vunpack.c.l.b16 %v718
        %v1456 = vunpack.c.h.b16 %v718
        %v1457 = vunpack.c.l.b16 %v719
        %v1458 = vunpack.c.h.b16 %v719
        %v1459 = vunpack.c.l.b16 %v720
        %v1460 = vunpack.c.h.b16 %v720
        %v1461 = vunpack.c.l.b16 %v721
        %v1462 = vunpack.c.h.b16 %v721
        %v1463 = vunpack.c.l.b16 %v722
        %v1464 = vunpack.c.h.b16 %v722
        %v1465 = vunpack.c.l.b16 %v723
        %v1466 = vunpack.c.h.b16 %v723
        %v1467 = vunpack.c.l.b16 %v724
        %v1468 = vunpack.c.h.b16 %v724
        %v1469 = vunpack.c.l.b16 %v725
        %v1470 = vunpack.c.h.b16 %v725
        %v1471 = vunpack.c.l.b16 %v726
        %v1472 = vunpack.c.h.b16 %v726
        %v1473 = vunpack.c.l.b16 %v727
        %v1474 = vunpack.c.h.b16 %v727
        %v1475 = vunpack.c.l.b16 %v728
        %v1476 = vunpack.c.h.b16 %v728
        %v1477 = vunpack.c.l.b16 %v729
        %v1478 = vunpack.c.h.b16 %v729
        %v1479 = vunpack.c.l.b16 %v730
        %v1480 = vunpack.c.h.b16 %v730
        %v1481 = vunpack.c.l.b16 %v731
        %v1482 = vunpack.c.h.b16 %v731
        %v1483 = vunpack.c.l.b16 %v732
        %v1484 = vunpack.c.h.b16 %v732
        %v1485 = vunpack.c.l.b16 %v733
        %v1486 = vunpack.c.h.b16 %v733
        %v1487 = vunpack.c.l.b16 %v734
        %v1488 = vunpack.c.h.b16 %v734
        %v1489 = vunpack.c.l.b16 %v735
        %v1490 = vunpack.c.h.b16 %v735
        %v1491 = vunpack.c.l.b16 %v736
        %v1492 = vunpack.c.h.b16 %v736
        %v1493 = vunpack.c.l.b16 %v737
        %v1494 = vunpack.c.h.b16 %v737
        %v1495 = vunpack.c.l.b16 %v738
        %v1496 = vunpack.c.h.b16 %v738
        %v1497 = vunpack.c.l.b16 %v739
        %v1498 = vunpack.c.h.b16 %v739
        %v1499 = vunpack.c.l.b16 %v740
        %v1500 = vunpack.c.h.b16 %v740
        %v1501 = vunpack.c.l.b16 %v741
        %v1502 = vunpack.c.h.b16 %v741
        %v1503 = vunpack.c.l.b16 %v742
        %v1504 = vunpack.c.h.b16 %v742
        %v1505 = vunpack.c.l.b16 %v743
        %v1506 = vunpack.c.h.b16 %v743
        %v1507 = vunpack.c.l.b16 %v744
        %v1508 = vunpack.c.h.b16 %v744
        %v1509 = vunpack.c.l.b16 %v745
        %v1510 = vunpack.c.h.b16 %v745
        %v1511 = vunpack.c.l.b16 %v746
        %v1512 = vunpack.c.h.b16 %v746
        %v1513 = vunpack.c.l.b16 %v747
        %v1514 = vunpack.c.h.b16 %v747
        %v1515 = vunpack.c.l.b16 %v748
        %v1516 = vunpack.c.h.b16 %v748
        %v1517 = vunpack.c.l.b16 %v749
        %v1518 = vunpack.c.h.b16 %v749
        %v1519 = vunpack.c.l.b16 %v750
        %v1520 = vunpack.c.h.b16 %v750
        %v1521 = vunpack.c.l.b16 %v751
        %v1522 = vunpack.c.h.b16 %v751
        %v1523 = vpack.c.b16 %v1011, %v1009
        %v1524 = vpack.c.b16 %v1012, %v1010
        %v1525 = vpack.c.b16 %v1015, %v1013
        %v1526 = vpack.c.b16 %v1016, %v1014
        %v1527 = vpack.c.b16 %v1019, %v1017
        %v1528 = vpack.c.b16 %v1020, %v1018
        %v1529 = vpack.c.b16 %v1023, %v1021
        %v1530 = vpack.c.b16 %v1024, %v1022
        %v1531 = vpack.c.b16 %v1027, %v1025
        %v1532 = vpack.c.b16 %v1028, %v1026
        %v1533 = vpack.c.b16 %v1031, %v1029
        %v1534 = vpack.c.b16 %v1032, %v1030
        %v1535 = vpack.c.b16 %v1035, %v1033
        %v1536 = vpack.c.b16 %v1036, %v1034
        %v1537 = vpack.c.b16 %v1039, %v1037
        %v1538 = vpack.c.b16 %v1040, %v1038
        %v1539 = vpack.c.b16 %v1043, %v1041
        %v1540 = vpack.c.b16 %v1044, %v1042
        %v1541 = vpack.c.b16 %v1047, %v1045
        %v1542 = vpack.c.b16 %v1048, %v1046
        %v1543 = vpack.c.b16 %v1051, %v1049
        %v1544 = vpack.c.b16 %v1052, %v1050
        %v1545 = vpack.c.b16 %v1055, %v1053
        %v1546 = vpack.c.b16 %v1056, %v1054
        %v1547 = vpack.c.b16 %v1059, %v1057
        %v1548 = vpack.c.b16 %v1060, %v1058
        %v1549 = vpack.c.b16 %v1063, %v1061
        %v1550 = vpack.c.b16 %v1064, %v1062
        %v1551 = vpack.c.b16 %v1067, %v1065
        %v1552 = vpack.c.b16 %v1068, %v1066
        %v1553 = vpack.c.b16 %v1071, %v1069
        %v1554 = vpack.c.b16 %v1072, %v1070
        %v1555 = vpack.c.b16 %v1075, %v1073
        %v1556 = vpack.c.b16 %v1076, %v1074
        %v1557 = vpack.c.b16 %v1079, %v1077
        %v1558 = vpack.c.b16 %v1080, %v1078
        %v1559 = vpack.c.b16 %v1083, %v1081
        %v1560 = vpack.c.b16 %v1084, %v1082
        %v1561 = vpack.c.b16 %v1087, %v1085
        %v1562 = vpack.c.b16 %v1088, %v1086
        %v1563 = vpack.c.b16 %v1091, %v1089
        %v1564 = vpack.c.b16 %v1092, %v1090
        %v1565 = vpack.c.b16 %v1095, %v1093
        %v1566 = vpack.c.b16 %v1096, %v1094
        %v1567 = vpack.c.b16 %v1099, %v1097
        %v1568 = vpack.c.b16 %v1100, %v1098
        %v1569 = vpack.c.b16 %v1103, %v1101
        %v1570 = vpack.c.b16 %v1104, %v1102
        %v1571 = vpack.c.b16 %v1107, %v1105
        %v1572 = vpack.c.b16 %v1108, %v1106
        %v1573 = vpack.c.b16 %v1111, %v1109
        %v1574 = vpack.c.b16 %v1112, %v1110
        %v1575 = vpack.c.b16 %v1115, %v1113
        %v1576 = vpack.c.b16 %v1116, %v1114
        %v1577 = vpack.c.b16 %v1119, %v1117
        %v1578 = vpack.c.b16 %v1120, %v1118
        %v1579 = vpack.c.b16 %v1123, %v1121
        %v1580 = vpack.c.b16 %v1124, %v1122
        %v1581 = vpack.c.b16 %v1127, %v1125
        %v1582 = vpack.c.b16 %v1128, %v1126
        %v1583 = vpack.c.b16 %v1131, %v1129
        %v1584 = vpack.c.b16 %v1132, %v1130
        %v1585 = vpack.c.b16 %v1135, %v1133
        %v1586 = vpack.c.b16 %v1136, %v1134
        %v1587 = vpack.c.b16 %v1139, %v1137
        %v1588 = vpack.c.b16 %v1140, %v1138
        %v1589 = vpack.c.b16 %v1143, %v1141
        %v1590 = vpack.c.b16 %v1144, %v1142
        %v1591 = vpack.c.b16 %v1147, %v1145
        %v1592 = vpack.c.b16 %v1148, %v1146
        %v1593 = vpack.c.b16 %v1151, %v1149
        %v1594 = vpack.c.b16 %v1152, %v1150
        %v1595 = vpack.c.b16 %v1155, %v1153
        %v1596 = vpack.c.b16 %v1156, %v1154
        %v1597 = vpack.c.b16 %v1159, %v1157
        %v1598 = vpack.c.b16 %v1160, %v1158
        %v1599 = vpack.c.b16 %v1163, %v1161
        %v1600 = vpack.c.b16 %v1164, %v1162
        %v1601 = vpack.c.b16 %v1167, %v1165
        %v1602 = vpack.c.b16 %v1168, %v1166
        %v1603 = vpack.c.b16 %v1171, %v1169
        %v1604 = vpack.c.b16 %v1172, %v1170
        %v1605 = vpack.c.b16 %v1175, %v1173
        %v1606 = vpack.c.b16 %v1176, %v1174
        %v1607 = vpack.c.b16 %v1179, %v1177
        %v1608 = vpack.c.b16 %v1180, %v1178
        %v1609 = vpack.c.b16 %v1183, %v1181
        %v1610 = vpack.c.b16 %v1184, %v1182
        %v1611 = vpack.c.b16 %v1187, %v1185
        %v1612 = vpack.c.b16 %v1188, %v1186
        %v1613 = vpack.c.b16 %v1191, %v1189
        %v1614 = vpack.c.b16 %v1192, %v1190
        %v1615 = vpack.c.b16 %v1195, %v1193
        %v1616 = vpack.c.b16 %v1196, %v1194
        %v1617 = vpack.c.b16 %v1199, %v1197
        %v1618 = vpack.c.b16 %v1200, %v1198
        %v1619 = vpack.c.b16 %v1203, %v1201
        %v1620 = vpack.c.b16 %v1204, %v1202
        %v1621 = vpack.c.b16 %v1207, %v1205
        %v1622 = vpack.c.b16 %v1208, %v1206
        %v1623 = vpack.c.b16 %v1211, %v1209
        %v1624 = vpack.c.b16 %v1212, %v1210
        %v1625 = vpack.c.b16 %v1215, %v1213
        %v1626 = vpack.c.b16 %v1216, %v1214
        %v1627 = vpack.c.b16 %v1219, %v1217
        %v1628 = vpack.c.b16 %v1220, %v1218
        %v1629 = vpack.c.b16 %v1223, %v1221
        %v1630 = vpack.c.b16 %v1224, %v1222
        %v1631 = vpack.c.b16 %v1227, %v1225
        %v1632 = vpack.c.b16 %v1228, %v1226
        %v1633 = vpack.c.b16 %v1231, %v1229
        %v1634 = vpack.c.b16 %v1232, %v1230
        %v1635 = vpack.c.b16 %v1235, %v1233
        %v1636 = vpack.c.b16 %v1236, %v1234
        %v1637 = vpack.c.b16 %v1239, %v1237
        %v1638 = vpack.c.b16 %v1240, %v1238
        %v1639 = vpack.c.b16 %v1243, %v1241
        %v1640 = vpack.c.b16 %v1244, %v1242
        %v1641 = vpack.c.b16 %v1247, %v1245
        %v1642 = vpack.c.b16 %v1248, %v1246
        %v1643 = vpack.c.b16 %v1251, %v1249
        %v1644 = vpack.c.b16 %v1252, %v1250
        %v1645 = vpack.c.b16 %v1255, %v1253
        %v1646 = vpack.c.b16 %v1256, %v1254
        %v1647 = vpack.c.b16 %v1259, %v1257
        %v1648 = vpack.c.b16 %v1260, %v1258
        %v1649 = vpack.c.b16 %v1263, %v1261
        %v1650 = vpack.c.b16 %v1264, %v1262
        %v1651 = vpack.c.b16 %v1267, %v1265
        %v1652 = vpack.c.b16 %v1268, %v1266
        %v1653 = vpack.c.b16 %v1271, %v1269
        %v1654 = vpack.c.b16 %v1272, %v1270
        %v1655 = vpack.c.b16 %v1275, %v1273
        %v1656 = vpack.c.b16 %v1276, %v1274
        %v1657 = vpack.c.b16 %v1279, %v1277
        %v1658 = vpack.c.b16 %v1280, %v1278
        %v1659 = vpack.c.b16 %v1283, %v1281
        %v1660 = vpack.c.b16 %v1284, %v1282
        %v1661 = vpack.c.b16 %v1287, %v1285
        %v1662 = vpack.c.b16 %v1288, %v1286
        %v1663 = vpack.c.b16 %v1291, %v1289
        %v1664 = vpack.c.b16 %v1292, %v1290
        %v1665 = vpack.c.b16 %v1295, %v1293
        %v1666 = vpack.c.b16 %v1296, %v1294
        %v1667 = vpack.c.b16 %v1299, %v1297
        %v1668 = vpack.c.b16 %v1300, %v1298
        %v1669 = vpack.c.b16 %v1303, %v1301
        %v1670 = vpack.c.b16 %v1304, %v1302
        %v1671 = vpack.c.b16 %v1307, %v1305
        %v1672 = vpack.c.b16 %v1308, %v1306
        %v1673 = vpack.c.b16 %v1311, %v1309
        %v1674 = vpack.c.b16 %v1312, %v1310
        %v1675 = vpack.c.b16 %v1315, %v1313
        %v1676 = vpack.c.b16 %v1316, %v1314
        %v1677 = vpack.c.b16 %v1319, %v1317
        %v1678 = vpack.c.b16 %v1320, %v1318
        %v1679 = vpack.c.b16 %v1323, %v1321
        %v1680 = vpack.c.b16 %v1324, %v1322
        %v1681 = vpack.c.b16 %v1327, %v1325
        %v1682 = vpack.c.b16 %v1328, %v1326
        %v1683 = vpack.c.b16 %v1331, %v1329
        %v1684 = vpack.c.b16 %v1332, %v1330
        %v1685 = vpack.c.b16 %v1335, %v1333
        %v1686 = vpack.c.b16 %v1336, %v1334
        %v1687 = vpack.c.b16 %v1339, %v1337
        %v1688 = vpack.c.b16 %v1340, %v1338
        %v1689 = vpack.c.b16 %v1343, %v1341
        %v1690 = vpack.c.b16 %v1344, %v1342
        %v1691 = vpack.c.b16 %v1347, %v1345
        %v1692 = vpack.c.b16 %v1348, %v1346
        %v1693 = vpack.c.b16 %v1351, %v1349
        %v1694 = vpack.c.b16 %v1352, %v1350
        %v1695 = vpack.c.b16 %v1355, %v1353
        %v1696 = vpack.c.b16 %v1356, %v1354
        %v1697 = vpack.c.b16 %v1359, %v1357
        %v1698 = vpack.c.b16 %v1360, %v1358
        %v1699 = vpack.c.b16 %v1363, %v1361
        %v1700 = vpack.c.b16 %v1364, %v1362
        %v1701 = vpack.c.b16 %v1367, %v1365
        %v1702 = vpack.c.b16 %v1368, %v1366
        %v1703 = vpack.c.b16 %v1371, %v1369
        %v1704 = vpack.c.b16 %v1372, %v1370
        %v1705 = vpack.c.b16 %v1375, %v1373
        %v1706 = vpack.c.b16 %v1376, %v1374
        %v1707 = vpack.c.b16 %v1379, %v1377
        %v1708 = vpack.c.b16 %v1380, %v1378
        %v1709 = vpack.c.b16 %v1383, %v1381
        %v1710 = vpack.c.b16 %v1384, %v1382
        %v1711 = vpack.c.b16 %v1387, %v1385
        %v1712 = vpack.c.b16 %v1388, %v1386
        %v1713 = vpack.c.b16 %v1391, %v1389
        %v1714 = vpack.c.b16 %v1392, %v1390
        %v1715 = vpack.c.b16 %v1395, %v1393
        %v1716 = vpack.c.b16 %v1396, %v1394
        %v1717 = vpack.c.b16 %v1399, %v1397
        %v1718 = vpack.c.b16 %v1400, %v1398
        %v1719 = vpack.c.b16 %v1403, %v1401
        %v1720 = vpack.c.b16 %v1404, %v1402
        %v1721 = vpack.c.b16 %v1407, %v1405
        %v1722 = vpack.c.b16 %v1408, %v1406
        %v1723 = vpack.c.b16 %v1411, %v1409
        %v1724 = vpack.c.b16 %v1412, %v1410
        %v1725 = vpack.c.b16 %v1415, %v1413
        %v1726 = vpack.c.b16 %v1416, %v1414
        %v1727 = vpack.c.b16 %v1419, %v1417
        %v1728 = vpack.c.b16 %v1420, %v1418
        %v1729 = vpack.c.b16 %v1423, %v1421
        %v1730 = vpack.c.b16 %v1424, %v1422
        %v1731 = vpack.c.b16 %v1427, %v1425
        %v1732 = vpack.c.b16 %v1428, %v1426
        %v1733 = vpack.c.b16 %v1431, %v1429
        %v1734 = vpack.c.b16 %v1432, %v1430
        %v1735 = vpack.c.b16 %v1435, %v1433
        %v1736 = vpack.c.b16 %v1436, %v1434
        %v1737 = vpack.c.b16 %v1439, %v1437
        %v1738 = vpack.c.b16 %v1440, %v1438
        %v1739 = vpack.c.b16 %v1443, %v1441
        %v1740 = vpack.c.b16 %v1444, %v1442
        %v1741 = vpack.c.b16 %v1447, %v1445
        %v1742 = vpack.c.b16 %v1448, %v1446
        %v1743 = vpack.c.b16 %v1451, %v1449
        %v1744 = vpack.c.b16 %v1452, %v1450
        %v1745 = vpack.c.b16 %v1455, %v1453
        %v1746 = vpack.c.b16 %v1456, %v1454
        %v1747 = vpack.c.b16 %v1459, %v1457
        %v1748 = vpack.c.b16 %v1460, %v1458
        %v1749 = vpack.c.b16 %v1463, %v1461
        %v1750 = vpack.c.b16 %v1464, %v1462
        %v1751 = vpack.c.b16 %v1467, %v1465
        %v1752 = vpack.c.b16 %v1468, %v1466
        %v1753 = vpack.c.b16 %v1471, %v1469
        %v1754 = vpack.c.b16 %v1472, %v1470
        %v1755 = vpack.c.b16 %v1475, %v1473
        %v1756 = vpack.c.b16 %v1476, %v1474
        %v1757 = vpack.c.b16 %v1479, %v1477
        %v1758 = vpack.c.b16 %v1480, %v1478
        %v1759 = vpack.c.b16 %v1483, %v1481
        %v1760 = vpack.c.b16 %v1484, %v1482
        %v1761 = vpack.c.b16 %v1487, %v1485
        %v1762 = vpack.c.b16 %v1488, %v1486
        %v1763 = vpack.c.b16 %v1491, %v1489
        %v1764 = vpack.c.b16 %v1492, %v1490
        %v1765 = vpack.c.b16 %v1495, %v1493
        %v1766 = vpack.c.b16 %v1496, %v1494
        %v1767 = vpack.c.b16 %v1499, %v1497
        %v1768 = vpack.c.b16 %v1500, %v1498
        %v1769 = vpack.c.b16 %v1503, %v1501
        %v1770 = vpack.c.b16 %v1504, %v1502
        %v1771 = vpack.c.b16 %v1507, %v1505
        %v1772 = vpack.c.b16 %v1508, %v1506
        %v1773 = vpack.c.b16 %v1511, %v1509
        %v1774 = vpack.c.b16 %v1512, %v1510
        %v1775 = vpack.c.b16 %v1515, %v1513
        %v1776 = vpack.c.b16 %v1516, %v1514
        %v1777 = vpack.c.b16 %v1519, %v1517
        %v1778 = vpack.c.b16 %v1520, %v1518
        %v1779 = vpack.c.b16 %v1521, %v1521
        %v1780 = vpack.c.b16 %v1522, %v1522
        %vm2037 = vcmask 7168
        %v2039 = vsel %vm2037, %v380, 0
        %v2042 = vsel %vm2037, %v397, 0
        %v2045 = vsel %vm2037, %v414, 0
        %v2048 = vsel %vm2037, %v431, 0
        %vm2050 = vcmask 1040384
        %v2051 = vsel 0, 4294967295, 65535
        %v2052 = vsel %vm2050, %v2051, 0
        %v2054 = vand.u32 %v1779, %v2052
        %v2057 = vand.u32 %v1780, %v2052
        %2059 = vmatprep.subr.bf16.mxu0 %v1524
        %2060 = vmatpush1.bf16.msra.mxu0 %v1523
        %2061 = vmatprep.subr.bf16.mxu0 %v1526
        %2062 = vmatpush1.bf16.msra.mxu0 %v1525
        %2063 = vmatprep.subr.bf16.mxu0 %v1528
        %2064 = vmatpush1.bf16.msra.mxu0 %v1527
        %2065 = vmatprep.subr.bf16.mxu0 %v1530
        %2066 = vmatpush1.bf16.msra.mxu0 %v1529
        %2067 = vmatprep.subr.bf16.mxu0 %v1532
        %2068 = vmatpush1.bf16.msra.mxu0 %v1531
        %2069 = vmatprep.subr.bf16.mxu0 %v1534
        %2070 = vmatpush1.bf16.msra.mxu0 %v1533
        %2071 = vmatprep.subr.bf16.mxu0 %v1536
        %2072 = vmatpush1.bf16.msra.mxu0 %v1535
        %2073 = vmatprep.subr.bf16.mxu0 %v1538
        %2074 = vmatpush1.bf16.msra.mxu0 %v1537
        %2075 = vmatprep.subr.bf16.mxu0 %v1540
        %2076 = vmatpush1.bf16.msra.mxu0 %v1539
        %2077 = vmatprep.subr.bf16.mxu0 %v1542
        %2078 = vmatpush1.bf16.msra.mxu0 %v1541
        %2079 = vmatprep.subr.bf16.mxu0 %v1544
        %2080 = vmatpush1.bf16.msra.mxu0 %v1543
        %2081 = vmatprep.subr.bf16.mxu0 %v1546
        %2082 = vmatpush1.bf16.msra.mxu0 %v1545
        %2083 = vmatprep.subr.bf16.mxu0 %v1548
        %2084 = vmatpush1.bf16.msra.mxu0 %v1547
        %2085 = vmatprep.subr.bf16.mxu0 %v1550
        %2086 = vmatpush1.bf16.msra.mxu0 %v1549
        %2087 = vmatprep.subr.bf16.mxu0 %v1552
        %2088 = vmatpush1.bf16.msra.mxu0 %v1551
        %2089 = vmatprep.subr.bf16.mxu0 %v1554
        %2090 = vmatpush1.bf16.msra.mxu0 %v1553
        %2091 = vmatprep.mubr.bf16.mxu0 %v365
        %2092 = vmatmul.mubr.bf16.gmra.mrb[0].mxu0 %v364
        %v2093 = vpop.f32.mrb[0].mxu0
        %v2094 = vadd.f32 0.0, %v2093
        %v2095 = vpop.f32.mrb[0].mxu0
        %v2096 = vadd.f32 0.0, %v2095
        %v2097 = vpop.f32.mrb[0].mxu0
        %v2098 = vadd.f32 0.0, %v2097
        %v2099 = vpop.f32.mrb[0].mxu0
        %v2100 = vadd.f32 0.0, %v2099
        %2101 = vmatprep.mubr.bf16.mxu0 %v382
        %2102 = vmatmul.mubr.bf16.gmra.mrb[0].mxu0 %v381
        %v2103 = vpop.f32.mrb[0].mxu0
        %v2104 = vadd.f32 0.0, %v2103
        %v2105 = vpop.f32.mrb[0].mxu0
        %v2106 = vadd.f32 0.0, %v2105
        %v2107 = vpop.f32.mrb[0].mxu0
        %v2108 = vadd.f32 0.0, %v2107
        %v2109 = vpop.f32.mrb[0].mxu0
        %v2110 = vadd.f32 0.0, %v2109
        %2111 = vmatprep.mubr.bf16.mxu0 %v399
        %2112 = vmatmul.mubr.bf16.gmra.mrb[0].mxu0 %v398
        %v2113 = vpop.f32.mrb[0].mxu0
        %v2114 = vadd.f32 0.0, %v2113
        %v2115 = vpop.f32.mrb[0].mxu0
        %v2116 = vadd.f32 0.0, %v2115
        %v2117 = vpop.f32.mrb[0].mxu0
        %v2118 = vadd.f32 0.0, %v2117
        %v2119 = vpop.f32.mrb[0].mxu0
        %v2120 = vadd.f32 0.0, %v2119
        %2121 = vmatprep.mubr.bf16.mxu0 %v416
        %2122 = vmatmul.mubr.bf16.gmra.mrb[0].mxu0 %v415
        %v2123 = vpop.f32.mrb[0].mxu0
        %v2124 = vadd.f32 0.0, %v2123
        %v2125 = vpop.f32.mrb[0].mxu0
        %v2126 = vadd.f32 0.0, %v2125
        %v2127 = vpop.f32.mrb[0].mxu0
        %v2128 = vadd.f32 0.0, %v2127
        %v2129 = vpop.f32.mrb[0].mxu0
        %v2130 = vadd.f32 0.0, %v2129
        %2131 = vdwg.mxu0
        %2132 = vmatprep.subr.bf16.mxu0 %v1556
        %2133 = vmatpush1.bf16.msra.mxu0 %v1555
        %2134 = vmatprep.subr.bf16.mxu0 %v1558
        %2135 = vmatpush1.bf16.msra.mxu0 %v1557
        %2136 = vmatprep.subr.bf16.mxu0 %v1560
        %2137 = vmatpush1.bf16.msra.mxu0 %v1559
        %2138 = vmatprep.subr.bf16.mxu0 %v1562
        %2139 = vmatpush1.bf16.msra.mxu0 %v1561
        %2140 = vmatprep.subr.bf16.mxu0 %v1564
        %2141 = vmatpush1.bf16.msra.mxu0 %v1563
        %2142 = vmatprep.subr.bf16.mxu0 %v1566
        %2143 = vmatpush1.bf16.msra.mxu0 %v1565
        %2144 = vmatprep.subr.bf16.mxu0 %v1568
        %2145 = vmatpush1.bf16.msra.mxu0 %v1567
        %2146 = vmatprep.subr.bf16.mxu0 %v1570
        %2147 = vmatpush1.bf16.msra.mxu0 %v1569
        %2148 = vmatprep.subr.bf16.mxu0 %v1572
        %2149 = vmatpush1.bf16.msra.mxu0 %v1571
        %2150 = vmatprep.subr.bf16.mxu0 %v1574
        %2151 = vmatpush1.bf16.msra.mxu0 %v1573
        %2152 = vmatprep.subr.bf16.mxu0 %v1576
        %2153 = vmatpush1.bf16.msra.mxu0 %v1575
        %2154 = vmatprep.subr.bf16.mxu0 %v1578
        %2155 = vmatpush1.bf16.msra.mxu0 %v1577
        %2156 = vmatprep.subr.bf16.mxu0 %v1580
        %2157 = vmatpush1.bf16.msra.mxu0 %v1579
        %2158 = vmatprep.subr.bf16.mxu0 %v1582
        %2159 = vmatpush1.bf16.msra.mxu0 %v1581
        %2160 = vmatprep.subr.bf16.mxu0 %v1584
        %2161 = vmatpush1.bf16.msra.mxu0 %v1583
        %2162 = vmatprep.subr.bf16.mxu0 %v1586
        %2163 = vmatpush1.bf16.msra.mxu0 %v1585
        %2164 = vmatprep.mubr.bf16.mxu0 %v367
        %2165 = vmatmul.mubr.bf16.gmra.mrb[0].mxu0 %v366
        %v2166 = vpop.f32.mrb[0].mxu0
        %v2167 = vadd.f32 %v2094, %v2166
        %v2168 = vpop.f32.mrb[0].mxu0
        %v2169 = vadd.f32 %v2096, %v2168
        %v2170 = vpop.f32.mrb[0].mxu0
        %v2171 = vadd.f32 %v2098, %v2170
        %v2172 = vpop.f32.mrb[0].mxu0
        %v2173 = vadd.f32 %v2100, %v2172
        %2174 = vmatprep.mubr.bf16.mxu0 %v384
        %2175 = vmatmul.mubr.bf16.gmra.mrb[0].mxu0 %v383
        %v2176 = vpop.f32.mrb[0].mxu0
        %v2177 = vadd.f32 %v2104, %v2176
        %v2178 = vpop.f32.mrb[0].mxu0
        %v2179 = vadd.f32 %v2106, %v2178
        %v2180 = vpop.f32.mrb[0].mxu0
        %v2181 = vadd.f32 %v2108, %v2180
        %v2182 = vpop.f32.mrb[0].mxu0
        %v2183 = vadd.f32 %v2110, %v2182
        %2184 = vmatprep.mubr.bf16.mxu0 %v401
        %2185 = vmatmul.mubr.bf16.gmra.mrb[0].mxu0 %v400
        %v2186 = vpop.f32.mrb[0].mxu0
        %v2187 = vadd.f32 %v2114, %v2186
        %v2188 = vpop.f32.mrb[0].mxu0
        %v2189 = vadd.f32 %v2116, %v2188
        %v2190 = vpop.f32.mrb[0].mxu0
        %v2191 = vadd.f32 %v2118, %v2190
        %v2192 = vpop.f32.mrb[0].mxu0
        %v2193 = vadd.f32 %v2120, %v2192
        %2194 = vmatprep.mubr.bf16.mxu0 %v418
        %2195 = vmatmul.mubr.bf16.gmra.mrb[0].mxu0 %v417
        %v2196 = vpop.f32.mrb[0].mxu0
        %v2197 = vadd.f32 %v2124, %v2196
        %v2198 = vpop.f32.mrb[0].mxu0
        %v2199 = vadd.f32 %v2126, %v2198
        %v2200 = vpop.f32.mrb[0].mxu0
        %v2201 = vadd.f32 %v2128, %v2200
        %v2202 = vpop.f32.mrb[0].mxu0
        %v2203 = vadd.f32 %v2130, %v2202
        %2204 = vdwg.mxu0
        %2205 = vmatprep.subr.bf16.mxu0 %v1588
        %2206 = vmatpush1.bf16.msra.mxu0 %v1587
        %2207 = vmatprep.subr.bf16.mxu0 %v1590
        %2208 = vmatpush1.bf16.msra.mxu0 %v1589
        %2209 = vmatprep.subr.bf16.mxu0 %v1592
        %2210 = vmatpush1.bf16.msra.mxu0 %v1591
        %2211 = vmatprep.subr.bf16.mxu0 %v1594
        %2212 = vmatpush1.bf16.msra.mxu0 %v1593
        %2213 = vmatprep.subr.bf16.mxu0 %v1596
        %2214 = vmatpush1.bf16.msra.mxu0 %v1595
        %2215 = vmatprep.subr.bf16.mxu0 %v1598
        %2216 = vmatpush1.bf16.msra.mxu0 %v1597
        %2217 = vmatprep.subr.bf16.mxu0 %v1600
        %2218 = vmatpush1.bf16.msra.mxu0 %v1599
        %2219 = vmatprep.subr.bf16.mxu0 %v1602
        %2220 = vmatpush1.bf16.msra.mxu0 %v1601
        %2221 = vmatprep.subr.bf16.mxu0 %v1604
        %2222 = vmatpush1.bf16.msra.mxu0 %v1603
        %2223 = vmatprep.subr.bf16.mxu0 %v1606
        %2224 = vmatpush1.bf16.msra.mxu0 %v1605
        %2225 = vmatprep.subr.bf16.mxu0 %v1608
        %2226 = vmatpush1.bf16.msra.mxu0 %v1607
        %2227 = vmatprep.subr.bf16.mxu0 %v1610
        %2228 = vmatpush1.bf16.msra.mxu0 %v1609
        %2229 = vmatprep.subr.bf16.mxu0 %v1612
        %2230 = vmatpush1.bf16.msra.mxu0 %v1611
        %2231 = vmatprep.subr.bf16.mxu0 %v1614
        %2232 = vmatpush1.bf16.msra.mxu0 %v1613
        %2233 = vmatprep.subr.bf16.mxu0 %v1616
        %2234 = vmatpush1.bf16.msra.mxu0 %v1615
        %2235 = vmatprep.subr.bf16.mxu0 %v1618
        %2236 = vmatpush1.bf16.msra.mxu0 %v1617
        %2237 = vmatprep.mubr.bf16.mxu0 %v369
        %2238 = vmatmul.mubr.bf16.gmra.mrb[0].mxu0 %v368
        %v2239 = vpop.f32.mrb[0].mxu0
        %v2240 = vadd.f32 %v2167, %v2239
        %v2241 = vpop.f32.mrb[0].mxu0
        %v2242 = vadd.f32 %v2169, %v2241
        %v2243 = vpop.f32.mrb[0].mxu0
        %v2244 = vadd.f32 %v2171, %v2243
        %v2245 = vpop.f32.mrb[0].mxu0
        %v2246 = vadd.f32 %v2173, %v2245
        %2247 = vmatprep.mubr.bf16.mxu0 %v386
        %2248 = vmatmul.mubr.bf16.gmra.mrb[0].mxu0 %v385
        %v2249 = vpop.f32.mrb[0].mxu0
        %v2250 = vadd.f32 %v2177, %v2249
        %v2251 = vpop.f32.mrb[0].mxu0
        %v2252 = vadd.f32 %v2179, %v2251
        %v2253 = vpop.f32.mrb[0].mxu0
        %v2254 = vadd.f32 %v2181, %v2253
        %v2255 = vpop.f32.mrb[0].mxu0
        %v2256 = vadd.f32 %v2183, %v2255
        %2257 = vmatprep.mubr.bf16.mxu0 %v403
        %2258 = vmatmul.mubr.bf16.gmra.mrb[0].mxu0 %v402
        %v2259 = vpop.f32.mrb[0].mxu0
        %v2260 = vadd.f32 %v2187, %v2259
        %v2261 = vpop.f32.mrb[0].mxu0
        %v2262 = vadd.f32 %v2189, %v2261
        %v2263 = vpop.f32.mrb[0].mxu0
        %v2264 = vadd.f32 %v2191, %v2263
        %v2265 = vpop.f32.mrb[0].mxu0
        %v2266 = vadd.f32 %v2193, %v2265
        %2267 = vmatprep.mubr.bf16.mxu0 %v420
        %2268 = vmatmul.mubr.bf16.gmra.mrb[0].mxu0 %v419
        %v2269 = vpop.f32.mrb[0].mxu0
        %v2270 = vadd.f32 %v2197, %v2269
        %v2271 = vpop.f32.mrb[0].mxu0
        %v2272 = vadd.f32 %v2199, %v2271
        %v2273 = vpop.f32.mrb[0].mxu0
        %v2274 = vadd.f32 %v2201, %v2273
        %v2275 = vpop.f32.mrb[0].mxu0
        %v2276 = vadd.f32 %v2203, %v2275
        %2277 = vdwg.mxu0
        %2278 = vmatprep.subr.bf16.mxu0 %v1620
        %2279 = vmatpush1.bf16.msra.mxu0 %v1619
        %2280 = vmatprep.subr.bf16.mxu0 %v1622
        %2281 = vmatpush1.bf16.msra.mxu0 %v1621
        %2282 = vmatprep.subr.bf16.mxu0 %v1624
        %2283 = vmatpush1.bf16.msra.mxu0 %v1623
        %2284 = vmatprep.subr.bf16.mxu0 %v1626
        %2285 = vmatpush1.bf16.msra.mxu0 %v1625
        %2286 = vmatprep.subr.bf16.mxu0 %v1628
        %2287 = vmatpush1.bf16.msra.mxu0 %v1627
        %2288 = vmatprep.subr.bf16.mxu0 %v1630
        %2289 = vmatpush1.bf16.msra.mxu0 %v1629
        %2290 = vmatprep.subr.bf16.mxu0 %v1632
        %2291 = vmatpush1.bf16.msra.mxu0 %v1631
        %2292 = vmatprep.subr.bf16.mxu0 %v1634
        %2293 = vmatpush1.bf16.msra.mxu0 %v1633
        %2294 = vmatprep.subr.bf16.mxu0 %v1636
        %2295 = vmatpush1.bf16.msra.mxu0 %v1635
        %2296 = vmatprep.subr.bf16.mxu0 %v1638
        %2297 = vmatpush1.bf16.msra.mxu0 %v1637
        %2298 = vmatprep.subr.bf16.mxu0 %v1640
        %2299 = vmatpush1.bf16.msra.mxu0 %v1639
        %2300 = vmatprep.subr.bf16.mxu0 %v1642
        %2301 = vmatpush1.bf16.msra.mxu0 %v1641
        %2302 = vmatprep.subr.bf16.mxu0 %v1644
        %2303 = vmatpush1.bf16.msra.mxu0 %v1643
        %2304 = vmatprep.subr.bf16.mxu0 %v1646
        %2305 = vmatpush1.bf16.msra.mxu0 %v1645
        %2306 = vmatprep.subr.bf16.mxu0 %v1648
        %2307 = vmatpush1.bf16.msra.mxu0 %v1647
        %2308 = vmatprep.subr.bf16.mxu0 %v1650
        %2309 = vmatpush1.bf16.msra.mxu0 %v1649
        %2310 = vmatprep.mubr.bf16.mxu0 %v371
        %2311 = vmatmul.mubr.bf16.gmra.mrb[0].mxu0 %v370
        %v2312 = vpop.f32.mrb[0].mxu0
        %v2313 = vadd.f32 %v2240, %v2312
        %v2314 = vpop.f32.mrb[0].mxu0
        %v2315 = vadd.f32 %v2242, %v2314
        %v2316 = vpop.f32.mrb[0].mxu0
        %v2317 = vadd.f32 %v2244, %v2316
        %v2318 = vpop.f32.mrb[0].mxu0
        %v2319 = vadd.f32 %v2246, %v2318
        %2320 = vmatprep.mubr.bf16.mxu0 %v388
        %2321 = vmatmul.mubr.bf16.gmra.mrb[0].mxu0 %v387
        %v2322 = vpop.f32.mrb[0].mxu0
        %v2323 = vadd.f32 %v2250, %v2322
        %v2324 = vpop.f32.mrb[0].mxu0
        %v2325 = vadd.f32 %v2252, %v2324
        %v2326 = vpop.f32.mrb[0].mxu0
        %v2327 = vadd.f32 %v2254, %v2326
        %v2328 = vpop.f32.mrb[0].mxu0
        %v2329 = vadd.f32 %v2256, %v2328
        %2330 = vmatprep.mubr.bf16.mxu0 %v405
        %2331 = vmatmul.mubr.bf16.gmra.mrb[0].mxu0 %v404
        %v2332 = vpop.f32.mrb[0].mxu0
        %v2333 = vadd.f32 %v2260, %v2332
        %v2334 = vpop.f32.mrb[0].mxu0
        %v2335 = vadd.f32 %v2262, %v2334
        %v2336 = vpop.f32.mrb[0].mxu0
        %v2337 = vadd.f32 %v2264, %v2336
        %v2338 = vpop.f32.mrb[0].mxu0
        %v2339 = vadd.f32 %v2266, %v2338
        %2340 = vmatprep.mubr.bf16.mxu0 %v422
        %2341 = vmatmul.mubr.bf16.gmra.mrb[0].mxu0 %v421
        %v2342 = vpop.f32.mrb[0].mxu0
        %v2343 = vadd.f32 %v2270, %v2342
        %v2344 = vpop.f32.mrb[0].mxu0
        %v2345 = vadd.f32 %v2272, %v2344
        %v2346 = vpop.f32.mrb[0].mxu0
        %v2347 = vadd.f32 %v2274, %v2346
        %v2348 = vpop.f32.mrb[0].mxu0
        %v2349 = vadd.f32 %v2276, %v2348
        %2350 = vdwg.mxu0
        %2351 = vmatprep.subr.bf16.mxu0 %v1652
        %2352 = vmatpush1.bf16.msra.mxu0 %v1651
        %2353 = vmatprep.subr.bf16.mxu0 %v1654
        %2354 = vmatpush1.bf16.msra.mxu0 %v1653
        %2355 = vmatprep.subr.bf16.mxu0 %v1656
        %2356 = vmatpush1.bf16.msra.mxu0 %v1655
        %2357 = vmatprep.subr.bf16.mxu0 %v1658
        %2358 = vmatpush1.bf16.msra.mxu0 %v1657
        %2359 = vmatprep.subr.bf16.mxu0 %v1660
        %2360 = vmatpush1.bf16.msra.mxu0 %v1659
        %2361 = vmatprep.subr.bf16.mxu0 %v1662
        %2362 = vmatpush1.bf16.msra.mxu0 %v1661
        %2363 = vmatprep.subr.bf16.mxu0 %v1664
        %2364 = vmatpush1.bf16.msra.mxu0 %v1663
        %2365 = vmatprep.subr.bf16.mxu0 %v1666
        %2366 = vmatpush1.bf16.msra.mxu0 %v1665
        %2367 = vmatprep.subr.bf16.mxu0 %v1668
        %2368 = vmatpush1.bf16.msra.mxu0 %v1667
        %2369 = vmatprep.subr.bf16.mxu0 %v1670
        %2370 = vmatpush1.bf16.msra.mxu0 %v1669
        %2371 = vmatprep.subr.bf16.mxu0 %v1672
        %2372 = vmatpush1.bf16.msra.mxu0 %v1671
        %2373 = vmatprep.subr.bf16.mxu0 %v1674
        %2374 = vmatpush1.bf16.msra.mxu0 %v1673
        %2375 = vmatprep.subr.bf16.mxu0 %v1676
        %2376 = vmatpush1.bf16.msra.mxu0 %v1675
        %2377 = vmatprep.subr.bf16.mxu0 %v1678
        %2378 = vmatpush1.bf16.msra.mxu0 %v1677
        %2379 = vmatprep.subr.bf16.mxu0 %v1680
        %2380 = vmatpush1.bf16.msra.mxu0 %v1679
        %2381 = vmatprep.subr.bf16.mxu0 %v1682
        %2382 = vmatpush1.bf16.msra.mxu0 %v1681
        %2383 = vmatprep.mubr.bf16.mxu0 %v373
        %2384 = vmatmul.mubr.bf16.gmra.mrb[0].mxu0 %v372
        %v2385 = vpop.f32.mrb[0].mxu0
        %v2386 = vadd.f32 %v2313, %v2385
        %v2387 = vpop.f32.mrb[0].mxu0
        %v2388 = vadd.f32 %v2315, %v2387
        %v2389 = vpop.f32.mrb[0].mxu0
        %v2390 = vadd.f32 %v2317, %v2389
        %v2391 = vpop.f32.mrb[0].mxu0
        %v2392 = vadd.f32 %v2319, %v2391
        %2393 = vmatprep.mubr.bf16.mxu0 %v390
        %2394 = vmatmul.mubr.bf16.gmra.mrb[0].mxu0 %v389
        %v2395 = vpop.f32.mrb[0].mxu0
        %v2396 = vadd.f32 %v2323, %v2395
        %v2397 = vpop.f32.mrb[0].mxu0
        %v2398 = vadd.f32 %v2325, %v2397
        %v2399 = vpop.f32.mrb[0].mxu0
        %v2400 = vadd.f32 %v2327, %v2399
        %v2401 = vpop.f32.mrb[0].mxu0
        %v2402 = vadd.f32 %v2329, %v2401
        %2403 = vmatprep.mubr.bf16.mxu0 %v407
        %2404 = vmatmul.mubr.bf16.gmra.mrb[0].mxu0 %v406
        %v2405 = vpop.f32.mrb[0].mxu0
        %v2406 = vadd.f32 %v2333, %v2405
        %v2407 = vpop.f32.mrb[0].mxu0
        %v2408 = vadd.f32 %v2335, %v2407
        %v2409 = vpop.f32.mrb[0].mxu0
        %v2410 = vadd.f32 %v2337, %v2409
        %v2411 = vpop.f32.mrb[0].mxu0
        %v2412 = vadd.f32 %v2339, %v2411
        %2413 = vmatprep.mubr.bf16.mxu0 %v424
        %2414 = vmatmul.mubr.bf16.gmra.mrb[0].mxu0 %v423
        %v2415 = vpop.f32.mrb[0].mxu0
        %v2416 = vadd.f32 %v2343, %v2415
        %v2417 = vpop.f32.mrb[0].mxu0
        %v2418 = vadd.f32 %v2345, %v2417
        %v2419 = vpop.f32.mrb[0].mxu0
        %v2420 = vadd.f32 %v2347, %v2419
        %v2421 = vpop.f32.mrb[0].mxu0
        %v2422 = vadd.f32 %v2349, %v2421
        %2423 = vdwg.mxu0
        %2424 = vmatprep.subr.bf16.mxu0 %v1684
        %2425 = vmatpush1.bf16.msra.mxu0 %v1683
        %2426 = vmatprep.subr.bf16.mxu0 %v1686
        %2427 = vmatpush1.bf16.msra.mxu0 %v1685
        %2428 = vmatprep.subr.bf16.mxu0 %v1688
        %2429 = vmatpush1.bf16.msra.mxu0 %v1687
        %2430 = vmatprep.subr.bf16.mxu0 %v1690
        %2431 = vmatpush1.bf16.msra.mxu0 %v1689
        %2432 = vmatprep.subr.bf16.mxu0 %v1692
        %2433 = vmatpush1.bf16.msra.mxu0 %v1691
        %2434 = vmatprep.subr.bf16.mxu0 %v1694
        %2435 = vmatpush1.bf16.msra.mxu0 %v1693
        %2436 = vmatprep.subr.bf16.mxu0 %v1696
        %2437 = vmatpush1.bf16.msra.mxu0 %v1695
        %2438 = vmatprep.subr.bf16.mxu0 %v1698
        %2439 = vmatpush1.bf16.msra.mxu0 %v1697
        %2440 = vmatprep.subr.bf16.mxu0 %v1700
        %2441 = vmatpush1.bf16.msra.mxu0 %v1699
        %2442 = vmatprep.subr.bf16.mxu0 %v1702
        %2443 = vmatpush1.bf16.msra.mxu0 %v1701
        %2444 = vmatprep.subr.bf16.mxu0 %v1704
        %2445 = vmatpush1.bf16.msra.mxu0 %v1703
        %2446 = vmatprep.subr.bf16.mxu0 %v1706
        %2447 = vmatpush1.bf16.msra.mxu0 %v1705
        %2448 = vmatprep.subr.bf16.mxu0 %v1708
        %2449 = vmatpush1.bf16.msra.mxu0 %v1707
        %2450 = vmatprep.subr.bf16.mxu0 %v1710
        %2451 = vmatpush1.bf16.msra.mxu0 %v1709
        %2452 = vmatprep.subr.bf16.mxu0 %v1712
        %2453 = vmatpush1.bf16.msra.mxu0 %v1711
        %2454 = vmatprep.subr.bf16.mxu0 %v1714
        %2455 = vmatpush1.bf16.msra.mxu0 %v1713
        %2456 = vmatprep.mubr.bf16.mxu0 %v375
        %2457 = vmatmul.mubr.bf16.gmra.mrb[0].mxu0 %v374
        %v2458 = vpop.f32.mrb[0].mxu0
        %v2459 = vadd.f32 %v2386, %v2458
        %v2460 = vpop.f32.mrb[0].mxu0
        %v2461 = vadd.f32 %v2388, %v2460
        %v2462 = vpop.f32.mrb[0].mxu0
        %v2463 = vadd.f32 %v2390, %v2462
        %v2464 = vpop.f32.mrb[0].mxu0
        %v2465 = vadd.f32 %v2392, %v2464
        %2466 = vmatprep.mubr.bf16.mxu0 %v392
        %2467 = vmatmul.mubr.bf16.gmra.mrb[0].mxu0 %v391
        %v2468 = vpop.f32.mrb[0].mxu0
        %v2469 = vadd.f32 %v2396, %v2468
        %v2470 = vpop.f32.mrb[0].mxu0
        %v2471 = vadd.f32 %v2398, %v2470
        %v2472 = vpop.f32.mrb[0].mxu0
        %v2473 = vadd.f32 %v2400, %v2472
        %v2474 = vpop.f32.mrb[0].mxu0
        %v2475 = vadd.f32 %v2402, %v2474
        %2476 = vmatprep.mubr.bf16.mxu0 %v409
        %2477 = vmatmul.mubr.bf16.gmra.mrb[0].mxu0 %v408
        %v2478 = vpop.f32.mrb[0].mxu0
        %v2479 = vadd.f32 %v2406, %v2478
        %v2480 = vpop.f32.mrb[0].mxu0
        %v2481 = vadd.f32 %v2408, %v2480
        %v2482 = vpop.f32.mrb[0].mxu0
        %v2483 = vadd.f32 %v2410, %v2482
        %v2484 = vpop.f32.mrb[0].mxu0
        %v2485 = vadd.f32 %v2412, %v2484
        %2486 = vmatprep.mubr.bf16.mxu0 %v426
        %2487 = vmatmul.mubr.bf16.gmra.mrb[0].mxu0 %v425
        %v2488 = vpop.f32.mrb[0].mxu0
        %v2489 = vadd.f32 %v2416, %v2488
        %v2490 = vpop.f32.mrb[0].mxu0
        %v2491 = vadd.f32 %v2418, %v2490
        %v2492 = vpop.f32.mrb[0].mxu0
        %v2493 = vadd.f32 %v2420, %v2492
        %v2494 = vpop.f32.mrb[0].mxu0
        %v2495 = vadd.f32 %v2422, %v2494
        %2496 = vdwg.mxu0
        %2497 = vmatprep.subr.bf16.mxu0 %v1716
        %2498 = vmatpush1.bf16.msra.mxu0 %v1715
        %2499 = vmatprep.subr.bf16.mxu0 %v1718
        %2500 = vmatpush1.bf16.msra.mxu0 %v1717
        %2501 = vmatprep.subr.bf16.mxu0 %v1720
        %2502 = vmatpush1.bf16.msra.mxu0 %v1719
        %2503 = vmatprep.subr.bf16.mxu0 %v1722
        %2504 = vmatpush1.bf16.msra.mxu0 %v1721
        %2505 = vmatprep.subr.bf16.mxu0 %v1724
        %2506 = vmatpush1.bf16.msra.mxu0 %v1723
        %2507 = vmatprep.subr.bf16.mxu0 %v1726
        %2508 = vmatpush1.bf16.msra.mxu0 %v1725
        %2509 = vmatprep.subr.bf16.mxu0 %v1728
        %2510 = vmatpush1.bf16.msra.mxu0 %v1727
        %2511 = vmatprep.subr.bf16.mxu0 %v1730
        %2512 = vmatpush1.bf16.msra.mxu0 %v1729
        %2513 = vmatprep.subr.bf16.mxu0 %v1732
        %2514 = vmatpush1.bf16.msra.mxu0 %v1731
        %2515 = vmatprep.subr.bf16.mxu0 %v1734
        %2516 = vmatpush1.bf16.msra.mxu0 %v1733
        %2517 = vmatprep.subr.bf16.mxu0 %v1736
        %2518 = vmatpush1.bf16.msra.mxu0 %v1735
        %2519 = vmatprep.subr.bf16.mxu0 %v1738
        %2520 = vmatpush1.bf16.msra.mxu0 %v1737
        %2521 = vmatprep.subr.bf16.mxu0 %v1740
        %2522 = vmatpush1.bf16.msra.mxu0 %v1739
        %2523 = vmatprep.subr.bf16.mxu0 %v1742
        %2524 = vmatpush1.bf16.msra.mxu0 %v1741
        %2525 = vmatprep.subr.bf16.mxu0 %v1744
        %2526 = vmatpush1.bf16.msra.mxu0 %v1743
        %2527 = vmatprep.subr.bf16.mxu0 %v1746
        %2528 = vmatpush1.bf16.msra.mxu0 %v1745
        %2529 = vmatprep.mubr.bf16.mxu0 %v377
        %2530 = vmatmul.mubr.bf16.gmra.mrb[0].mxu0 %v376
        %v2531 = vpop.f32.mrb[0].mxu0
        %v2532 = vadd.f32 %v2459, %v2531
        %v2533 = vpop.f32.mrb[0].mxu0
        %v2534 = vadd.f32 %v2461, %v2533
        %v2535 = vpop.f32.mrb[0].mxu0
        %v2536 = vadd.f32 %v2463, %v2535
        %v2537 = vpop.f32.mrb[0].mxu0
        %v2538 = vadd.f32 %v2465, %v2537
        %2539 = vmatprep.mubr.bf16.mxu0 %v394
        %2540 = vmatmul.mubr.bf16.gmra.mrb[0].mxu0 %v393
        %v2541 = vpop.f32.mrb[0].mxu0
        %v2542 = vadd.f32 %v2469, %v2541
        %v2543 = vpop.f32.mrb[0].mxu0
        %v2544 = vadd.f32 %v2471, %v2543
        %v2545 = vpop.f32.mrb[0].mxu0
        %v2546 = vadd.f32 %v2473, %v2545
        %v2547 = vpop.f32.mrb[0].mxu0
        %v2548 = vadd.f32 %v2475, %v2547
        %2549 = vmatprep.mubr.bf16.mxu0 %v411
        %2550 = vmatmul.mubr.bf16.gmra.mrb[0].mxu0 %v410
        %v2551 = vpop.f32.mrb[0].mxu0
        %v2552 = vadd.f32 %v2479, %v2551
        %v2553 = vpop.f32.mrb[0].mxu0
        %v2554 = vadd.f32 %v2481, %v2553
        %v2555 = vpop.f32.mrb[0].mxu0
        %v2556 = vadd.f32 %v2483, %v2555
        %v2557 = vpop.f32.mrb[0].mxu0
        %v2558 = vadd.f32 %v2485, %v2557
        %2559 = vmatprep.mubr.bf16.mxu0 %v428
        %2560 = vmatmul.mubr.bf16.gmra.mrb[0].mxu0 %v427
        %v2561 = vpop.f32.mrb[0].mxu0
        %v2562 = vadd.f32 %v2489, %v2561
        %v2563 = vpop.f32.mrb[0].mxu0
        %v2564 = vadd.f32 %v2491, %v2563
        %v2565 = vpop.f32.mrb[0].mxu0
        %v2566 = vadd.f32 %v2493, %v2565
        %v2567 = vpop.f32.mrb[0].mxu0
        %v2568 = vadd.f32 %v2495, %v2567
        %2569 = vdwg.mxu0
        %2570 = vmatprep.subr.bf16.mxu0 %v1748
        %2571 = vmatpush1.bf16.msra.mxu0 %v1747
        %2572 = vmatprep.subr.bf16.mxu0 %v1750
        %2573 = vmatpush1.bf16.msra.mxu0 %v1749
        %2574 = vmatprep.subr.bf16.mxu0 %v1752
        %2575 = vmatpush1.bf16.msra.mxu0 %v1751
        %2576 = vmatprep.subr.bf16.mxu0 %v1754
        %2577 = vmatpush1.bf16.msra.mxu0 %v1753
        %2578 = vmatprep.subr.bf16.mxu0 %v1756
        %2579 = vmatpush1.bf16.msra.mxu0 %v1755
        %2580 = vmatprep.subr.bf16.mxu0 %v1758
        %2581 = vmatpush1.bf16.msra.mxu0 %v1757
        %2582 = vmatprep.subr.bf16.mxu0 %v1760
        %2583 = vmatpush1.bf16.msra.mxu0 %v1759
        %2584 = vmatprep.subr.bf16.mxu0 %v1762
        %2585 = vmatpush1.bf16.msra.mxu0 %v1761
        %2586 = vmatprep.subr.bf16.mxu0 %v1764
        %2587 = vmatpush1.bf16.msra.mxu0 %v1763
        %2588 = vmatprep.subr.bf16.mxu0 %v1766
        %2589 = vmatpush1.bf16.msra.mxu0 %v1765
        %2590 = vmatprep.subr.bf16.mxu0 %v1768
        %2591 = vmatpush1.bf16.msra.mxu0 %v1767
        %2592 = vmatprep.subr.bf16.mxu0 %v1770
        %2593 = vmatpush1.bf16.msra.mxu0 %v1769
        %2594 = vmatprep.subr.bf16.mxu0 %v1772
        %2595 = vmatpush1.bf16.msra.mxu0 %v1771
        %2596 = vmatprep.subr.bf16.mxu0 %v1774
        %2597 = vmatpush1.bf16.msra.mxu0 %v1773
        %2598 = vmatprep.subr.bf16.mxu0 %v1776
        %2599 = vmatpush1.bf16.msra.mxu0 %v1775
        %2600 = vmatprep.subr.bf16.mxu0 %v1778
        %2601 = vmatpush1.bf16.msra.mxu0 %v1777
        %2602 = vmatprep.mubr.bf16.mxu0 %v379
        %2603 = vmatmul.mubr.bf16.gmra.mrb[0].mxu0 %v378
        %v2604 = vpop.f32.mrb[0].mxu0
        %v2605 = vadd.f32 %v2532, %v2604
        %v2606 = vpop.f32.mrb[0].mxu0
        %v2607 = vadd.f32 %v2534, %v2606
        %v2608 = vpop.f32.mrb[0].mxu0
        %v2609 = vadd.f32 %v2536, %v2608
        %v2610 = vpop.f32.mrb[0].mxu0
        %v2611 = vadd.f32 %v2538, %v2610
        %2612 = vmatprep.mubr.bf16.mxu0 %v396
        %2613 = vmatmul.mubr.bf16.gmra.mrb[0].mxu0 %v395
        %v2614 = vpop.f32.mrb[0].mxu0
        %v2615 = vadd.f32 %v2542, %v2614
        %v2616 = vpop.f32.mrb[0].mxu0
        %v2617 = vadd.f32 %v2544, %v2616
        %v2618 = vpop.f32.mrb[0].mxu0
        %v2619 = vadd.f32 %v2546, %v2618
        %v2620 = vpop.f32.mrb[0].mxu0
        %v2621 = vadd.f32 %v2548, %v2620
        %2622 = vmatprep.mubr.bf16.mxu0 %v413
        %2623 = vmatmul.mubr.bf16.gmra.mrb[0].mxu0 %v412
        %v2624 = vpop.f32.mrb[0].mxu0
        %v2625 = vadd.f32 %v2552, %v2624
        %v2626 = vpop.f32.mrb[0].mxu0
        %v2627 = vadd.f32 %v2554, %v2626
        %v2628 = vpop.f32.mrb[0].mxu0
        %v2629 = vadd.f32 %v2556, %v2628
        %v2630 = vpop.f32.mrb[0].mxu0
        %v2631 = vadd.f32 %v2558, %v2630
        %2632 = vmatprep.mubr.bf16.mxu0 %v430
        %2633 = vmatmul.mubr.bf16.gmra.mrb[0].mxu0 %v429
        %v2634 = vpop.f32.mrb[0].mxu0
        %v2635 = vadd.f32 %v2562, %v2634
        %v2636 = vpop.f32.mrb[0].mxu0
        %v2637 = vadd.f32 %v2564, %v2636
        %v2638 = vpop.f32.mrb[0].mxu0
        %v2639 = vadd.f32 %v2566, %v2638
        %v2640 = vpop.f32.mrb[0].mxu0
        %v2641 = vadd.f32 %v2568, %v2640
        %2642 = vdwg.mxu0
        %2643 = vmatprep.subr.bf16.mxu0 %v2057
        %2644 = vmatpush1.bf16.msra.mxu0 %v2054
        %2645 = vmatprep.subr.bf16.mxu0 0
        %2646 = vmatpush1.bf16.msra.mxu0 0
        %2647 = vmatprep.subr.bf16.mxu0 0
        %2648 = vmatpush1.bf16.msra.mxu0 0
        %2649 = vmatprep.subr.bf16.mxu0 0
        %2650 = vmatpush1.bf16.msra.mxu0 0
        %2651 = vmatprep.subr.bf16.mxu0 0
        %2652 = vmatpush1.bf16.msra.mxu0 0
        %2653 = vmatprep.subr.bf16.mxu0 0
        %2654 = vmatpush1.bf16.msra.mxu0 0
        %2655 = vmatprep.subr.bf16.mxu0 0
        %2656 = vmatpush1.bf16.msra.mxu0 0
        %2657 = vmatprep.subr.bf16.mxu0 0
        %2658 = vmatpush1.bf16.msra.mxu0 0
        %2659 = vmatprep.subr.bf16.mxu0 0
        %2660 = vmatpush1.bf16.msra.mxu0 0
        %2661 = vmatprep.subr.bf16.mxu0 0
        %2662 = vmatpush1.bf16.msra.mxu0 0
        %2663 = vmatprep.subr.bf16.mxu0 0
        %2664 = vmatpush1.bf16.msra.mxu0 0
        %2665 = vmatprep.subr.bf16.mxu0 0
        %2666 = vmatpush1.bf16.msra.mxu0 0
        %2667 = vmatprep.subr.bf16.mxu0 0
        %2668 = vmatpush1.bf16.msra.mxu0 0
        %2669 = vmatprep.subr.bf16.mxu0 0
        %2670 = vmatpush1.bf16.msra.mxu0 0
        %2671 = vmatprep.subr.bf16.mxu0 0
        %2672 = vmatpush1.bf16.msra.mxu0 0
        %2673 = vmatprep.subr.bf16.mxu0 0
        %2674 = vmatpush1.bf16.msra.mxu0 0
        %2675 = vmatprep.mubr.bf16.mxu0 0
        %2676 = vmatmul.mubr.bf16.gmra.mrb[0].mxu0 %v2039
        %v2677 = vpop.f32.mrb[0].mxu0
        %v2678 = vadd.f32 %v2605, %v2677
        %v2679 = vpop.f32.mrb[0].mxu0
        %v2680 = vadd.f32 %v2607, %v2679
        %v2681 = vpop.f32.mrb[0].mxu0
        %v2682 = vadd.f32 %v2609, %v2681
        %v2683 = vpop.f32.mrb[0].mxu0
        %v2684 = vadd.f32 %v2611, %v2683
        %2685 = vmatprep.mubr.bf16.mxu0 0
        %2686 = vmatmul.mubr.bf16.gmra.mrb[0].mxu0 %v2042
        %v2687 = vpop.f32.mrb[0].mxu0
        %v2688 = vadd.f32 %v2615, %v2687
        %v2689 = vpop.f32.mrb[0].mxu0
        %v2690 = vadd.f32 %v2617, %v2689
        %v2691 = vpop.f32.mrb[0].mxu0
        %v2692 = vadd.f32 %v2619, %v2691
        %v2693 = vpop.f32.mrb[0].mxu0
        %v2694 = vadd.f32 %v2621, %v2693
        %2695 = vmatprep.mubr.bf16.mxu0 0
        %2696 = vmatmul.mubr.bf16.gmra.mrb[0].mxu0 %v2045
        %v2697 = vpop.f32.mrb[0].mxu0
        %v2698 = vadd.f32 %v2625, %v2697
        %v2699 = vpop.f32.mrb[0].mxu0
        %v2700 = vadd.f32 %v2627, %v2699
        %v2701 = vpop.f32.mrb[0].mxu0
        %v2702 = vadd.f32 %v2629, %v2701
        %v2703 = vpop.f32.mrb[0].mxu0
        %v2704 = vadd.f32 %v2631, %v2703
        %2705 = vmatprep.mubr.bf16.mxu0 0
        %2706 = vmatmul.mubr.bf16.gmra.mrb[0].mxu0 %v2048
        %v2707 = vpop.f32.mrb[0].mxu0
        %v2708 = vadd.f32 %v2635, %v2707
        %v2709 = vpop.f32.mrb[0].mxu0
        %v2710 = vadd.f32 %v2637, %v2709
        %v2711 = vpop.f32.mrb[0].mxu0
        %v2712 = vadd.f32 %v2639, %v2711
        %v2713 = vpop.f32.mrb[0].mxu0
        %v2714 = vadd.f32 %v2641, %v2713
        %2715 = vdwg.mxu0
        %v2718 = vcombine.high %v493, %v493
        %v2720 = vunpack.c.l.s4 1983009808
        %v2721 = vunpack.c.0.s8 %v2720
        %v2722 = vlaneseq
        %v2723 = vshrl.u32 %v2722, 7
        %v2724 = vsub.s32 %v2721, %v2723
        %v2725 = vrot.slane %v493, %v2724
        %v2727 = vunpack.c.l.s4 1983009808
        %v2728 = vunpack.c.0.s8 %v2727
        %v2729 = vlaneseq
        %v2730 = vshrl.u32 %v2729, 7
        %v2731 = vsub.s32 %v2728, %v2730
        %v2732 = vrot.slane %v2718, %v2731
        %v2733 = vcombine.high %v2725, %v2725
        %v2734 = vcombine.high %v2732, %v2732
        %v2735 = vcombine.high %v494, %v494
        %v2737 = vunpack.c.l.s4 1983009808
        %v2738 = vunpack.c.0.s8 %v2737
        %v2739 = vlaneseq
        %v2740 = vshrl.u32 %v2739, 7
        %v2741 = vsub.s32 %v2738, %v2740
        %v2742 = vrot.slane %v494, %v2741
        %v2744 = vunpack.c.l.s4 1983009808
        %v2745 = vunpack.c.0.s8 %v2744
        %v2746 = vlaneseq
        %v2747 = vshrl.u32 %v2746, 7
        %v2748 = vsub.s32 %v2745, %v2747
        %v2749 = vrot.slane %v2735, %v2748
        %v2750 = vcombine.high %v2742, %v2742
        %v2751 = vcombine.high %v2749, %v2749
        %v2753 = vcombine.high %v2678, %v2678
        %v2756 = vcombine.high %v2680, %v2680
        %v2759 = vunpack.c.l.s4 1966171168
        %v2760 = vunpack.c.0.s8 %v2759
        %v2761 = vlaneseq
        %v2762 = vshrl.u32 %v2761, 7
        %v2763 = vsub.s32 %v2760, %v2762
        %v2764 = vrot.slane %v2725, %v2763
        %v2765 = vcombine.high %v2764, %v2764
        %v2766 = vlaneseq
        %v2767 = vshrl.u32 %v2766, 7
        %v2768 = vsub.s32 0, %v2767
        %v2769 = vrot.slane %v2764, %v2768
        %v2770 = vlaneseq
        %v2771 = vshrl.u32 %v2770, 7
        %v2772 = vsub.s32 0, %v2771
        %v2773 = vrot.slane %v2765, %v2772
        %v2776 = vmul.f32 %v2769, %v2678
        %v2777 = vmul.f32 %v2773, %v2753
        %vm2778 = vcmask 1043456
        %v2779 = vsel %vm2778, %v2776, 0.0
        %2780 = vadd.xlane.f32.xlu0 %v2779
        %v2781 = vpop.xlane.xlu0 %2780
        %v2782 = vsel %vm2778, %v2777, 0.0
        %2783 = vadd.xlane.f32.xlu0 %v2782
        %v2784 = vpop.xlane.xlu0 %2783
        %v2787 = vlaneseq
        %v2788 = vand.u32 %v2787, 127
        %v2789 = vlaneseq
        %v2790 = vshrl.u32 %v2789, 7
        %v2791 = vsub.s32 %v2788, %v2790
        %v2792 = vrot.slane %v2781, %v2791
        %v2793 = vlaneseq
        %v2794 = vshrl.u32 %v2793, 7
        %v2795 = vsub.s32 %v2788, %v2794
        %v2796 = vrot.slane %v2784, %v2795
        %vm2797 = vcmask 1041409
        %v2798 = vsel %vm2797, %v2796, %v2792
        %vm2800 = vcmask 25600
        %v2801 = vsel %vm2800, %v2798, -inf
        %2802 = vmax.xlane.f32.xlu0 %v2801
        %v2803 = vpop.xlane.xlu0 %2802
        %v2805 = vlaneseq
        %v2806 = vshrl.u32 %v2805, 7
        %v2807 = vsub.s32 0, %v2806
        %v2808 = vrot.slane %v2803, %v2807
        %v2809 = vlaneseq
        %v2810 = vshrl.u32 %v2809, 7
        %v2811 = vsub.s32 1, %v2810
        %v2812 = vrot.slane %v2803, %v2811
        %v2815 = vsub.f32 %v2781, %v2808
        %v2816 = vsub.f32 %v2784, %v2812
        %v2817 = vmul.f32 %v2815, 1.442695
        %v2818 = vpow.pop %v2817
        %v2819 = vmul.f32 %v2816, 1.442695
        %v2820 = vpow.pop %v2819
        %2823 = vset.pattern.permute.xlu0 0
        %2824 = vperm.xlu0 %2823, %v2818
        %v2825 = vpop.permute.xlu0 %2824
        %2826 = vset.pattern.permute.xlu0 0
        %2827 = vperm.xlu0 %2826, %v2820
        %v2828 = vpop.permute.xlu0 %2827
        %v2829 = vlaneseq
        %v2830 = vshrl.u32 %v2829, 7
        %v2831 = vsub.s32 %v2788, %v2830
        %v2832 = vrot.slane %v2825, %v2831
        %v2833 = vlaneseq
        %v2834 = vshrl.u32 %v2833, 7
        %v2835 = vsub.s32 %v2788, %v2834
        %v2836 = vrot.slane %v2828, %v2835
        %v2837 = vsel %vm2797, %v2836, %v2832
        %v2839 = vsel %vm2800, %v2837, 0.0
        %2840 = vadd.xlane.f32.xlu0 %v2839
        %v2841 = vpop.xlane.xlu0 %2840
        %v2843 = vlaneseq
        %v2844 = vshrl.u32 %v2843, 7
        %v2845 = vsub.s32 0, %v2844
        %v2846 = vrot.slane %v2841, %v2845
        %v2847 = vlaneseq
        %v2848 = vshrl.u32 %v2847, 7
        %v2849 = vsub.s32 1, %v2848
        %v2850 = vrot.slane %v2841, %v2849
        %v2853 = vrcp.pop %v2846
        %v2854 = vmul.f32 %v2818, %v2853
        %v2855 = vrcp.pop %v2850
        %v2856 = vmul.f32 %v2820, %v2855
        %2858 = vset.pattern.permute.xlu0 0
        %2859 = vperm.xlu0 %2858, %v2854
        %v2860 = vpop.permute.xlu0 %2859
        %2863 = vset.pattern.permute.xlu0 0
        %2864 = vperm.xlu0 %2863, %v2856
        %v2865 = vpop.permute.xlu0 %2864
        %v2867 = vmul.f32 %v2860, %v2680
        %v2868 = vmul.f32 %v2865, %v2756
        %v2869 = vsel %vm2778, %v2867, 0.0
        %v2870 = vrot.slane %v2869, 4
        %v2871 = vadd.f32 %v2869, %v2870
        %v2872 = vrot.slane %v2871, 2
        %v2873 = vadd.f32 %v2871, %v2872
        %v2874 = vrot.slane %v2873, 1
        %v2875 = vadd.f32 %v2873, %v2874
        %v2876 = vsel %vm2778, %v2868, 0.0
        %v2877 = vrot.slane %v2876, 4
        %v2878 = vadd.f32 %v2876, %v2877
        %v2879 = vrot.slane %v2878, 2
        %v2880 = vadd.f32 %v2878, %v2879
        %v2881 = vrot.slane %v2880, 1
        %v2882 = vadd.f32 %v2880, %v2881
        %v2885 = vsel %vm2797, %v2882, %v2875
        %2887 = vst [vmem:[%s209] sm:$0x3] %v2885
        %v2889 = vcombine.high %v2682, %v2682
        %v2892 = vcombine.high %v2684, %v2684
        %v2895 = vunpack.c.l.s4 1966171168
        %v2896 = vunpack.c.0.s8 %v2895
        %v2897 = vlaneseq
        %v2898 = vshrl.u32 %v2897, 7
        %v2899 = vsub.s32 %v2896, %v2898
        %v2900 = vrot.slane %v2733, %v2899
        %v2901 = vcombine.high %v2900, %v2900
        %v2902 = vlaneseq
        %v2903 = vshrl.u32 %v2902, 7
        %v2904 = vsub.s32 0, %v2903
        %v2905 = vrot.slane %v2900, %v2904
        %v2906 = vlaneseq
        %v2907 = vshrl.u32 %v2906, 7
        %v2908 = vsub.s32 0, %v2907
        %v2909 = vrot.slane %v2901, %v2908
        %v2912 = vmul.f32 %v2905, %v2682
        %v2913 = vmul.f32 %v2909, %v2889
        %v2914 = vsel %vm2778, %v2912, 0.0
        %2915 = vadd.xlane.f32.xlu0 %v2914
        %v2916 = vpop.xlane.xlu0 %2915
        %v2917 = vsel %vm2778, %v2913, 0.0
        %2918 = vadd.xlane.f32.xlu0 %v2917
        %v2919 = vpop.xlane.xlu0 %2918
        %v2922 = vlaneseq
        %v2923 = vshrl.u32 %v2922, 7
        %v2924 = vsub.s32 %v2788, %v2923
        %v2925 = vrot.slane %v2916, %v2924
        %v2926 = vlaneseq
        %v2927 = vshrl.u32 %v2926, 7
        %v2928 = vsub.s32 %v2788, %v2927
        %v2929 = vrot.slane %v2919, %v2928
        %v2930 = vsel %vm2797, %v2929, %v2925
        %v2932 = vsel %vm2800, %v2930, -inf
        %2933 = vmax.xlane.f32.xlu0 %v2932
        %v2934 = vpop.xlane.xlu0 %2933
        %v2936 = vlaneseq
        %v2937 = vshrl.u32 %v2936, 7
        %v2938 = vsub.s32 0, %v2937
        %v2939 = vrot.slane %v2934, %v2938
        %v2940 = vlaneseq
        %v2941 = vshrl.u32 %v2940, 7
        %v2942 = vsub.s32 1, %v2941
        %v2943 = vrot.slane %v2934, %v2942
        %v2946 = vsub.f32 %v2916, %v2939
        %v2947 = vsub.f32 %v2919, %v2943
        %v2948 = vmul.f32 %v2946, 1.442695
        %v2949 = vpow.pop %v2948
        %v2950 = vmul.f32 %v2947, 1.442695
        %v2951 = vpow.pop %v2950
        %2954 = vset.pattern.permute.xlu0 0
        %2955 = vperm.xlu0 %2954, %v2949
        %v2956 = vpop.permute.xlu0 %2955
        %2957 = vset.pattern.permute.xlu0 0
        %2958 = vperm.xlu0 %2957, %v2951
        %v2959 = vpop.permute.xlu0 %2958
        %v2960 = vlaneseq
        %v2961 = vshrl.u32 %v2960, 7
        %v2962 = vsub.s32 %v2788, %v2961
        %v2963 = vrot.slane %v2956, %v2962
        %v2964 = vlaneseq
        %v2965 = vshrl.u32 %v2964, 7
        %v2966 = vsub.s32 %v2788, %v2965
        %v2967 = vrot.slane %v2959, %v2966
        %v2968 = vsel %vm2797, %v2967, %v2963
        %v2970 = vsel %vm2800, %v2968, 0.0
        %2971 = vadd.xlane.f32.xlu0 %v2970
        %v2972 = vpop.xlane.xlu0 %2971
        %v2974 = vlaneseq
        %v2975 = vshrl.u32 %v2974, 7
        %v2976 = vsub.s32 0, %v2975
        %v2977 = vrot.slane %v2972, %v2976
        %v2978 = vlaneseq
        %v2979 = vshrl.u32 %v2978, 7
        %v2980 = vsub.s32 1, %v2979
        %v2981 = vrot.slane %v2972, %v2980
        %v2984 = vrcp.pop %v2977
        %v2985 = vmul.f32 %v2949, %v2984
        %v2986 = vrcp.pop %v2981
        %v2987 = vmul.f32 %v2951, %v2986
        %2989 = vset.pattern.permute.xlu0 0
        %2990 = vperm.xlu0 %2989, %v2985
        %v2991 = vpop.permute.xlu0 %2990
        %2994 = vset.pattern.permute.xlu0 0
        %2995 = vperm.xlu0 %2994, %v2987
        %v2996 = vpop.permute.xlu0 %2995
        %v2998 = vmul.f32 %v2991, %v2684
        %v2999 = vmul.f32 %v2996, %v2892
        %v3000 = vsel %vm2778, %v2998, 0.0
        %v3001 = vrot.slane %v3000, 4
        %v3002 = vadd.f32 %v3000, %v3001
        %v3003 = vrot.slane %v3002, 2
        %v3004 = vadd.f32 %v3002, %v3003
        %v3005 = vrot.slane %v3004, 1
        %v3006 = vadd.f32 %v3004, %v3005
        %v3007 = vsel %vm2778, %v2999, 0.0
        %v3008 = vrot.slane %v3007, 4
        %v3009 = vadd.f32 %v3007, %v3008
        %v3010 = vrot.slane %v3009, 2
        %v3011 = vadd.f32 %v3009, %v3010
        %v3012 = vrot.slane %v3011, 1
        %v3013 = vadd.f32 %v3011, %v3012
        %v3016 = vsel %vm2797, %v3013, %v3006
        %s3018 = scalar_lea.vmem %s209, 2 [#allocation2]
        %3019 = vst [vmem:[%s3018] sm:$0x3] %v3016
        %v3021 = vcombine.high %v2688, %v2688
        %v3024 = vcombine.high %v2690, %v2690
        %v3027 = vunpack.c.l.s4 1966171168
        %v3028 = vunpack.c.0.s8 %v3027
        %v3029 = vlaneseq
        %v3030 = vshrl.u32 %v3029, 7
        %v3031 = vsub.s32 %v3028, %v3030
        %v3032 = vrot.slane %v2732, %v3031
        %v3033 = vcombine.high %v3032, %v3032
        %v3034 = vlaneseq
        %v3035 = vshrl.u32 %v3034, 7
        %v3036 = vsub.s32 0, %v3035
        %v3037 = vrot.slane %v3032, %v3036
        %v3038 = vlaneseq
        %v3039 = vshrl.u32 %v3038, 7
        %v3040 = vsub.s32 0, %v3039
        %v3041 = vrot.slane %v3033, %v3040
        %v3044 = vmul.f32 %v3037, %v2688
        %v3045 = vmul.f32 %v3041, %v3021
        %v3046 = vsel %vm2778, %v3044, 0.0
        %3047 = vadd.xlane.f32.xlu0 %v3046
        %v3048 = vpop.xlane.xlu0 %3047
        %v3049 = vsel %vm2778, %v3045, 0.0
        %3050 = vadd.xlane.f32.xlu0 %v3049
        %v3051 = vpop.xlane.xlu0 %3050
        %v3054 = vlaneseq
        %v3055 = vshrl.u32 %v3054, 7
        %v3056 = vsub.s32 %v2788, %v3055
        %v3057 = vrot.slane %v3048, %v3056
        %v3058 = vlaneseq
        %v3059 = vshrl.u32 %v3058, 7
        %v3060 = vsub.s32 %v2788, %v3059
        %v3061 = vrot.slane %v3051, %v3060
        %v3062 = vsel %vm2797, %v3061, %v3057
        %v3064 = vsel %vm2800, %v3062, -inf
        %3065 = vmax.xlane.f32.xlu0 %v3064
        %v3066 = vpop.xlane.xlu0 %3065
        %v3068 = vlaneseq
        %v3069 = vshrl.u32 %v3068, 7
        %v3070 = vsub.s32 0, %v3069
        %v3071 = vrot.slane %v3066, %v3070
        %v3072 = vlaneseq
        %v3073 = vshrl.u32 %v3072, 7
        %v3074 = vsub.s32 1, %v3073
        %v3075 = vrot.slane %v3066, %v3074
        %v3078 = vsub.f32 %v3048, %v3071
        %v3079 = vsub.f32 %v3051, %v3075
        %v3080 = vmul.f32 %v3078, 1.442695
        %v3081 = vpow.pop %v3080
        %v3082 = vmul.f32 %v3079, 1.442695
        %v3083 = vpow.pop %v3082
        %3086 = vset.pattern.permute.xlu0 0
        %3087 = vperm.xlu0 %3086, %v3081
        %v3088 = vpop.permute.xlu0 %3087
        %3089 = vset.pattern.permute.xlu0 0
        %3090 = vperm.xlu0 %3089, %v3083
        %v3091 = vpop.permute.xlu0 %3090
        %v3092 = vlaneseq
        %v3093 = vshrl.u32 %v3092, 7
        %v3094 = vsub.s32 %v2788, %v3093
        %v3095 = vrot.slane %v3088, %v3094
        %v3096 = vlaneseq
        %v3097 = vshrl.u32 %v3096, 7
        %v3098 = vsub.s32 %v2788, %v3097
        %v3099 = vrot.slane %v3091, %v3098
        %v3100 = vsel %vm2797, %v3099, %v3095
        %v3102 = vsel %vm2800, %v3100, 0.0
        %3103 = vadd.xlane.f32.xlu0 %v3102
        %v3104 = vpop.xlane.xlu0 %3103
        %v3106 = vlaneseq
        %v3107 = vshrl.u32 %v3106, 7
        %v3108 = vsub.s32 0, %v3107
        %v3109 = vrot.slane %v3104, %v3108
        %v3110 = vlaneseq
        %v3111 = vshrl.u32 %v3110, 7
        %v3112 = vsub.s32 1, %v3111
        %v3113 = vrot.slane %v3104, %v3112
        %v3116 = vrcp.pop %v3109
        %v3117 = vmul.f32 %v3081, %v3116
        %v3118 = vrcp.pop %v3113
        %v3119 = vmul.f32 %v3083, %v3118
        %3121 = vset.pattern.permute.xlu0 0
        %3122 = vperm.xlu0 %3121, %v3117
        %v3123 = vpop.permute.xlu0 %3122
        %3126 = vset.pattern.permute.xlu0 0
        %3127 = vperm.xlu0 %3126, %v3119
        %v3128 = vpop.permute.xlu0 %3127
        %v3130 = vmul.f32 %v3123, %v2690
        %v3131 = vmul.f32 %v3128, %v3024
        %v3132 = vsel %vm2778, %v3130, 0.0
        %v3133 = vrot.slane %v3132, 4
        %v3134 = vadd.f32 %v3132, %v3133
        %v3135 = vrot.slane %v3134, 2
        %v3136 = vadd.f32 %v3134, %v3135
        %v3137 = vrot.slane %v3136, 1
        %v3138 = vadd.f32 %v3136, %v3137
        %v3139 = vsel %vm2778, %v3131, 0.0
        %v3140 = vrot.slane %v3139, 4
        %v3141 = vadd.f32 %v3139, %v3140
        %v3142 = vrot.slane %v3141, 2
        %v3143 = vadd.f32 %v3141, %v3142
        %v3144 = vrot.slane %v3143, 1
        %v3145 = vadd.f32 %v3143, %v3144
        %v3148 = vsel %vm2797, %v3145, %v3138
        %s3150 = scalar_lea.vmem %s209, 4 [#allocation2]
        %3151 = vst [vmem:[%s3150] sm:$0x3] %v3148
        %v3153 = vcombine.high %v2692, %v2692
        %v3156 = vcombine.high %v2694, %v2694
        %v3159 = vunpack.c.l.s4 1966171168
        %v3160 = vunpack.c.0.s8 %v3159
        %v3161 = vlaneseq
        %v3162 = vshrl.u32 %v3161, 7
        %v3163 = vsub.s32 %v3160, %v3162
        %v3164 = vrot.slane %v2734, %v3163
        %v3165 = vcombine.high %v3164, %v3164
        %v3166 = vlaneseq
        %v3167 = vshrl.u32 %v3166, 7
        %v3168 = vsub.s32 0, %v3167
        %v3169 = vrot.slane %v3164, %v3168
        %v3170 = vlaneseq
        %v3171 = vshrl.u32 %v3170, 7
        %v3172 = vsub.s32 0, %v3171
        %v3173 = vrot.slane %v3165, %v3172
        %v3176 = vmul.f32 %v3169, %v2692
        %v3177 = vmul.f32 %v3173, %v3153
        %v3178 = vsel %vm2778, %v3176, 0.0
        %3179 = vadd.xlane.f32.xlu0 %v3178
        %v3180 = vpop.xlane.xlu0 %3179
        %v3181 = vsel %vm2778, %v3177, 0.0
        %3182 = vadd.xlane.f32.xlu0 %v3181
        %v3183 = vpop.xlane.xlu0 %3182
        %v3186 = vlaneseq
        %v3187 = vshrl.u32 %v3186, 7
        %v3188 = vsub.s32 %v2788, %v3187
        %v3189 = vrot.slane %v3180, %v3188
        %v3190 = vlaneseq
        %v3191 = vshrl.u32 %v3190, 7
        %v3192 = vsub.s32 %v2788, %v3191
        %v3193 = vrot.slane %v3183, %v3192
        %v3194 = vsel %vm2797, %v3193, %v3189
        %v3196 = vsel %vm2800, %v3194, -inf
        %3197 = vmax.xlane.f32.xlu0 %v3196
        %v3198 = vpop.xlane.xlu0 %3197
        %v3200 = vlaneseq
        %v3201 = vshrl.u32 %v3200, 7
        %v3202 = vsub.s32 0, %v3201
        %v3203 = vrot.slane %v3198, %v3202
        %v3204 = vlaneseq
        %v3205 = vshrl.u32 %v3204, 7
        %v3206 = vsub.s32 1, %v3205
        %v3207 = vrot.slane %v3198, %v3206
        %v3210 = vsub.f32 %v3180, %v3203
        %v3211 = vsub.f32 %v3183, %v3207
        %v3212 = vmul.f32 %v3210, 1.442695
        %v3213 = vpow.pop %v3212
        %v3214 = vmul.f32 %v3211, 1.442695
        %v3215 = vpow.pop %v3214
        %3218 = vset.pattern.permute.xlu0 0
        %3219 = vperm.xlu0 %3218, %v3213
        %v3220 = vpop.permute.xlu0 %3219
        %3221 = vset.pattern.permute.xlu0 0
        %3222 = vperm.xlu0 %3221, %v3215
        %v3223 = vpop.permute.xlu0 %3222
        %v3224 = vlaneseq
        %v3225 = vshrl.u32 %v3224, 7
        %v3226 = vsub.s32 %v2788, %v3225
        %v3227 = vrot.slane %v3220, %v3226
        %v3228 = vlaneseq
        %v3229 = vshrl.u32 %v3228, 7
        %v3230 = vsub.s32 %v2788, %v3229
        %v3231 = vrot.slane %v3223, %v3230
        %v3232 = vsel %vm2797, %v3231, %v3227
        %v3234 = vsel %vm2800, %v3232, 0.0
        %3235 = vadd.xlane.f32.xlu0 %v3234
        %v3236 = vpop.xlane.xlu0 %3235
        %v3238 = vlaneseq
        %v3239 = vshrl.u32 %v3238, 7
        %v3240 = vsub.s32 0, %v3239
        %v3241 = vrot.slane %v3236, %v3240
        %v3242 = vlaneseq
        %v3243 = vshrl.u32 %v3242, 7
        %v3244 = vsub.s32 1, %v3243
        %v3245 = vrot.slane %v3236, %v3244
        %v3248 = vrcp.pop %v3241
        %v3249 = vmul.f32 %v3213, %v3248
        %v3250 = vrcp.pop %v3245
        %v3251 = vmul.f32 %v3215, %v3250
        %3253 = vset.pattern.permute.xlu0 0
        %3254 = vperm.xlu0 %3253, %v3249
        %v3255 = vpop.permute.xlu0 %3254
        %3258 = vset.pattern.permute.xlu0 0
        %3259 = vperm.xlu0 %3258, %v3251
        %v3260 = vpop.permute.xlu0 %3259
        %v3262 = vmul.f32 %v3255, %v2694
        %v3263 = vmul.f32 %v3260, %v3156
        %v3264 = vsel %vm2778, %v3262, 0.0
        %v3265 = vrot.slane %v3264, 4
        %v3266 = vadd.f32 %v3264, %v3265
        %v3267 = vrot.slane %v3266, 2
        %v3268 = vadd.f32 %v3266, %v3267
        %v3269 = vrot.slane %v3268, 1
        %v3270 = vadd.f32 %v3268, %v3269
        %v3271 = vsel %vm2778, %v3263, 0.0
        %v3272 = vrot.slane %v3271, 4
        %v3273 = vadd.f32 %v3271, %v3272
        %v3274 = vrot.slane %v3273, 2
        %v3275 = vadd.f32 %v3273, %v3274
        %v3276 = vrot.slane %v3275, 1
        %v3277 = vadd.f32 %v3275, %v3276
        %v3280 = vsel %vm2797, %v3277, %v3270
        %s3282 = scalar_lea.vmem %s209, 6 [#allocation2]
        %3283 = vst [vmem:[%s3282] sm:$0x3] %v3280
        %v3285 = vcombine.high %v2698, %v2698
        %v3288 = vcombine.high %v2700, %v2700
        %v3291 = vunpack.c.l.s4 1966171168
        %v3292 = vunpack.c.0.s8 %v3291
        %v3293 = vlaneseq
        %v3294 = vshrl.u32 %v3293, 7
        %v3295 = vsub.s32 %v3292, %v3294
        %v3296 = vrot.slane %v2742, %v3295
        %v3297 = vcombine.high %v3296, %v3296
        %v3298 = vlaneseq
        %v3299 = vshrl.u32 %v3298, 7
        %v3300 = vsub.s32 0, %v3299
        %v3301 = vrot.slane %v3296, %v3300
        %v3302 = vlaneseq
        %v3303 = vshrl.u32 %v3302, 7
        %v3304 = vsub.s32 0, %v3303
        %v3305 = vrot.slane %v3297, %v3304
        %v3308 = vmul.f32 %v3301, %v2698
        %v3309 = vmul.f32 %v3305, %v3285
        %v3310 = vsel %vm2778, %v3308, 0.0
        %3311 = vadd.xlane.f32.xlu0 %v3310
        %v3312 = vpop.xlane.xlu0 %3311
        %v3313 = vsel %vm2778, %v3309, 0.0
        %3314 = vadd.xlane.f32.xlu0 %v3313
        %v3315 = vpop.xlane.xlu0 %3314
        %v3318 = vlaneseq
        %v3319 = vshrl.u32 %v3318, 7
        %v3320 = vsub.s32 %v2788, %v3319
        %v3321 = vrot.slane %v3312, %v3320
        %v3322 = vlaneseq
        %v3323 = vshrl.u32 %v3322, 7
        %v3324 = vsub.s32 %v2788, %v3323
        %v3325 = vrot.slane %v3315, %v3324
        %v3326 = vsel %vm2797, %v3325, %v3321
        %v3328 = vsel %vm2800, %v3326, -inf
        %3329 = vmax.xlane.f32.xlu0 %v3328
        %v3330 = vpop.xlane.xlu0 %3329
        %v3332 = vlaneseq
        %v3333 = vshrl.u32 %v3332, 7
        %v3334 = vsub.s32 0, %v3333
        %v3335 = vrot.slane %v3330, %v3334
        %v3336 = vlaneseq
        %v3337 = vshrl.u32 %v3336, 7
        %v3338 = vsub.s32 1, %v3337
        %v3339 = vrot.slane %v3330, %v3338
        %v3342 = vsub.f32 %v3312, %v3335
        %v3343 = vsub.f32 %v3315, %v3339
        %v3344 = vmul.f32 %v3342, 1.442695
        %v3345 = vpow.pop %v3344
        %v3346 = vmul.f32 %v3343, 1.442695
        %v3347 = vpow.pop %v3346
        %3350 = vset.pattern.permute.xlu0 0
        %3351 = vperm.xlu0 %3350, %v3345
        %v3352 = vpop.permute.xlu0 %3351
        %3353 = vset.pattern.permute.xlu0 0
        %3354 = vperm.xlu0 %3353, %v3347
        %v3355 = vpop.permute.xlu0 %3354
        %v3356 = vlaneseq
        %v3357 = vshrl.u32 %v3356, 7
        %v3358 = vsub.s32 %v2788, %v3357
        %v3359 = vrot.slane %v3352, %v3358
        %v3360 = vlaneseq
        %v3361 = vshrl.u32 %v3360, 7
        %v3362 = vsub.s32 %v2788, %v3361
        %v3363 = vrot.slane %v3355, %v3362
        %v3364 = vsel %vm2797, %v3363, %v3359
        %v3366 = vsel %vm2800, %v3364, 0.0
        %3367 = vadd.xlane.f32.xlu0 %v3366
        %v3368 = vpop.xlane.xlu0 %3367
        %v3370 = vlaneseq
        %v3371 = vshrl.u32 %v3370, 7
        %v3372 = vsub.s32 0, %v3371
        %v3373 = vrot.slane %v3368, %v3372
        %v3374 = vlaneseq
        %v3375 = vshrl.u32 %v3374, 7
        %v3376 = vsub.s32 1, %v3375
        %v3377 = vrot.slane %v3368, %v3376
        %v3380 = vrcp.pop %v3373
        %v3381 = vmul.f32 %v3345, %v3380
        %v3382 = vrcp.pop %v3377
        %v3383 = vmul.f32 %v3347, %v3382
        %3385 = vset.pattern.permute.xlu0 0
        %3386 = vperm.xlu0 %3385, %v3381
        %v3387 = vpop.permute.xlu0 %3386
        %3390 = vset.pattern.permute.xlu0 0
        %3391 = vperm.xlu0 %3390, %v3383
        %v3392 = vpop.permute.xlu0 %3391
        %v3394 = vmul.f32 %v3387, %v2700
        %v3395 = vmul.f32 %v3392, %v3288
        %v3396 = vsel %vm2778, %v3394, 0.0
        %v3397 = vrot.slane %v3396, 4
        %v3398 = vadd.f32 %v3396, %v3397
        %v3399 = vrot.slane %v3398, 2
        %v3400 = vadd.f32 %v3398, %v3399
        %v3401 = vrot.slane %v3400, 1
        %v3402 = vadd.f32 %v3400, %v3401
        %v3403 = vsel %vm2778, %v3395, 0.0
        %v3404 = vrot.slane %v3403, 4
        %v3405 = vadd.f32 %v3403, %v3404
        %v3406 = vrot.slane %v3405, 2
        %v3407 = vadd.f32 %v3405, %v3406
        %v3408 = vrot.slane %v3407, 1
        %v3409 = vadd.f32 %v3407, %v3408
        %v3412 = vsel %vm2797, %v3409, %v3402
        %s3414 = scalar_lea.vmem %s209, 8 [#allocation2]
        %3415 = vst [vmem:[%s3414] sm:$0x3] %v3412
        %v3417 = vcombine.high %v2702, %v2702
        %v3420 = vcombine.high %v2704, %v2704
        %v3423 = vunpack.c.l.s4 1966171168
        %v3424 = vunpack.c.0.s8 %v3423
        %v3425 = vlaneseq
        %v3426 = vshrl.u32 %v3425, 7
        %v3427 = vsub.s32 %v3424, %v3426
        %v3428 = vrot.slane %v2750, %v3427
        %v3429 = vcombine.high %v3428, %v3428
        %v3430 = vlaneseq
        %v3431 = vshrl.u32 %v3430, 7
        %v3432 = vsub.s32 0, %v3431
        %v3433 = vrot.slane %v3428, %v3432
        %v3434 = vlaneseq
        %v3435 = vshrl.u32 %v3434, 7
        %v3436 = vsub.s32 0, %v3435
        %v3437 = vrot.slane %v3429, %v3436
        %v3440 = vmul.f32 %v3433, %v2702
        %v3441 = vmul.f32 %v3437, %v3417
        %v3442 = vsel %vm2778, %v3440, 0.0
        %3443 = vadd.xlane.f32.xlu0 %v3442
        %v3444 = vpop.xlane.xlu0 %3443
        %v3445 = vsel %vm2778, %v3441, 0.0
        %3446 = vadd.xlane.f32.xlu0 %v3445
        %v3447 = vpop.xlane.xlu0 %3446
        %v3450 = vlaneseq
        %v3451 = vshrl.u32 %v3450, 7
        %v3452 = vsub.s32 %v2788, %v3451
        %v3453 = vrot.slane %v3444, %v3452
        %v3454 = vlaneseq
        %v3455 = vshrl.u32 %v3454, 7
        %v3456 = vsub.s32 %v2788, %v3455
        %v3457 = vrot.slane %v3447, %v3456
        %v3458 = vsel %vm2797, %v3457, %v3453
        %v3460 = vsel %vm2800, %v3458, -inf
        %3461 = vmax.xlane.f32.xlu0 %v3460
        %v3462 = vpop.xlane.xlu0 %3461
        %v3464 = vlaneseq
        %v3465 = vshrl.u32 %v3464, 7
        %v3466 = vsub.s32 0, %v3465
        %v3467 = vrot.slane %v3462, %v3466
        %v3468 = vlaneseq
        %v3469 = vshrl.u32 %v3468, 7
        %v3470 = vsub.s32 1, %v3469
        %v3471 = vrot.slane %v3462, %v3470
        %v3474 = vsub.f32 %v3444, %v3467
        %v3475 = vsub.f32 %v3447, %v3471
        %v3476 = vmul.f32 %v3474, 1.442695
        %v3477 = vpow.pop %v3476
        %v3478 = vmul.f32 %v3475, 1.442695
        %v3479 = vpow.pop %v3478
        %3482 = vset.pattern.permute.xlu0 0
        %3483 = vperm.xlu0 %3482, %v3477
        %v3484 = vpop.permute.xlu0 %3483
        %3485 = vset.pattern.permute.xlu0 0
        %3486 = vperm.xlu0 %3485, %v3479
        %v3487 = vpop.permute.xlu0 %3486
        %v3488 = vlaneseq
        %v3489 = vshrl.u32 %v3488, 7
        %v3490 = vsub.s32 %v2788, %v3489
        %v3491 = vrot.slane %v3484, %v3490
        %v3492 = vlaneseq
        %v3493 = vshrl.u32 %v3492, 7
        %v3494 = vsub.s32 %v2788, %v3493
        %v3495 = vrot.slane %v3487, %v3494
        %v3496 = vsel %vm2797, %v3495, %v3491
        %v3498 = vsel %vm2800, %v3496, 0.0
        %3499 = vadd.xlane.f32.xlu0 %v3498
        %v3500 = vpop.xlane.xlu0 %3499
        %v3502 = vlaneseq
        %v3503 = vshrl.u32 %v3502, 7
        %v3504 = vsub.s32 0, %v3503
        %v3505 = vrot.slane %v3500, %v3504
        %v3506 = vlaneseq
        %v3507 = vshrl.u32 %v3506, 7
        %v3508 = vsub.s32 1, %v3507
        %v3509 = vrot.slane %v3500, %v3508
        %v3512 = vrcp.pop %v3505
        %v3513 = vmul.f32 %v3477, %v3512
        %v3514 = vrcp.pop %v3509
        %v3515 = vmul.f32 %v3479, %v3514
        %3517 = vset.pattern.permute.xlu0 0
        %3518 = vperm.xlu0 %3517, %v3513
        %v3519 = vpop.permute.xlu0 %3518
        %3522 = vset.pattern.permute.xlu0 0
        %3523 = vperm.xlu0 %3522, %v3515
        %v3524 = vpop.permute.xlu0 %3523
        %v3526 = vmul.f32 %v3519, %v2704
        %v3527 = vmul.f32 %v3524, %v3420
        %v3528 = vsel %vm2778, %v3526, 0.0
        %v3529 = vrot.slane %v3528, 4
        %v3530 = vadd.f32 %v3528, %v3529
        %v3531 = vrot.slane %v3530, 2
        %v3532 = vadd.f32 %v3530, %v3531
        %v3533 = vrot.slane %v3532, 1
        %v3534 = vadd.f32 %v3532, %v3533
        %v3535 = vsel %vm2778, %v3527, 0.0
        %v3536 = vrot.slane %v3535, 4
        %v3537 = vadd.f32 %v3535, %v3536
        %v3538 = vrot.slane %v3537, 2
        %v3539 = vadd.f32 %v3537, %v3538
        %v3540 = vrot.slane %v3539, 1
        %v3541 = vadd.f32 %v3539, %v3540
        %v3544 = vsel %vm2797, %v3541, %v3534
        %s3546 = scalar_lea.vmem %s209, 10 [#allocation2]
        %3547 = vst [vmem:[%s3546] sm:$0x3] %v3544
        %v3549 = vcombine.high %v2708, %v2708
        %v3552 = vcombine.high %v2710, %v2710
        %v3555 = vunpack.c.l.s4 1966171168
        %v3556 = vunpack.c.0.s8 %v3555
        %v3557 = vlaneseq
        %v3558 = vshrl.u32 %v3557, 7
        %v3559 = vsub.s32 %v3556, %v3558
        %v3560 = vrot.slane %v2749, %v3559
        %v3561 = vcombine.high %v3560, %v3560
        %v3562 = vlaneseq
        %v3563 = vshrl.u32 %v3562, 7
        %v3564 = vsub.s32 0, %v3563
        %v3565 = vrot.slane %v3560, %v3564
        %v3566 = vlaneseq
        %v3567 = vshrl.u32 %v3566, 7
        %v3568 = vsub.s32 0, %v3567
        %v3569 = vrot.slane %v3561, %v3568
        %v3572 = vmul.f32 %v3565, %v2708
        %v3573 = vmul.f32 %v3569, %v3549
        %v3574 = vsel %vm2778, %v3572, 0.0
        %3575 = vadd.xlane.f32.xlu0 %v3574
        %v3576 = vpop.xlane.xlu0 %3575
        %v3577 = vsel %vm2778, %v3573, 0.0
        %3578 = vadd.xlane.f32.xlu0 %v3577
        %v3579 = vpop.xlane.xlu0 %3578
        %v3582 = vlaneseq
        %v3583 = vshrl.u32 %v3582, 7
        %v3584 = vsub.s32 %v2788, %v3583
        %v3585 = vrot.slane %v3576, %v3584
        %v3586 = vlaneseq
        %v3587 = vshrl.u32 %v3586, 7
        %v3588 = vsub.s32 %v2788, %v3587
        %v3589 = vrot.slane %v3579, %v3588
        %v3590 = vsel %vm2797, %v3589, %v3585
        %v3592 = vsel %vm2800, %v3590, -inf
        %3593 = vmax.xlane.f32.xlu0 %v3592
        %v3594 = vpop.xlane.xlu0 %3593
        %v3596 = vlaneseq
        %v3597 = vshrl.u32 %v3596, 7
        %v3598 = vsub.s32 0, %v3597
        %v3599 = vrot.slane %v3594, %v3598
        %v3600 = vlaneseq
        %v3601 = vshrl.u32 %v3600, 7
        %v3602 = vsub.s32 1, %v3601
        %v3603 = vrot.slane %v3594, %v3602
        %v3606 = vsub.f32 %v3576, %v3599
        %v3607 = vsub.f32 %v3579, %v3603
        %v3608 = vmul.f32 %v3606, 1.442695
        %v3609 = vpow.pop %v3608
        %v3610 = vmul.f32 %v3607, 1.442695
        %v3611 = vpow.pop %v3610
        %3614 = vset.pattern.permute.xlu0 0
        %3615 = vperm.xlu0 %3614, %v3609
        %v3616 = vpop.permute.xlu0 %3615
        %3617 = vset.pattern.permute.xlu0 0
        %3618 = vperm.xlu0 %3617, %v3611
        %v3619 = vpop.permute.xlu0 %3618
        %v3620 = vlaneseq
        %v3621 = vshrl.u32 %v3620, 7
        %v3622 = vsub.s32 %v2788, %v3621
        %v3623 = vrot.slane %v3616, %v3622
        %v3624 = vlaneseq
        %v3625 = vshrl.u32 %v3624, 7
        %v3626 = vsub.s32 %v2788, %v3625
        %v3627 = vrot.slane %v3619, %v3626
        %v3628 = vsel %vm2797, %v3627, %v3623
        %v3630 = vsel %vm2800, %v3628, 0.0
        %3631 = vadd.xlane.f32.xlu0 %v3630
        %v3632 = vpop.xlane.xlu0 %3631
        %v3634 = vlaneseq
        %v3635 = vshrl.u32 %v3634, 7
        %v3636 = vsub.s32 0, %v3635
        %v3637 = vrot.slane %v3632, %v3636
        %v3638 = vlaneseq
        %v3639 = vshrl.u32 %v3638, 7
        %v3640 = vsub.s32 1, %v3639
        %v3641 = vrot.slane %v3632, %v3640
        %v3644 = vrcp.pop %v3637
        %v3645 = vmul.f32 %v3609, %v3644
        %v3646 = vrcp.pop %v3641
        %v3647 = vmul.f32 %v3611, %v3646
        %3649 = vset.pattern.permute.xlu0 0
        %3650 = vperm.xlu0 %3649, %v3645
        %v3651 = vpop.permute.xlu0 %3650
        %3654 = vset.pattern.permute.xlu0 0
        %3655 = vperm.xlu0 %3654, %v3647
        %v3656 = vpop.permute.xlu0 %3655
        %v3658 = vmul.f32 %v3651, %v2710
        %v3659 = vmul.f32 %v3656, %v3552
        %v3660 = vsel %vm2778, %v3658, 0.0
        %v3661 = vrot.slane %v3660, 4
        %v3662 = vadd.f32 %v3660, %v3661
        %v3663 = vrot.slane %v3662, 2
        %v3664 = vadd.f32 %v3662, %v3663
        %v3665 = vrot.slane %v3664, 1
        %v3666 = vadd.f32 %v3664, %v3665
        %v3667 = vsel %vm2778, %v3659, 0.0
        %v3668 = vrot.slane %v3667, 4
        %v3669 = vadd.f32 %v3667, %v3668
        %v3670 = vrot.slane %v3669, 2
        %v3671 = vadd.f32 %v3669, %v3670
        %v3672 = vrot.slane %v3671, 1
        %v3673 = vadd.f32 %v3671, %v3672
        %v3676 = vsel %vm2797, %v3673, %v3666
        %s3678 = scalar_lea.vmem %s209, 12 [#allocation2]
        %3679 = vst [vmem:[%s3678] sm:$0x3] %v3676
        %v3681 = vcombine.high %v2712, %v2712
        %v3684 = vcombine.high %v2714, %v2714
        %v3687 = vunpack.c.l.s4 1966171168
        %v3688 = vunpack.c.0.s8 %v3687
        %v3689 = vlaneseq
        %v3690 = vshrl.u32 %v3689, 7
        %v3691 = vsub.s32 %v3688, %v3690
        %v3692 = vrot.slane %v2751, %v3691
        %v3693 = vcombine.high %v3692, %v3692
        %v3694 = vlaneseq
        %v3695 = vshrl.u32 %v3694, 7
        %v3696 = vsub.s32 0, %v3695
        %v3697 = vrot.slane %v3692, %v3696
        %v3698 = vlaneseq
        %v3699 = vshrl.u32 %v3698, 7
        %v3700 = vsub.s32 0, %v3699
        %v3701 = vrot.slane %v3693, %v3700
        %v3704 = vmul.f32 %v3697, %v2712
        %v3705 = vmul.f32 %v3701, %v3681
        %v3706 = vsel %vm2778, %v3704, 0.0
        %3707 = vadd.xlane.f32.xlu0 %v3706
        %v3708 = vpop.xlane.xlu0 %3707
        %v3709 = vsel %vm2778, %v3705, 0.0
        %3710 = vadd.xlane.f32.xlu0 %v3709
        %v3711 = vpop.xlane.xlu0 %3710
        %v3714 = vlaneseq
        %v3715 = vshrl.u32 %v3714, 7
        %v3716 = vsub.s32 %v2788, %v3715
        %v3717 = vrot.slane %v3708, %v3716
        %v3718 = vlaneseq
        %v3719 = vshrl.u32 %v3718, 7
        %v3720 = vsub.s32 %v2788, %v3719
        %v3721 = vrot.slane %v3711, %v3720
        %v3722 = vsel %vm2797, %v3721, %v3717
        %v3724 = vsel %vm2800, %v3722, -inf
        %3725 = vmax.xlane.f32.xlu0 %v3724
        %v3726 = vpop.xlane.xlu0 %3725
        %v3728 = vlaneseq
        %v3729 = vshrl.u32 %v3728, 7
        %v3730 = vsub.s32 0, %v3729
        %v3731 = vrot.slane %v3726, %v3730
        %v3732 = vlaneseq
        %v3733 = vshrl.u32 %v3732, 7
        %v3734 = vsub.s32 1, %v3733
        %v3735 = vrot.slane %v3726, %v3734
        %v3738 = vsub.f32 %v3708, %v3731
        %v3739 = vsub.f32 %v3711, %v3735
        %v3740 = vmul.f32 %v3738, 1.442695
        %v3741 = vpow.pop %v3740
        %v3742 = vmul.f32 %v3739, 1.442695
        %v3743 = vpow.pop %v3742
        %3746 = vset.pattern.permute.xlu0 0
        %3747 = vperm.xlu0 %3746, %v3741
        %v3748 = vpop.permute.xlu0 %3747
        %3749 = vset.pattern.permute.xlu0 0
        %3750 = vperm.xlu0 %3749, %v3743
        %v3751 = vpop.permute.xlu0 %3750
        %v3752 = vlaneseq
        %v3753 = vshrl.u32 %v3752, 7
        %v3754 = vsub.s32 %v2788, %v3753
        %v3755 = vrot.slane %v3748, %v3754
        %v3756 = vlaneseq
        %v3757 = vshrl.u32 %v3756, 7
        %v3758 = vsub.s32 %v2788, %v3757
        %v3759 = vrot.slane %v3751, %v3758
        %v3760 = vsel %vm2797, %v3759, %v3755
        %v3762 = vsel %vm2800, %v3760, 0.0
        %3763 = vadd.xlane.f32.xlu0 %v3762
        %v3764 = vpop.xlane.xlu0 %3763
        %v3766 = vlaneseq
        %v3767 = vshrl.u32 %v3766, 7
        %v3768 = vsub.s32 0, %v3767
        %v3769 = vrot.slane %v3764, %v3768
        %v3770 = vlaneseq
        %v3771 = vshrl.u32 %v3770, 7
        %v3772 = vsub.s32 1, %v3771
        %v3773 = vrot.slane %v3764, %v3772
        %v3776 = vrcp.pop %v3769
        %v3777 = vmul.f32 %v3741, %v3776
        %v3778 = vrcp.pop %v3773
        %v3779 = vmul.f32 %v3743, %v3778
        %3781 = vset.pattern.permute.xlu0 0
        %3782 = vperm.xlu0 %3781, %v3777
        %v3783 = vpop.permute.xlu0 %3782
        %3786 = vset.pattern.permute.xlu0 0
        %3787 = vperm.xlu0 %3786, %v3779
        %v3788 = vpop.permute.xlu0 %3787
        %v3790 = vmul.f32 %v3783, %v2714
        %v3791 = vmul.f32 %v3788, %v3684
        %v3792 = vsel %vm2778, %v3790, 0.0
        %v3793 = vrot.slane %v3792, 4
        %v3794 = vadd.f32 %v3792, %v3793
        %v3795 = vrot.slane %v3794, 2
        %v3796 = vadd.f32 %v3794, %v3795
        %v3797 = vrot.slane %v3796, 1
        %v3798 = vadd.f32 %v3796, %v3797
        %v3799 = vsel %vm2778, %v3791, 0.0
        %v3800 = vrot.slane %v3799, 4
        %v3801 = vadd.f32 %v3799, %v3800
        %v3802 = vrot.slane %v3801, 2
        %v3803 = vadd.f32 %v3801, %v3802
        %v3804 = vrot.slane %v3803, 1
        %v3805 = vadd.f32 %v3803, %v3804
        %v3808 = vsel %vm2797, %v3805, %v3798
        %s3810 = scalar_lea.vmem %s209, 14 [#allocation2]
        %3811 = vst [vmem:[%s3810] sm:$0x3] %v3808
        %s3812 = sand.u32 %s120, 1
        %s3813 = scalar_lea.sflag [#allocation3], %s3812
        %s3814 = sand.u32 %s120, 1
        %s3815 = smul.addr %s3814, 16
        %s3816 = scalar_lea.vmem [#allocation2], %s3815
        // Predicated region
        $region37: #{tpu_custom_call.1} parent=35 // pred_check
          %p3817 = pneg %p130
        $region38: #{tpu_custom_call.1} parent=35 // pred_check_branch
          %3819 = sbr.rel (%p3817) target = $region40
        $region39: #{tpu_custom_call.1} parent=35 // pred_region
          %s3820 = smul.u32 8, %s18
          %s3822 = ssub.s32 256, 256
          %3823 = vsyncadd %s3813, %s3822
          %s3824 = smul.addr %s3820, 32
          %s3825 = scalar_lea.hbm %s4, %s3824
          %s3826 = sshll.u32 %s3816, 4
          %s3827 = int_to_ptr.vmem [resolvable:$true] %s3826
          %3832 = dma.vmem_to_hbm [thread:$0]  %s3827, 256, %s3825, %s3813, 32, 32, 2
        $region40: #{tpu_custom_call.1} parent=35 // pred_fallthru
          _
      $region36: #{tpu_custom_call.1} parent=5 // pred_fallthru
        _
      %p3833 = scmp.le.s32.totalorder 2, %s13
      // Predicated region
      $region41: #{tpu_custom_call.1} parent=5 // pred_check
        %p3834 = pneg %p3833
      $region42: #{tpu_custom_call.1} parent=5 // pred_check_branch
        %3836 = sbr.rel (%p3834) target = $region44
      $region43: #{tpu_custom_call.1} parent=5 // pred_region
        %s3837 = ssub.s32 %s13, 2
        // Predicated region
        $region45: #{tpu_custom_call.1} parent=43 // pred_check
          %p3838 = pneg %p136
        $region46: #{tpu_custom_call.1} parent=43 // pred_check_branch
          %3840 = sbr.rel (%p3838) target = $region48
        $region47: #{tpu_custom_call.1} parent=43 // pred_region
          %s3841 = sand.u32 %s121, 1
          %s3842 = scalar_lea.sflag [#allocation3], %s3841
          %s3843 = sand.u32 %s121, 1
          %s3844 = smul.addr %s3843, 16
          %s3845 = scalar_lea.vmem [#allocation2], %s3844
          %3846 = dma.done %s3842, 256
        $region48: #{tpu_custom_call.1} parent=43 // pred_fallthru
          _
      $region44: #{tpu_custom_call.1} parent=5 // pred_fallthru
        _
    $region6: #{tpu_custom_call.1} parent=1 // loop_footer
      %s17 = sadd.s32 1, %s13
    $region7: #{tpu_custom_call.1} parent=1 // loop_footer_branch
      %12 = sbr.rel target = $region3
    $region8: #{tpu_custom_call.1} parent=1 // loop_exit
      _
    %3847 = vsyncpa [#allocation3], 1
    %s3848 = scalar_lea.sflag [#allocation3], 1
    %3849 = vsyncpa %s3848, 1

</llo_original>
